<compile_context>
chip_gen: v6e
topology: v6e:2x2x1
jax: 0.10.0
libtpu: 0.0.40
codegen_flags: <defaults>
</compile_context>

<pallas_src>
import functools
import math

import jax
import jax.numpy as jnp
from jax.experimental import pallas as pl
from jax.experimental.pallas import tpu as pltpu


_INV_SQRT2 = 1.0 / math.sqrt(2.0)


def _gelu_exact(x):
    # exact (erf) GELU — matches HF BERT default hidden_act="gelu"
    return 0.5 * x * (1.0 + jax.lax.erf(x * _INV_SQRT2))


def _layernorm(x, gamma, beta, eps):
    mean = jnp.mean(x, axis=-1, keepdims=True)
    c = x - mean
    var = jnp.mean(c * c, axis=-1, keepdims=True)
    return (c * jax.lax.rsqrt(var + eps)) * gamma + beta


def _row_tile(n, target=256):
    # pick a row tile: whole extent for small N, else a clean divisor near target
    if n <= target:
        return n
    for t in (target, 128, 64, 32, 16, 8):
        if n % t == 0:
            return t
    return n


# ------------------------------ Pallas kernels ------------------------------

def _embed_ln_kernel(x_ref, w_ref, b_ref, pos_ref, g_ref, beta_ref, o_ref, *, eps):
    # fused: embed_in linear + (position + token-type) embedding add + LayerNorm
    h = jnp.dot(x_ref[...].astype(jnp.bfloat16), w_ref[...],
                preferred_element_type=jnp.float32)
    h = h + b_ref[...] + pos_ref[...]
    o_ref[...] = _layernorm(h, g_ref[...], beta_ref[...], eps).astype(o_ref.dtype)


def _attn_block_kernel(h_ref, wqkv_ref, bqkv_ref, wao_ref, bao_ref, g_ref, beta_ref,
                       o_ref, *, num_heads, scale, eps):
    # fused: QKV projection, per-head softmax attention, output projection,
    # residual add, LayerNorm.  One grid step == one batch element.
    x = h_ref[...]                                        # [S, H] f32
    S, H = x.shape
    dh = H // num_heads

    qkv = jnp.dot(x.astype(jnp.bfloat16), wqkv_ref[...],
                  preferred_element_type=jnp.float32) + bqkv_ref[...]   # [S, 3H]
    wao = wao_ref[...]                                    # [H, H] bf16

    acc = jnp.zeros((S, H), jnp.float32)
    for h in range(num_heads):                            # static unrolled head loop
        q = qkv[:, h * dh:(h + 1) * dh].astype(jnp.bfloat16)
        k = qkv[:, H + h * dh:H + (h + 1) * dh].astype(jnp.bfloat16)
        v = qkv[:, 2 * H + h * dh:2 * H + (h + 1) * dh].astype(jnp.bfloat16)

        # scores: contract on head_dim directly (no in-kernel transpose)
        s = jax.lax.dot_general(q, k, (((1,), (1,)), ((), ())),
                                preferred_element_type=jnp.float32) * scale
        m = jnp.max(s, axis=-1, keepdims=True)
        p = jnp.exp(s - m)
        l = jnp.sum(p, axis=-1, keepdims=True)
        ctx = jnp.dot(p.astype(jnp.bfloat16), v, preferred_element_type=jnp.float32)
        ctx = ctx * pl.reciprocal(l, approx=True)         # softmax normalization (EUP)

        # fold the head-merge into the output projection: sum_h ctx_h @ W_ao[h-rows]
        acc = acc + jnp.dot(ctx.astype(jnp.bfloat16), wao[h * dh:(h + 1) * dh, :],
                            preferred_element_type=jnp.float32)

    y = acc + bao_ref[...] + x                            # + bias + residual
    o_ref[...] = _layernorm(y, g_ref[...], beta_ref[...], eps).astype(o_ref.dtype)


def _ffn_block_kernel(h_ref, wi_ref, bi_ref, wo_ref, bo_ref, g_ref, beta_ref, o_ref,
                      *, eps):
    # fused: intermediate linear + GELU + output linear + residual add + LayerNorm
    x = h_ref[...]                                        # [TM, H] f32
    inter = jnp.dot(x.astype(jnp.bfloat16), wi_ref[...],
                    preferred_element_type=jnp.float32) + bi_ref[...]
    inter = _gelu_exact(inter)
    ffn = jnp.dot(inter.astype(jnp.bfloat16), wo_ref[...],
                  preferred_element_type=jnp.float32) + bo_ref[...]
    y = ffn + x
    o_ref[...] = _layernorm(y, g_ref[...], beta_ref[...], eps).astype(o_ref.dtype)


def _linear_kernel(x_ref, w_ref, b_ref, o_ref):
    y = jnp.dot(x_ref[...].astype(jnp.bfloat16), w_ref[...],
                preferred_element_type=jnp.float32) + b_ref[...]
    o_ref[...] = y.astype(o_ref.dtype)


# ------------------------------ wrappers ------------------------------

_PARALLEL1 = pltpu.CompilerParams(dimension_semantics=("parallel",))


def embed_and_norm(x2d, w, b, pos_tok, gamma, beta, B, S, eps):
    Din = x2d.shape[1]
    H = w.shape[1]
    return pl.pallas_call(
        functools.partial(_embed_ln_kernel, eps=eps),
        grid=(B,),
        in_specs=[
            pl.BlockSpec((S, Din), lambda i: (i, 0)),
            pl.BlockSpec((Din, H), lambda i: (0, 0)),
            pl.BlockSpec((1, H), lambda i: (0, 0)),
            pl.BlockSpec((S, H), lambda i: (0, 0)),
            pl.BlockSpec((1, H), lambda i: (0, 0)),
            pl.BlockSpec((1, H), lambda i: (0, 0)),
        ],
        out_specs=pl.BlockSpec((S, H), lambda i: (i, 0)),
        out_shape=jax.ShapeDtypeStruct((B * S, H), jnp.float32),
        compiler_params=_PARALLEL1,
    )(x2d, w, b, pos_tok, gamma, beta)


def attention_block(h2d, lp, B, S, H, num_heads, eps):
    scale = 1.0 / math.sqrt(H // num_heads)
    return pl.pallas_call(
        functools.partial(_attn_block_kernel, num_heads=num_heads, scale=scale, eps=eps),
        grid=(B,),
        in_specs=[
            pl.BlockSpec((S, H), lambda i: (i, 0)),
            pl.BlockSpec((H, 3 * H), lambda i: (0, 0)),
            pl.BlockSpec((1, 3 * H), lambda i: (0, 0)),
            pl.BlockSpec((H, H), lambda i: (0, 0)),
            pl.BlockSpec((1, H), lambda i: (0, 0)),
            pl.BlockSpec((1, H), lambda i: (0, 0)),
            pl.BlockSpec((1, H), lambda i: (0, 0)),
        ],
        out_specs=pl.BlockSpec((S, H), lambda i: (i, 0)),
        out_shape=jax.ShapeDtypeStruct((B * S, H), jnp.float32),
        compiler_params=_PARALLEL1,
    )(h2d, lp["qkv_w"], lp["qkv_b"], lp["ao_w"], lp["ao_b"], lp["ln1_g"], lp["ln1_b"])


def ffn_block(h2d, lp, eps):
    N, H = h2d.shape
    I = lp["i_w"].shape[1]
    tm = _row_tile(N)
    return pl.pallas_call(
        functools.partial(_ffn_block_kernel, eps=eps),
        grid=(N // tm,),
        in_specs=[
            pl.BlockSpec((tm, H), lambda i: (i, 0)),
            pl.BlockSpec((H, I), lambda i: (0, 0)),
            pl.BlockSpec((1, I), lambda i: (0, 0)),
            pl.BlockSpec((I, H), lambda i: (0, 0)),
            pl.BlockSpec((1, H), lambda i: (0, 0)),
            pl.BlockSpec((1, H), lambda i: (0, 0)),
            pl.BlockSpec((1, H), lambda i: (0, 0)),
        ],
        out_specs=pl.BlockSpec((tm, H), lambda i: (i, 0)),
        out_shape=jax.ShapeDtypeStruct((N, H), jnp.float32),
        compiler_params=_PARALLEL1,
    )(h2d, lp["i_w"], lp["i_b"], lp["o_w"], lp["o_b"], lp["ln2_g"], lp["ln2_b"])


def linear_out(x, w, b):
    N, H = x.shape
    Dout = w.shape[1]
    tm = _row_tile(N)
    return pl.pallas_call(
        _linear_kernel,
        grid=(N // tm,),
        in_specs=[
            pl.BlockSpec((tm, H), lambda i: (i, 0)),
            pl.BlockSpec((H, Dout), lambda i: (0, 0)),
            pl.BlockSpec((1, Dout), lambda i: (0, 0)),
        ],
        out_specs=pl.BlockSpec((tm, Dout), lambda i: (i, 0)),
        out_shape=jax.ShapeDtypeStruct((N, Dout), jnp.float32),
        compiler_params=_PARALLEL1,
    )(x, w, b)


# ------------------------------ model (glue) ------------------------------

def init_params(key, cfg):
    H, I, Din = cfg["hidden"], cfg["intermediate"], cfg["input_dim"]
    keys = iter(jax.random.split(key, 256))

    def xavier(shape, dtype=jnp.bfloat16):
        bound = math.sqrt(6.0 / (shape[0] + shape[1]))
        return jax.random.uniform(next(keys), shape, jnp.float32, -bound, bound).astype(dtype)

    def normal(shape, dtype=jnp.bfloat16):
        return (0.02 * jax.random.normal(next(keys), shape, jnp.float32)).astype(dtype)

    params = {
        # matmul weights stored bf16 (MXU-native), biases / LN / embeddings f32
        "embed_in_w": xavier((Din, H)),
        "embed_in_b": jnp.zeros((1, H), jnp.float32),
        "embed_out_w": xavier((H, Din)),
        "embed_out_b": jnp.zeros((1, Din), jnp.float32),
        "pos_emb": normal((cfg["max_pos"], H), jnp.float32),
        "tok_emb": normal((cfg["type_vocab"], H), jnp.float32),
        "emb_ln_g": jnp.ones((1, H), jnp.float32),
        "emb_ln_b": jnp.zeros((1, H), jnp.float32),
        "layers": [],
    }
    for _ in range(cfg["num_layers"]):
        params["layers"].append({
            # fused QKV: [H, 3H], order [Q | K | V] along the output dim
            "qkv_w": normal((H, 3 * H)),
            "qkv_b": jnp.zeros((1, 3 * H), jnp.float32),
            "ao_w": normal((H, H)),
            "ao_b": jnp.zeros((1, H), jnp.float32),
            "ln1_g": jnp.ones((1, H), jnp.float32),
            "ln1_b": jnp.zeros((1, H), jnp.float32),
            "i_w": normal((H, I)),
            "i_b": jnp.zeros((1, I), jnp.float32),
            "o_w": normal((I, H)),
            "o_b": jnp.zeros((1, H), jnp.float32),
            "ln2_g": jnp.ones((1, H), jnp.float32),
            "ln2_b": jnp.zeros((1, H), jnp.float32),
        })
    return params


def vector_bert_forward(params, x, cfg):
    B, S, Din = x.shape
    H, nH, eps = cfg["hidden"], cfg["num_heads"], cfg["eps"]

    x2d = x.reshape(B * S, Din)

    # position + token-type(0) embeddings: only S*H unique values, added in-kernel
    pos_tok = params["pos_emb"][:S] + params["tok_emb"][0][None, :]

    # embed_in (+ dropout = identity) + BERT embedding add + LayerNorm, fused
    h = embed_and_norm(x2d, params["embed_in_w"], params["embed_in_b"], pos_tok,
                       params["emb_ln_g"], params["emb_ln_b"], B, S, eps)

    # encoder layers (no attention mask == all ones); 2 fused kernels per layer
    for lp in params["layers"]:
        h = attention_block(h, lp, B, S, H, nH, eps)
        h = ffn_block(h, lp, eps)

    # embed_out (+ dropout = identity)
    out = linear_out(h, params["embed_out_w"], params["embed_out_b"])
    return out.reshape(B, S, Din)


if __name__ == "__main__":
    cfg = dict(
        input_dim=16,
        hidden=128,          # lane-dense feature dims
        num_heads=2,
        intermediate=512,
        num_layers=2,
        max_pos=64,
        type_vocab=2,
        eps=1e-12,
    )
    key = jax.random.PRNGKey(0)
    pkey, xkey = jax.random.split(key)
    params = init_params(pkey, cfg)

    B, S = 2, 8
    x = jax.random.normal(xkey, (B, S, cfg["input_dim"]), jnp.float32)

    fwd = jax.jit(functools.partial(vector_bert_forward, cfg=cfg))
    out = fwd(params, x)
    out = jax.block_until_ready(out)
    assert out.shape == (B, S, cfg["input_dim"])
    assert bool(jnp.all(jnp.isfinite(out)))
    print("KERNEL_OK")
</pallas_src>

<mosaic_0001>
module attributes {stable_mosaic.version = 11 : i64} {
  func.func @_embed_ln_kernel(%arg0: i32, %arg1: memref<8x16xf32, #tpu.memory_space<vmem>>, %arg2: memref<16x128xbf16, #tpu.memory_space<vmem>>, %arg3: memref<1x128xf32, #tpu.memory_space<vmem>>, %arg4: memref<8x128xf32, #tpu.memory_space<vmem>>, %arg5: memref<1x128xf32, #tpu.memory_space<vmem>>, %arg6: memref<1x128xf32, #tpu.memory_space<vmem>>, %arg7: memref<8x128xf32, #tpu.memory_space<vmem>>) attributes {dimension_semantics = [#tpu.dimension_semantics<parallel>], iteration_bounds = array<i64: 2>, scalar_prefetch = 0 : i64, scratch_operands = 0 : i64, tpu.core_type = #tpu.core_type<tc>, window_params = [{transform_indices = @transform_0, window_bounds = array<i64: 8, 16>}, {pipeline_mode = #tpu.pipeline_mode<synchronous>, transform_indices = @transform_1, window_bounds = array<i64: 16, 128>}, {pipeline_mode = #tpu.pipeline_mode<synchronous>, transform_indices = @transform_2, window_bounds = array<i64: 1, 128>}, {pipeline_mode = #tpu.pipeline_mode<synchronous>, transform_indices = @transform_3, window_bounds = array<i64: 8, 128>}, {pipeline_mode = #tpu.pipeline_mode<synchronous>, transform_indices = @transform_4, window_bounds = array<i64: 1, 128>}, {pipeline_mode = #tpu.pipeline_mode<synchronous>, transform_indices = @transform_5, window_bounds = array<i64: 1, 128>}, {transform_indices = @transform_6, window_bounds = array<i64: 8, 128>}]} {
    %c0 = arith.constant 0 : index
    %c0_0 = arith.constant 0 : index
    %0 = vector.load %arg1[%c0, %c0_0] : memref<8x16xf32, #tpu.memory_space<vmem>>, vector<8x16xf32>
    %1 = arith.truncf %0 : vector<8x16xf32> to vector<8x16xbf16>
    %c0_1 = arith.constant 0 : index
    %c0_2 = arith.constant 0 : index
    %2 = vector.load %arg2[%c0_1, %c0_2] : memref<16x128xbf16, #tpu.memory_space<vmem>>, vector<16x128xbf16>
    %cst = arith.constant dense<0.000000e+00> : vector<8x128xf32>
    %3 = tpu.matmul %1, %2, %cst {dimension_numbers = #tpu.dot_dimension_numbers<[1], [0], [0], [1], [0, 0, 1, 1], [], []>} : vector<8x16xbf16>, vector<16x128xbf16>, vector<8x128xf32> -> vector<8x128xf32>
    %c0_3 = arith.constant 0 : index
    %c0_4 = arith.constant 0 : index
    %4 = vector.load %arg3[%c0_3, %c0_4] : memref<1x128xf32, #tpu.memory_space<vmem>>, vector<1x128xf32>
    %5 = vector.broadcast %4 : vector<1x128xf32> to vector<8x128xf32>
    %6 = arith.addf %3, %5 : vector<8x128xf32>
    %c0_5 = arith.constant 0 : index
    %c0_6 = arith.constant 0 : index
    %7 = vector.load %arg4[%c0_5, %c0_6] : memref<8x128xf32, #tpu.memory_space<vmem>>, vector<8x128xf32>
    %8 = arith.addf %6, %7 : vector<8x128xf32>
    %c0_7 = arith.constant 0 : index
    %c0_8 = arith.constant 0 : index
    %9 = vector.load %arg5[%c0_7, %c0_8] : memref<1x128xf32, #tpu.memory_space<vmem>>, vector<1x128xf32>
    %c0_9 = arith.constant 0 : index
    %c0_10 = arith.constant 0 : index
    %10 = vector.load %arg6[%c0_9, %c0_10] : memref<1x128xf32, #tpu.memory_space<vmem>>, vector<1x128xf32>
    %cst_11 = arith.constant dense<0.000000e+00> : vector<8xf32>
    %11 = vector.multi_reduction <add>, %8, %cst_11 [1] : vector<8x128xf32> to vector<8xf32>
    %12 = vector.shape_cast %11 : vector<8xf32> to vector<8x1xf32>
    %cst_12 = arith.constant 1.280000e+02 : f32
    %13 = vector.broadcast %cst_12 : f32 to vector<8x1xf32>
    %14 = arith.divf %12, %13 : vector<8x1xf32>
    %15 = vector.broadcast %14 : vector<8x1xf32> to vector<8x128xf32>
    %16 = arith.subf %8, %15 : vector<8x128xf32>
    %17 = arith.mulf %16, %16 : vector<8x128xf32>
    %cst_13 = arith.constant dense<0.000000e+00> : vector<8xf32>
    %18 = vector.multi_reduction <add>, %17, %cst_13 [1] : vector<8x128xf32> to vector<8xf32>
    %19 = vector.shape_cast %18 : vector<8xf32> to vector<8x1xf32>
    %cst_14 = arith.constant 1.280000e+02 : f32
    %20 = vector.broadcast %cst_14 : f32 to vector<8x1xf32>
    %21 = arith.divf %19, %20 : vector<8x1xf32>
    %cst_15 = arith.constant 9.99999996E-13 : f32
    %22 = vector.broadcast %cst_15 : f32 to vector<8x1xf32>
    %23 = arith.addf %21, %22 : vector<8x1xf32>
    %24 = math.rsqrt %23 : vector<8x1xf32>
    %25 = vector.broadcast %24 : vector<8x1xf32> to vector<8x128xf32>
    %26 = arith.mulf %16, %25 : vector<8x128xf32>
    %27 = vector.broadcast %9 : vector<1x128xf32> to vector<8x128xf32>
    %28 = arith.mulf %26, %27 : vector<8x128xf32>
    %29 = vector.broadcast %10 : vector<1x128xf32> to vector<8x128xf32>
    %30 = arith.addf %28, %29 : vector<8x128xf32>
    %c0_16 = arith.constant 0 : index
    %c0_17 = arith.constant 0 : index
    %31 = vector.load %arg7[%c0_16, %c0_17] : memref<8x128xf32, #tpu.memory_space<vmem>>, vector<8x128xf32>
    tpu.vector_store %arg7[%c0_16, %c0_17], %30 {strides = array<i32>} : memref<8x128xf32, #tpu.memory_space<vmem>>, vector<8x128xf32>,
    return
  }
  func.func @transform_0(%arg0: i32) -> (i32, i32) {
    %c0_i32 = arith.constant 0 : i32
    %c0_i32_0 = arith.constant 0 : i32
    return %arg0, %c0_i32 : i32, i32
  }
  func.func @transform_1(%arg0: i32) -> (i32, i32) {
    %c0_i32 = arith.constant 0 : i32
    %c0_i32_0 = arith.constant 0 : i32
    %c0_i32_1 = arith.constant 0 : i32
    return %c0_i32, %c0_i32_0 : i32, i32
  }
  func.func @transform_2(%arg0: i32) -> (i32, i32) {
    %c0_i32 = arith.constant 0 : i32
    %c0_i32_0 = arith.constant 0 : i32
    %c0_i32_1 = arith.constant 0 : i32
    return %c0_i32, %c0_i32_0 : i32, i32
  }
  func.func @transform_3(%arg0: i32) -> (i32, i32) {
    %c0_i32 = arith.constant 0 : i32
    %c0_i32_0 = arith.constant 0 : i32
    %c0_i32_1 = arith.constant 0 : i32
    return %c0_i32, %c0_i32_0 : i32, i32
  }
  func.func @transform_4(%arg0: i32) -> (i32, i32) {
    %c0_i32 = arith.constant 0 : i32
    %c0_i32_0 = arith.constant 0 : i32
    %c0_i32_1 = arith.constant 0 : i32
    return %c0_i32, %c0_i32_0 : i32, i32
  }
  func.func @transform_5(%arg0: i32) -> (i32, i32) {
    %c0_i32 = arith.constant 0 : i32
    %c0_i32_0 = arith.constant 0 : i32
    %c0_i32_1 = arith.constant 0 : i32
    return %c0_i32, %c0_i32_0 : i32, i32
  }
  func.func @transform_6(%arg0: i32) -> (i32, i32) {
    %c0_i32 = arith.constant 0 : i32
    %c0_i32_0 = arith.constant 0 : i32
    return %arg0, %c0_i32 : i32, i32
  }
}

module attributes {stable_mosaic.version = 11 : i64} {
  func.func @_attn_block_kernel(%arg0: i32, %arg1: memref<8x128xf32, #tpu.memory_space<vmem>>, %arg2: memref<128x384xbf16, #tpu.memory_space<vmem>>, %arg3: memref<1x384xf32, #tpu.memory_space<vmem>>, %arg4: memref<128x128xbf16, #tpu.memory_space<vmem>>, %arg5: memref<1x128xf32, #tpu.memory_space<vmem>>, %arg6: memref<1x128xf32, #tpu.memory_space<vmem>>, %arg7: memref<1x128xf32, #tpu.memory_space<vmem>>, %arg8: memref<8x128xf32, #tpu.memory_space<vmem>>) attributes {dimension_semantics = [#tpu.dimension_semantics<parallel>], iteration_bounds = array<i64: 2>, scalar_prefetch = 0 : i64, scratch_operands = 0 : i64, tpu.core_type = #tpu.core_type<tc>, window_params = [{transform_indices = @transform_0, window_bounds = array<i64: 8, 128>}, {pipeline_mode = #tpu.pipeline_mode<synchronous>, transform_indices = @transform_1, window_bounds = array<i64: 128, 384>}, {pipeline_mode = #tpu.pipeline_mode<synchronous>, transform_indices = @transform_2, window_bounds = array<i64: 1, 384>}, {pipeline_mode = #tpu.pipeline_mode<synchronous>, transform_indices = @transform_3, window_bounds = array<i64: 128, 128>}, {pipeline_mode = #tpu.pipeline_mode<synchronous>, transform_indices = @transform_4, window_bounds = array<i64: 1, 128>}, {pipeline_mode = #tpu.pipeline_mode<synchronous>, transform_indices = @transform_5, window_bounds = array<i64: 1, 128>}, {pipeline_mode = #tpu.pipeline_mode<synchronous>, transform_indices = @transform_6, window_bounds = array<i64: 1, 128>}, {transform_indices = @transform_7, window_bounds = array<i64: 8, 128>}]} {
    %c0 = arith.constant 0 : index
    %c0_0 = arith.constant 0 : index
    %0 = vector.load %arg1[%c0, %c0_0] : memref<8x128xf32, #tpu.memory_space<vmem>>, vector<8x128xf32>
    %1 = arith.truncf %0 : vector<8x128xf32> to vector<8x128xbf16>
    %c0_1 = arith.constant 0 : index
    %c0_2 = arith.constant 0 : index
    %2 = vector.load %arg2[%c0_1, %c0_2] : memref<128x384xbf16, #tpu.memory_space<vmem>>, vector<128x384xbf16>
    %cst = arith.constant dense<0.000000e+00> : vector<8x384xf32>
    %3 = tpu.matmul %1, %2, %cst {dimension_numbers = #tpu.dot_dimension_numbers<[1], [0], [0], [1], [0, 0, 1, 1], [], []>} : vector<8x128xbf16>, vector<128x384xbf16>, vector<8x384xf32> -> vector<8x384xf32>
    %c0_3 = arith.constant 0 : index
    %c0_4 = arith.constant 0 : index
    %4 = vector.load %arg3[%c0_3, %c0_4] : memref<1x384xf32, #tpu.memory_space<vmem>>, vector<1x384xf32>
    %5 = vector.broadcast %4 : vector<1x384xf32> to vector<8x384xf32>
    %6 = arith.addf %3, %5 : vector<8x384xf32>
    %c0_5 = arith.constant 0 : index
    %c0_6 = arith.constant 0 : index
    %7 = vector.load %arg4[%c0_5, %c0_6] : memref<128x128xbf16, #tpu.memory_space<vmem>>, vector<128x128xbf16>
    %cst_7 = arith.constant 0.000000e+00 : f32
    %8 = vector.broadcast %cst_7 : f32 to vector<8x128xf32>
    %9 = vector.extract_strided_slice %6 {offsets = [0, 0], sizes = [8, 64], strides = [1, 1]} : vector<8x384xf32> to vector<8x64xf32>
    %10 = arith.truncf %9 : vector<8x64xf32> to vector<8x64xbf16>
    %11 = vector.extract_strided_slice %6 {offsets = [0, 128], sizes = [8, 64], strides = [1, 1]} : vector<8x384xf32> to vector<8x64xf32>
    %12 = arith.truncf %11 : vector<8x64xf32> to vector<8x64xbf16>
    %13 = vector.extract_strided_slice %6 {offsets = [0, 256], sizes = [8, 64], strides = [1, 1]} : vector<8x384xf32> to vector<8x64xf32>
    %14 = arith.truncf %13 : vector<8x64xf32> to vector<8x64xbf16>
    %cst_8 = arith.constant dense<0.000000e+00> : vector<8x8xf32>
    %15 = tpu.matmul %10, %12, %cst_8 {dimension_numbers = #tpu.dot_dimension_numbers<[1], [1], [0], [0], [0, 0, 1, 0], [], []>} : vector<8x64xbf16>, vector<8x64xbf16>, vector<8x8xf32> -> vector<8x8xf32>
    %cst_9 = arith.constant 1.250000e-01 : f32
    %16 = vector.broadcast %cst_9 : f32 to vector<8x8xf32>
    %17 = arith.mulf %15, %16 : vector<8x8xf32>
    %cst_10 = arith.constant dense<0xFF800000> : vector<8xf32>
    %18 = vector.multi_reduction <maximumf>, %17, %cst_10 [1] : vector<8x8xf32> to vector<8xf32>
    %19 = vector.shape_cast %18 : vector<8xf32> to vector<8x1xf32>
    %20 = vector.broadcast %19 : vector<8x1xf32> to vector<8x8xf32>
    %21 = arith.subf %17, %20 : vector<8x8xf32>
    %22 = math.exp %21 : vector<8x8xf32>
    %cst_11 = arith.constant dense<0.000000e+00> : vector<8xf32>
    %23 = vector.multi_reduction <add>, %22, %cst_11 [1] : vector<8x8xf32> to vector<8xf32>
    %24 = vector.shape_cast %23 : vector<8xf32> to vector<8x1xf32>
    %25 = arith.truncf %22 : vector<8x8xf32> to vector<8x8xbf16>
    %cst_12 = arith.constant dense<0.000000e+00> : vector<8x64xf32>
    %26 = tpu.matmul %25, %14, %cst_12 {dimension_numbers = #tpu.dot_dimension_numbers<[1], [0], [0], [1], [0, 0, 1, 1], [], []>} : vector<8x8xbf16>, vector<8x64xbf16>, vector<8x64xf32> -> vector<8x64xf32>
    %27 = tpu.reciprocal %24 {approx = true} : vector<8x1xf32> -> vector<8x1xf32>
    %28 = vector.broadcast %27 : vector<8x1xf32> to vector<8x64xf32>
    %29 = arith.mulf %26, %28 : vector<8x64xf32>
    %30 = arith.truncf %29 : vector<8x64xf32> to vector<8x64xbf16>
    %31 = vector.extract_strided_slice %7 {offsets = [0, 0], sizes = [64, 128], strides = [1, 1]} : vector<128x128xbf16> to vector<64x128xbf16>
    %cst_13 = arith.constant dense<0.000000e+00> : vector<8x128xf32>
    %32 = tpu.matmul %30, %31, %cst_13 {dimension_numbers = #tpu.dot_dimension_numbers<[1], [0], [0], [1], [0, 0, 1, 1], [], []>} : vector<8x64xbf16>, vector<64x128xbf16>, vector<8x128xf32> -> vector<8x128xf32>
    %33 = arith.addf %8, %32 : vector<8x128xf32>
    %34 = vector.extract_strided_slice %6 {offsets = [0, 64], sizes = [8, 64], strides = [1, 1]} : vector<8x384xf32> to vector<8x64xf32>
    %35 = arith.truncf %34 : vector<8x64xf32> to vector<8x64xbf16>
    %36 = vector.extract_strided_slice %6 {offsets = [0, 192], sizes = [8, 64], strides = [1, 1]} : vector<8x384xf32> to vector<8x64xf32>
    %37 = arith.truncf %36 : vector<8x64xf32> to vector<8x64xbf16>
    %38 = vector.extract_strided_slice %6 {offsets = [0, 320], sizes = [8, 64], strides = [1, 1]} : vector<8x384xf32> to vector<8x64xf32>
    %39 = arith.truncf %38 : vector<8x64xf32> to vector<8x64xbf16>
    %cst_14 = arith.constant dense<0.000000e+00> : vector<8x8xf32>
    %40 = tpu.matmul %35, %37, %cst_14 {dimension_numbers = #tpu.dot_dimension_numbers<[1], [1], [0], [0], [0, 0, 1, 0], [], []>} : vector<8x64xbf16>, vector<8x64xbf16>, vector<8x8xf32> -> vector<8x8xf32>
    %cst_15 = arith.constant 1.250000e-01 : f32
    %41 = vector.broadcast %cst_15 : f32 to vector<8x8xf32>
    %42 = arith.mulf %40, %41 : vector<8x8xf32>
    %cst_16 = arith.constant dense<0xFF800000> : vector<8xf32>
    %43 = vector.multi_reduction <maximumf>, %42, %cst_16 [1] : vector<8x8xf32> to vector<8xf32>
    %44 = vector.shape_cast %43 : vector<8xf32> to vector<8x1xf32>
    %45 = vector.broadcast %44 : vector<8x1xf32> to vector<8x8xf32>
    %46 = arith.subf %42, %45 : vector<8x8xf32>
    %47 = math.exp %46 : vector<8x8xf32>
    %cst_17 = arith.constant dense<0.000000e+00> : vector<8xf32>
    %48 = vector.multi_reduction <add>, %47, %cst_17 [1] : vector<8x8xf32> to vector<8xf32>
    %49 = vector.shape_cast %48 : vector<8xf32> to vector<8x1xf32>
    %50 = arith.truncf %47 : vector<8x8xf32> to vector<8x8xbf16>
    %cst_18 = arith.constant dense<0.000000e+00> : vector<8x64xf32>
    %51 = tpu.matmul %50, %39, %cst_18 {dimension_numbers = #tpu.dot_dimension_numbers<[1], [0], [0], [1], [0, 0, 1, 1], [], []>} : vector<8x8xbf16>, vector<8x64xbf16>, vector<8x64xf32> -> vector<8x64xf32>
    %52 = tpu.reciprocal %49 {approx = true} : vector<8x1xf32> -> vector<8x1xf32>
    %53 = vector.broadcast %52 : vector<8x1xf32> to vector<8x64xf32>
    %54 = arith.mulf %51, %53 : vector<8x64xf32>
    %55 = arith.truncf %54 : vector<8x64xf32> to vector<8x64xbf16>
    %56 = vector.extract_strided_slice %7 {offsets = [64, 0], sizes = [64, 128], strides = [1, 1]} : vector<128x128xbf16> to vector<64x128xbf16>
    %cst_19 = arith.constant dense<0.000000e+00> : vector<8x128xf32>
    %57 = tpu.matmul %55, %56, %cst_19 {dimension_numbers = #tpu.dot_dimension_numbers<[1], [0], [0], [1], [0, 0, 1, 1], [], []>} : vector<8x64xbf16>, vector<64x128xbf16>, vector<8x128xf32> -> vector<8x128xf32>
    %58 = arith.addf %33, %57 : vector<8x128xf32>
    %c0_20 = arith.constant 0 : index
    %c0_21 = arith.constant 0 : index
    %59 = vector.load %arg5[%c0_20, %c0_21] : memref<1x128xf32, #tpu.memory_space<vmem>>, vector<1x128xf32>
    %60 = vector.broadcast %59 : vector<1x128xf32> to vector<8x128xf32>
    %61 = arith.addf %58, %60 : vector<8x128xf32>
    %62 = arith.addf %61, %0 : vector<8x128xf32>
    %c0_22 = arith.constant 0 : index
    %c0_23 = arith.constant 0 : index
    %63 = vector.load %arg6[%c0_22, %c0_23] : memref<1x128xf32, #tpu.memory_space<vmem>>, vector<1x128xf32>
    %c0_24 = arith.constant 0 : index
    %c0_25 = arith.constant 0 : index
    %64 = vector.load %arg7[%c0_24, %c0_25] : memref<1x128xf32, #tpu.memory_space<vmem>>, vector<1x128xf32>
    %cst_26 = arith.constant dense<0.000000e+00> : vector<8xf32>
    %65 = vector.multi_reduction <add>, %62, %cst_26 [1] : vector<8x128xf32> to vector<8xf32>
    %66 = vector.shape_cast %65 : vector<8xf32> to vector<8x1xf32>
    %cst_27 = arith.constant 1.280000e+02 : f32
    %67 = vector.broadcast %cst_27 : f32 to vector<8x1xf32>
    %68 = arith.divf %66, %67 : vector<8x1xf32>
    %69 = vector.broadcast %68 : vector<8x1xf32> to vector<8x128xf32>
    %70 = arith.subf %62, %69 : vector<8x128xf32>
    %71 = arith.mulf %70, %70 : vector<8x128xf32>
    %cst_28 = arith.constant dense<0.000000e+00> : vector<8xf32>
    %72 = vector.multi_reduction <add>, %71, %cst_28 [1] : vector<8x128xf32> to vector<8xf32>
    %73 = vector.shape_cast %72 : vector<8xf32> to vector<8x1xf32>
    %cst_29 = arith.constant 1.280000e+02 : f32
    %74 = vector.broadcast %cst_29 : f32 to vector<8x1xf32>
    %75 = arith.divf %73, %74 : vector<8x1xf32>
    %cst_30 = arith.constant 9.99999996E-13 : f32
    %76 = vector.broadcast %cst_30 : f32 to vector<8x1xf32>
    %77 = arith.addf %75, %76 : vector<8x1xf32>
    %78 = math.rsqrt %77 : vector<8x1xf32>
    %79 = vector.broadcast %78 : vector<8x1xf32> to vector<8x128xf32>
    %80 = arith.mulf %70, %79 : vector<8x128xf32>
    %81 = vector.broadcast %63 : vector<1x128xf32> to vector<8x128xf32>
    %82 = arith.mulf %80, %81 : vector<8x128xf32>
    %83 = vector.broadcast %64 : vector<1x128xf32> to vector<8x128xf32>
    %84 = arith.addf %82, %83 : vector<8x128xf32>
    %c0_31 = arith.constant 0 : index
    %c0_32 = arith.constant 0 : index
    %85 = vector.load %arg8[%c0_31, %c0_32] : memref<8x128xf32, #tpu.memory_space<vmem>>, vector<8x128xf32>
    tpu.vector_store %arg8[%c0_31, %c0_32], %84 {strides = array<i32>} : memref<8x128xf32, #tpu.memory_space<vmem>>, vector<8x128xf32>,
    return
  }
  func.func @transform_0(%arg0: i32) -> (i32, i32) {
    %c0_i32 = arith.constant 0 : i32
    %c0_i32_0 = arith.constant 0 : i32
    return %arg0, %c0_i32 : i32, i32
  }
  func.func @transform_1(%arg0: i32) -> (i32, i32) {
    %c0_i32 = arith.constant 0 : i32
    %c0_i32_0 = arith.constant 0 : i32
    %c0_i32_1 = arith.constant 0 : i32
    return %c0_i32, %c0_i32_0 : i32, i32
  }
  func.func @transform_2(%arg0: i32) -> (i32, i32) {
    %c0_i32 = arith.constant 0 : i32
    %c0_i32_0 = arith.constant 0 : i32
    %c0_i32_1 = arith.constant 0 : i32
    return %c0_i32, %c0_i32_0 : i32, i32
  }
  func.func @transform_3(%arg0: i32) -> (i32, i32) {
    %c0_i32 = arith.constant 0 : i32
    %c0_i32_0 = arith.constant 0 : i32
    %c0_i32_1 = arith.constant 0 : i32
    return %c0_i32, %c0_i32_0 : i32, i32
  }
  func.func @transform_4(%arg0: i32) -> (i32, i32) {
    %c0_i32 = arith.constant 0 : i32
    %c0_i32_0 = arith.constant 0 : i32
    %c0_i32_1 = arith.constant 0 : i32
    return %c0_i32, %c0_i32_0 : i32, i32
  }
  func.func @transform_5(%arg0: i32) -> (i32, i32) {
    %c0_i32 = arith.constant 0 : i32
    %c0_i32_0 = arith.constant 0 : i32
    %c0_i32_1 = arith.constant 0 : i32
    return %c0_i32, %c0_i32_0 : i32, i32
  }
  func.func @transform_6(%arg0: i32) -> (i32, i32) {
    %c0_i32 = arith.constant 0 : i32
    %c0_i32_0 = arith.constant 0 : i32
    %c0_i32_1 = arith.constant 0 : i32
    return %c0_i32, %c0_i32_0 : i32, i32
  }
  func.func @transform_7(%arg0: i32) -> (i32, i32) {
    %c0_i32 = arith.constant 0 : i32
    %c0_i32_0 = arith.constant 0 : i32
    return %arg0, %c0_i32 : i32, i32
  }
}

module attributes {stable_mosaic.version = 11 : i64} {
  func.func @_ffn_block_kernel(%arg0: i32, %arg1: memref<16x128xf32, #tpu.memory_space<vmem>>, %arg2: memref<128x512xbf16, #tpu.memory_space<vmem>>, %arg3: memref<1x512xf32, #tpu.memory_space<vmem>>, %arg4: memref<512x128xbf16, #tpu.memory_space<vmem>>, %arg5: memref<1x128xf32, #tpu.memory_space<vmem>>, %arg6: memref<1x128xf32, #tpu.memory_space<vmem>>, %arg7: memref<1x128xf32, #tpu.memory_space<vmem>>, %arg8: memref<16x128xf32, #tpu.memory_space<vmem>>) attributes {dimension_semantics = [#tpu.dimension_semantics<parallel>], iteration_bounds = array<i64: 1>, scalar_prefetch = 0 : i64, scratch_operands = 0 : i64, tpu.core_type = #tpu.core_type<tc>, window_params = [{transform_indices = @transform_0, window_bounds = array<i64: 16, 128>}, {pipeline_mode = #tpu.pipeline_mode<synchronous>, transform_indices = @transform_1, window_bounds = array<i64: 128, 512>}, {pipeline_mode = #tpu.pipeline_mode<synchronous>, transform_indices = @transform_2, window_bounds = array<i64: 1, 512>}, {pipeline_mode = #tpu.pipeline_mode<synchronous>, transform_indices = @transform_3, window_bounds = array<i64: 512, 128>}, {pipeline_mode = #tpu.pipeline_mode<synchronous>, transform_indices = @transform_4, window_bounds = array<i64: 1, 128>}, {pipeline_mode = #tpu.pipeline_mode<synchronous>, transform_indices = @transform_5, window_bounds = array<i64: 1, 128>}, {pipeline_mode = #tpu.pipeline_mode<synchronous>, transform_indices = @transform_6, window_bounds = array<i64: 1, 128>}, {transform_indices = @transform_7, window_bounds = array<i64: 16, 128>}]} {
    %c0 = arith.constant 0 : index
    %c0_0 = arith.constant 0 : index
    %0 = vector.load %arg1[%c0, %c0_0] : memref<16x128xf32, #tpu.memory_space<vmem>>, vector<16x128xf32>
    %1 = arith.truncf %0 : vector<16x128xf32> to vector<16x128xbf16>
    %c0_1 = arith.constant 0 : index
    %c0_2 = arith.constant 0 : index
    %2 = vector.load %arg2[%c0_1, %c0_2] : memref<128x512xbf16, #tpu.memory_space<vmem>>, vector<128x512xbf16>
    %cst = arith.constant dense<0.000000e+00> : vector<16x512xf32>
    %3 = tpu.matmul %1, %2, %cst {dimension_numbers = #tpu.dot_dimension_numbers<[1], [0], [0], [1], [0, 0, 1, 1], [], []>} : vector<16x128xbf16>, vector<128x512xbf16>, vector<16x512xf32> -> vector<16x512xf32>
    %c0_3 = arith.constant 0 : index
    %c0_4 = arith.constant 0 : index
    %4 = vector.load %arg3[%c0_3, %c0_4] : memref<1x512xf32, #tpu.memory_space<vmem>>, vector<1x512xf32>
    %5 = vector.broadcast %4 : vector<1x512xf32> to vector<16x512xf32>
    %6 = arith.addf %3, %5 : vector<16x512xf32>
    %cst_5 = arith.constant 5.000000e-01 : f32
    %7 = vector.broadcast %cst_5 : f32 to vector<16x512xf32>
    %8 = arith.mulf %7, %6 : vector<16x512xf32>
    %cst_6 = arith.constant 0.707106769 : f32
    %9 = vector.broadcast %cst_6 : f32 to vector<16x512xf32>
    %10 = arith.mulf %6, %9 : vector<16x512xf32>
    %11 = math.erf %10 : vector<16x512xf32>
    %cst_7 = arith.constant 1.000000e+00 : f32
    %12 = vector.broadcast %cst_7 : f32 to vector<16x512xf32>
    %13 = arith.addf %12, %11 : vector<16x512xf32>
    %14 = arith.mulf %8, %13 : vector<16x512xf32>
    %15 = arith.truncf %14 : vector<16x512xf32> to vector<16x512xbf16>
    %c0_8 = arith.constant 0 : index
    %c0_9 = arith.constant 0 : index
    %16 = vector.load %arg4[%c0_8, %c0_9] : memref<512x128xbf16, #tpu.memory_space<vmem>>, vector<512x128xbf16>
    %cst_10 = arith.constant dense<0.000000e+00> : vector<16x128xf32>
    %17 = tpu.matmul %15, %16, %cst_10 {dimension_numbers = #tpu.dot_dimension_numbers<[1], [0], [0], [1], [0, 0, 1, 1], [], []>} : vector<16x512xbf16>, vector<512x128xbf16>, vector<16x128xf32> -> vector<16x128xf32>
    %c0_11 = arith.constant 0 : index
    %c0_12 = arith.constant 0 : index
    %18 = vector.load %arg5[%c0_11, %c0_12] : memref<1x128xf32, #tpu.memory_space<vmem>>, vector<1x128xf32>
    %19 = vector.broadcast %18 : vector<1x128xf32> to vector<16x128xf32>
    %20 = arith.addf %17, %19 : vector<16x128xf32>
    %21 = arith.addf %20, %0 : vector<16x128xf32>
    %c0_13 = arith.constant 0 : index
    %c0_14 = arith.constant 0 : index
    %22 = vector.load %arg6[%c0_13, %c0_14] : memref<1x128xf32, #tpu.memory_space<vmem>>, vector<1x128xf32>
    %c0_15 = arith.constant 0 : index
    %c0_16 = arith.constant 0 : index
    %23 = vector.load %arg7[%c0_15, %c0_16] : memref<1x128xf32, #tpu.memory_space<vmem>>, vector<1x128xf32>
    %cst_17 = arith.constant dense<0.000000e+00> : vector<16xf32>
    %24 = vector.multi_reduction <add>, %21, %cst_17 [1] : vector<16x128xf32> to vector<16xf32>
    %25 = vector.shape_cast %24 : vector<16xf32> to vector<16x1xf32>
    %cst_18 = arith.constant 1.280000e+02 : f32
    %26 = vector.broadcast %cst_18 : f32 to vector<16x1xf32>
    %27 = arith.divf %25, %26 : vector<16x1xf32>
    %28 = vector.broadcast %27 : vector<16x1xf32> to vector<16x128xf32>
    %29 = arith.subf %21, %28 : vector<16x128xf32>
    %30 = arith.mulf %29, %29 : vector<16x128xf32>
    %cst_19 = arith.constant dense<0.000000e+00> : vector<16xf32>
    %31 = vector.multi_reduction <add>, %30, %cst_19 [1] : vector<16x128xf32> to vector<16xf32>
    %32 = vector.shape_cast %31 : vector<16xf32> to vector<16x1xf32>
    %cst_20 = arith.constant 1.280000e+02 : f32
    %33 = vector.broadcast %cst_20 : f32 to vector<16x1xf32>
    %34 = arith.divf %32, %33 : vector<16x1xf32>
    %cst_21 = arith.constant 9.99999996E-13 : f32
    %35 = vector.broadcast %cst_21 : f32 to vector<16x1xf32>
    %36 = arith.addf %34, %35 : vector<16x1xf32>
    %37 = math.rsqrt %36 : vector<16x1xf32>
    %38 = vector.broadcast %37 : vector<16x1xf32> to vector<16x128xf32>
    %39 = arith.mulf %29, %38 : vector<16x128xf32>
    %40 = vector.broadcast %22 : vector<1x128xf32> to vector<16x128xf32>
    %41 = arith.mulf %39, %40 : vector<16x128xf32>
    %42 = vector.broadcast %23 : vector<1x128xf32> to vector<16x128xf32>
    %43 = arith.addf %41, %42 : vector<16x128xf32>
    %c0_22 = arith.constant 0 : index
    %c0_23 = arith.constant 0 : index
    %44 = vector.load %arg8[%c0_22, %c0_23] : memref<16x128xf32, #tpu.memory_space<vmem>>, vector<16x128xf32>
    tpu.vector_store %arg8[%c0_22, %c0_23], %43 {strides = array<i32>} : memref<16x128xf32, #tpu.memory_space<vmem>>, vector<16x128xf32>,
    return
  }
  func.func @transform_0(%arg0: i32) -> (i32, i32) {
    %c0_i32 = arith.constant 0 : i32
    %c0_i32_0 = arith.constant 0 : i32
    return %arg0, %c0_i32 : i32, i32
  }
  func.func @transform_1(%arg0: i32) -> (i32, i32) {
    %c0_i32 = arith.constant 0 : i32
    %c0_i32_0 = arith.constant 0 : i32
    %c0_i32_1 = arith.constant 0 : i32
    return %c0_i32, %c0_i32_0 : i32, i32
  }
  func.func @transform_2(%arg0: i32) -> (i32, i32) {
    %c0_i32 = arith.constant 0 : i32
    %c0_i32_0 = arith.constant 0 : i32
    %c0_i32_1 = arith.constant 0 : i32
    return %c0_i32, %c0_i32_0 : i32, i32
  }
  func.func @transform_3(%arg0: i32) -> (i32, i32) {
    %c0_i32 = arith.constant 0 : i32
    %c0_i32_0 = arith.constant 0 : i32
    %c0_i32_1 = arith.constant 0 : i32
    return %c0_i32, %c0_i32_0 : i32, i32
  }
  func.func @transform_4(%arg0: i32) -> (i32, i32) {
    %c0_i32 = arith.constant 0 : i32
    %c0_i32_0 = arith.constant 0 : i32
    %c0_i32_1 = arith.constant 0 : i32
    return %c0_i32, %c0_i32_0 : i32, i32
  }
  func.func @transform_5(%arg0: i32) -> (i32, i32) {
    %c0_i32 = arith.constant 0 : i32
    %c0_i32_0 = arith.constant 0 : i32
    %c0_i32_1 = arith.constant 0 : i32
    return %c0_i32, %c0_i32_0 : i32, i32
  }
  func.func @transform_6(%arg0: i32) -> (i32, i32) {
    %c0_i32 = arith.constant 0 : i32
    %c0_i32_0 = arith.constant 0 : i32
    %c0_i32_1 = arith.constant 0 : i32
    return %c0_i32, %c0_i32_0 : i32, i32
  }
  func.func @transform_7(%arg0: i32) -> (i32, i32) {
    %c0_i32 = arith.constant 0 : i32
    %c0_i32_0 = arith.constant 0 : i32
    return %arg0, %c0_i32 : i32, i32
  }
}

module attributes {stable_mosaic.version = 11 : i64} {
  func.func @_attn_block_kernel(%arg0: i32, %arg1: memref<8x128xf32, #tpu.memory_space<vmem>>, %arg2: memref<128x384xbf16, #tpu.memory_space<vmem>>, %arg3: memref<1x384xf32, #tpu.memory_space<vmem>>, %arg4: memref<128x128xbf16, #tpu.memory_space<vmem>>, %arg5: memref<1x128xf32, #tpu.memory_space<vmem>>, %arg6: memref<1x128xf32, #tpu.memory_space<vmem>>, %arg7: memref<1x128xf32, #tpu.memory_space<vmem>>, %arg8: memref<8x128xf32, #tpu.memory_space<vmem>>) attributes {dimension_semantics = [#tpu.dimension_semantics<parallel>], iteration_bounds = array<i64: 2>, scalar_prefetch = 0 : i64, scratch_operands = 0 : i64, tpu.core_type = #tpu.core_type<tc>, window_params = [{transform_indices = @transform_0, window_bounds = array<i64: 8, 128>}, {pipeline_mode = #tpu.pipeline_mode<synchronous>, transform_indices = @transform_1, window_bounds = array<i64: 128, 384>}, {pipeline_mode = #tpu.pipeline_mode<synchronous>, transform_indices = @transform_2, window_bounds = array<i64: 1, 384>}, {pipeline_mode = #tpu.pipeline_mode<synchronous>, transform_indices = @transform_3, window_bounds = array<i64: 128, 128>}, {pipeline_mode = #tpu.pipeline_mode<synchronous>, transform_indices = @transform_4, window_bounds = array<i64: 1, 128>}, {pipeline_mode = #tpu.pipeline_mode<synchronous>, transform_indices = @transform_5, window_bounds = array<i64: 1, 128>}, {pipeline_mode = #tpu.pipeline_mode<synchronous>, transform_indices = @transform_6, window_bounds = array<i64: 1, 128>}, {transform_indices = @transform_7, window_bounds = array<i64: 8, 128>}]} {
    %c0 = arith.constant 0 : index
    %c0_0 = arith.constant 0 : index
    %0 = vector.load %arg1[%c0, %c0_0] : memref<8x128xf32, #tpu.memory_space<vmem>>, vector<8x128xf32>
    %1 = arith.truncf %0 : vector<8x128xf32> to vector<8x128xbf16>
    %c0_1 = arith.constant 0 : index
    %c0_2 = arith.constant 0 : index
    %2 = vector.load %arg2[%c0_1, %c0_2] : memref<128x384xbf16, #tpu.memory_space<vmem>>, vector<128x384xbf16>
    %cst = arith.constant dense<0.000000e+00> : vector<8x384xf32>
    %3 = tpu.matmul %1, %2, %cst {dimension_numbers = #tpu.dot_dimension_numbers<[1], [0], [0], [1], [0, 0, 1, 1], [], []>} : vector<8x128xbf16>, vector<128x384xbf16>, vector<8x384xf32> -> vector<8x384xf32>
    %c0_3 = arith.constant 0 : index
    %c0_4 = arith.constant 0 : index
    %4 = vector.load %arg3[%c0_3, %c0_4] : memref<1x384xf32, #tpu.memory_space<vmem>>, vector<1x384xf32>
    %5 = vector.broadcast %4 : vector<1x384xf32> to vector<8x384xf32>
    %6 = arith.addf %3, %5 : vector<8x384xf32>
    %c0_5 = arith.constant 0 : index
    %c0_6 = arith.constant 0 : index
    %7 = vector.load %arg4[%c0_5, %c0_6] : memref<128x128xbf16, #tpu.memory_space<vmem>>, vector<128x128xbf16>
    %cst_7 = arith.constant 0.000000e+00 : f32
    %8 = vector.broadcast %cst_7 : f32 to vector<8x128xf32>
    %9 = vector.extract_strided_slice %6 {offsets = [0, 0], sizes = [8, 64], strides = [1, 1]} : vector<8x384xf32> to vector<8x64xf32>
    %10 = arith.truncf %9 : vector<8x64xf32> to vector<8x64xbf16>
    %11 = vector.extract_strided_slice %6 {offsets = [0, 128], sizes = [8, 64], strides = [1, 1]} : vector<8x384xf32> to vector<8x64xf32>
    %12 = arith.truncf %11 : vector<8x64xf32> to vector<8x64xbf16>
    %13 = vector.extract_strided_slice %6 {offsets = [0, 256], sizes = [8, 64], strides = [1, 1]} : vector<8x384xf32> to vector<8x64xf32>
    %14 = arith.truncf %13 : vector<8x64xf32> to vector<8x64xbf16>
    %cst_8 = arith.constant dense<0.000000e+00> : vector<8x8xf32>
    %15 = tpu.matmul %10, %12, %cst_8 {dimension_numbers = #tpu.dot_dimension_numbers<[1], [1], [0], [0], [0, 0, 1, 0], [], []>} : vector<8x64xbf16>, vector<8x64xbf16>, vector<8x8xf32> -> vector<8x8xf32>
    %cst_9 = arith.constant 1.250000e-01 : f32
    %16 = vector.broadcast %cst_9 : f32 to vector<8x8xf32>
    %17 = arith.mulf %15, %16 : vector<8x8xf32>
    %cst_10 = arith.constant dense<0xFF800000> : vector<8xf32>
    %18 = vector.multi_reduction <maximumf>, %17, %cst_10 [1] : vector<8x8xf32> to vector<8xf32>
    %19 = vector.shape_cast %18 : vector<8xf32> to vector<8x1xf32>
    %20 = vector.broadcast %19 : vector<8x1xf32> to vector<8x8xf32>
    %21 = arith.subf %17, %20 : vector<8x8xf32>
    %22 = math.exp %21 : vector<8x8xf32>
    %cst_11 = arith.constant dense<0.000000e+00> : vector<8xf32>
    %23 = vector.multi_reduction <add>, %22, %cst_11 [1] : vector<8x8xf32> to vector<8xf32>
    %24 = vector.shape_cast %23 : vector<8xf32> to vector<8x1xf32>
    %25 = arith.truncf %22 : vector<8x8xf32> to vector<8x8xbf16>
    %cst_12 = arith.constant dense<0.000000e+00> : vector<8x64xf32>
    %26 = tpu.matmul %25, %14, %cst_12 {dimension_numbers = #tpu.dot_dimension_numbers<[1], [0], [0], [1], [0, 0, 1, 1], [], []>} : vector<8x8xbf16>, vector<8x64xbf16>, vector<8x64xf32> -> vector<8x64xf32>
    %27 = tpu.reciprocal %24 {approx = true} : vector<8x1xf32> -> vector<8x1xf32>
    %28 = vector.broadcast %27 : vector<8x1xf32> to vector<8x64xf32>
    %29 = arith.mulf %26, %28 : vector<8x64xf32>
    %30 = arith.truncf %29 : vector<8x64xf32> to vector<8x64xbf16>
    %31 = vector.extract_strided_slice %7 {offsets = [0, 0], sizes = [64, 128], strides = [1, 1]} : vector<128x128xbf16> to vector<64x128xbf16>
    %cst_13 = arith.constant dense<0.000000e+00> : vector<8x128xf32>
    %32 = tpu.matmul %30, %31, %cst_13 {dimension_numbers = #tpu.dot_dimension_numbers<[1], [0], [0], [1], [0, 0, 1, 1], [], []>} : vector<8x64xbf16>, vector<64x128xbf16>, vector<8x128xf32> -> vector<8x128xf32>
    %33 = arith.addf %8, %32 : vector<8x128xf32>
    %34 = vector.extract_strided_slice %6 {offsets = [0, 64], sizes = [8, 64], strides = [1, 1]} : vector<8x384xf32> to vector<8x64xf32>
    %35 = arith.truncf %34 : vector<8x64xf32> to vector<8x64xbf16>
    %36 = vector.extract_strided_slice %6 {offsets = [0, 192], sizes = [8, 64], strides = [1, 1]} : vector<8x384xf32> to vector<8x64xf32>
    %37 = arith.truncf %36 : vector<8x64xf32> to vector<8x64xbf16>
    %38 = vector.extract_strided_slice %6 {offsets = [0, 320], sizes = [8, 64], strides = [1, 1]} : vector<8x384xf32> to vector<8x64xf32>
    %39 = arith.truncf %38 : vector<8x64xf32> to vector<8x64xbf16>
    %cst_14 = arith.constant dense<0.000000e+00> : vector<8x8xf32>
    %40 = tpu.matmul %35, %37, %cst_14 {dimension_numbers = #tpu.dot_dimension_numbers<[1], [1], [0], [0], [0, 0, 1, 0], [], []>} : vector<8x64xbf16>, vector<8x64xbf16>, vector<8x8xf32> -> vector<8x8xf32>
    %cst_15 = arith.constant 1.250000e-01 : f32
    %41 = vector.broadcast %cst_15 : f32 to vector<8x8xf32>
    %42 = arith.mulf %40, %41 : vector<8x8xf32>
    %cst_16 = arith.constant dense<0xFF800000> : vector<8xf32>
    %43 = vector.multi_reduction <maximumf>, %42, %cst_16 [1] : vector<8x8xf32> to vector<8xf32>
    %44 = vector.shape_cast %43 : vector<8xf32> to vector<8x1xf32>
    %45 = vector.broadcast %44 : vector<8x1xf32> to vector<8x8xf32>
    %46 = arith.subf %42, %45 : vector<8x8xf32>
    %47 = math.exp %46 : vector<8x8xf32>
    %cst_17 = arith.constant dense<0.000000e+00> : vector<8xf32>
    %48 = vector.multi_reduction <add>, %47, %cst_17 [1] : vector<8x8xf32> to vector<8xf32>
    %49 = vector.shape_cast %48 : vector<8xf32> to vector<8x1xf32>
    %50 = arith.truncf %47 : vector<8x8xf32> to vector<8x8xbf16>
    %cst_18 = arith.constant dense<0.000000e+00> : vector<8x64xf32>
    %51 = tpu.matmul %50, %39, %cst_18 {dimension_numbers = #tpu.dot_dimension_numbers<[1], [0], [0], [1], [0, 0, 1, 1], [], []>} : vector<8x8xbf16>, vector<8x64xbf16>, vector<8x64xf32> -> vector<8x64xf32>
    %52 = tpu.reciprocal %49 {approx = true} : vector<8x1xf32> -> vector<8x1xf32>
    %53 = vector.broadcast %52 : vector<8x1xf32> to vector<8x64xf32>
    %54 = arith.mulf %51, %53 : vector<8x64xf32>
    %55 = arith.truncf %54 : vector<8x64xf32> to vector<8x64xbf16>
    %56 = vector.extract_strided_slice %7 {offsets = [64, 0], sizes = [64, 128], strides = [1, 1]} : vector<128x128xbf16> to vector<64x128xbf16>
    %cst_19 = arith.constant dense<0.000000e+00> : vector<8x128xf32>
    %57 = tpu.matmul %55, %56, %cst_19 {dimension_numbers = #tpu.dot_dimension_numbers<[1], [0], [0], [1], [0, 0, 1, 1], [], []>} : vector<8x64xbf16>, vector<64x128xbf16>, vector<8x128xf32> -> vector<8x128xf32>
    %58 = arith.addf %33, %57 : vector<8x128xf32>
    %c0_20 = arith.constant 0 : index
    %c0_21 = arith.constant 0 : index
    %59 = vector.load %arg5[%c0_20, %c0_21] : memref<1x128xf32, #tpu.memory_space<vmem>>, vector<1x128xf32>
    %60 = vector.broadcast %59 : vector<1x128xf32> to vector<8x128xf32>
    %61 = arith.addf %58, %60 : vector<8x128xf32>
    %62 = arith.addf %61, %0 : vector<8x128xf32>
    %c0_22 = arith.constant 0 : index
    %c0_23 = arith.constant 0 : index
    %63 = vector.load %arg6[%c0_22, %c0_23] : memref<1x128xf32, #tpu.memory_space<vmem>>, vector<1x128xf32>
    %c0_24 = arith.constant 0 : index
    %c0_25 = arith.constant 0 : index
    %64 = vector.load %arg7[%c0_24, %c0_25] : memref<1x128xf32, #tpu.memory_space<vmem>>, vector<1x128xf32>
    %cst_26 = arith.constant dense<0.000000e+00> : vector<8xf32>
    %65 = vector.multi_reduction <add>, %62, %cst_26 [1] : vector<8x128xf32> to vector<8xf32>
    %66 = vector.shape_cast %65 : vector<8xf32> to vector<8x1xf32>
    %cst_27 = arith.constant 1.280000e+02 : f32
    %67 = vector.broadcast %cst_27 : f32 to vector<8x1xf32>
    %68 = arith.divf %66, %67 : vector<8x1xf32>
    %69 = vector.broadcast %68 : vector<8x1xf32> to vector<8x128xf32>
    %70 = arith.subf %62, %69 : vector<8x128xf32>
    %71 = arith.mulf %70, %70 : vector<8x128xf32>
    %cst_28 = arith.constant dense<0.000000e+00> : vector<8xf32>
    %72 = vector.multi_reduction <add>, %71, %cst_28 [1] : vector<8x128xf32> to vector<8xf32>
    %73 = vector.shape_cast %72 : vector<8xf32> to vector<8x1xf32>
    %cst_29 = arith.constant 1.280000e+02 : f32
    %74 = vector.broadcast %cst_29 : f32 to vector<8x1xf32>
    %75 = arith.divf %73, %74 : vector<8x1xf32>
    %cst_30 = arith.constant 9.99999996E-13 : f32
    %76 = vector.broadcast %cst_30 : f32 to vector<8x1xf32>
    %77 = arith.addf %75, %76 : vector<8x1xf32>
    %78 = math.rsqrt %77 : vector<8x1xf32>
    %79 = vector.broadcast %78 : vector<8x1xf32> to vector<8x128xf32>
    %80 = arith.mulf %70, %79 : vector<8x128xf32>
    %81 = vector.broadcast %63 : vector<1x128xf32> to vector<8x128xf32>
    %82 = arith.mulf %80, %81 : vector<8x128xf32>
    %83 = vector.broadcast %64 : vector<1x128xf32> to vector<8x128xf32>
    %84 = arith.addf %82, %83 : vector<8x128xf32>
    %c0_31 = arith.constant 0 : index
    %c0_32 = arith.constant 0 : index
    %85 = vector.load %arg8[%c0_31, %c0_32] : memref<8x128xf32, #tpu.memory_space<vmem>>, vector<8x128xf32>
    tpu.vector_store %arg8[%c0_31, %c0_32], %84 {strides = array<i32>} : memref<8x128xf32, #tpu.memory_space<vmem>>, vector<8x128xf32>,
    return
  }
  func.func @transform_0(%arg0: i32) -> (i32, i32) {
    %c0_i32 = arith.constant 0 : i32
    %c0_i32_0 = arith.constant 0 : i32
    return %arg0, %c0_i32 : i32, i32
  }
  func.func @transform_1(%arg0: i32) -> (i32, i32) {
    %c0_i32 = arith.constant 0 : i32
    %c0_i32_0 = arith.constant 0 : i32
    %c0_i32_1 = arith.constant 0 : i32
    return %c0_i32, %c0_i32_0 : i32, i32
  }
  func.func @transform_2(%arg0: i32) -> (i32, i32) {
    %c0_i32 = arith.constant 0 : i32
    %c0_i32_0 = arith.constant 0 : i32
    %c0_i32_1 = arith.constant 0 : i32
    return %c0_i32, %c0_i32_0 : i32, i32
  }
  func.func @transform_3(%arg0: i32) -> (i32, i32) {
    %c0_i32 = arith.constant 0 : i32
    %c0_i32_0 = arith.constant 0 : i32
    %c0_i32_1 = arith.constant 0 : i32
    return %c0_i32, %c0_i32_0 : i32, i32
  }
  func.func @transform_4(%arg0: i32) -> (i32, i32) {
    %c0_i32 = arith.constant 0 : i32
    %c0_i32_0 = arith.constant 0 : i32
    %c0_i32_1 = arith.constant 0 : i32
    return %c0_i32, %c0_i32_0 : i32, i32
  }
  func.func @transform_5(%arg0: i32) -> (i32, i32) {
    %c0_i32 = arith.constant 0 : i32
    %c0_i32_0 = arith.constant 0 : i32
    %c0_i32_1 = arith.constant 0 : i32
    return %c0_i32, %c0_i32_0 : i32, i32
  }
  func.func @transform_6(%arg0: i32) -> (i32, i32) {
    %c0_i32 = arith.constant 0 : i32
    %c0_i32_0 = arith.constant 0 : i32
    %c0_i32_1 = arith.constant 0 : i32
    return %c0_i32, %c0_i32_0 : i32, i32
  }
  func.func @transform_7(%arg0: i32) -> (i32, i32) {
    %c0_i32 = arith.constant 0 : i32
    %c0_i32_0 = arith.constant 0 : i32
    return %arg0, %c0_i32 : i32, i32
  }
}

module attributes {stable_mosaic.version = 11 : i64} {
  func.func @_ffn_block_kernel(%arg0: i32, %arg1: memref<16x128xf32, #tpu.memory_space<vmem>>, %arg2: memref<128x512xbf16, #tpu.memory_space<vmem>>, %arg3: memref<1x512xf32, #tpu.memory_space<vmem>>, %arg4: memref<512x128xbf16, #tpu.memory_space<vmem>>, %arg5: memref<1x128xf32, #tpu.memory_space<vmem>>, %arg6: memref<1x128xf32, #tpu.memory_space<vmem>>, %arg7: memref<1x128xf32, #tpu.memory_space<vmem>>, %arg8: memref<16x128xf32, #tpu.memory_space<vmem>>) attributes {dimension_semantics = [#tpu.dimension_semantics<parallel>], iteration_bounds = array<i64: 1>, scalar_prefetch = 0 : i64, scratch_operands = 0 : i64, tpu.core_type = #tpu.core_type<tc>, window_params = [{transform_indices = @transform_0, window_bounds = array<i64: 16, 128>}, {pipeline_mode = #tpu.pipeline_mode<synchronous>, transform_indices = @transform_1, window_bounds = array<i64: 128, 512>}, {pipeline_mode = #tpu.pipeline_mode<synchronous>, transform_indices = @transform_2, window_bounds = array<i64: 1, 512>}, {pipeline_mode = #tpu.pipeline_mode<synchronous>, transform_indices = @transform_3, window_bounds = array<i64: 512, 128>}, {pipeline_mode = #tpu.pipeline_mode<synchronous>, transform_indices = @transform_4, window_bounds = array<i64: 1, 128>}, {pipeline_mode = #tpu.pipeline_mode<synchronous>, transform_indices = @transform_5, window_bounds = array<i64: 1, 128>}, {pipeline_mode = #tpu.pipeline_mode<synchronous>, transform_indices = @transform_6, window_bounds = array<i64: 1, 128>}, {transform_indices = @transform_7, window_bounds = array<i64: 16, 128>}]} {
    %c0 = arith.constant 0 : index
    %c0_0 = arith.constant 0 : index
    %0 = vector.load %arg1[%c0, %c0_0] : memref<16x128xf32, #tpu.memory_space<vmem>>, vector<16x128xf32>
    %1 = arith.truncf %0 : vector<16x128xf32> to vector<16x128xbf16>
    %c0_1 = arith.constant 0 : index
    %c0_2 = arith.constant 0 : index
    %2 = vector.load %arg2[%c0_1, %c0_2] : memref<128x512xbf16, #tpu.memory_space<vmem>>, vector<128x512xbf16>
    %cst = arith.constant dense<0.000000e+00> : vector<16x512xf32>
    %3 = tpu.matmul %1, %2, %cst {dimension_numbers = #tpu.dot_dimension_numbers<[1], [0], [0], [1], [0, 0, 1, 1], [], []>} : vector<16x128xbf16>, vector<128x512xbf16>, vector<16x512xf32> -> vector<16x512xf32>
    %c0_3 = arith.constant 0 : index
    %c0_4 = arith.constant 0 : index
    %4 = vector.load %arg3[%c0_3, %c0_4] : memref<1x512xf32, #tpu.memory_space<vmem>>, vector<1x512xf32>
    %5 = vector.broadcast %4 : vector<1x512xf32> to vector<16x512xf32>
    %6 = arith.addf %3, %5 : vector<16x512xf32>
    %cst_5 = arith.constant 5.000000e-01 : f32
    %7 = vector.broadcast %cst_5 : f32 to vector<16x512xf32>
    %8 = arith.mulf %7, %6 : vector<16x512xf32>
    %cst_6 = arith.constant 0.707106769 : f32
    %9 = vector.broadcast %cst_6 : f32 to vector<16x512xf32>
    %10 = arith.mulf %6, %9 : vector<16x512xf32>
    %11 = math.erf %10 : vector<16x512xf32>
    %cst_7 = arith.constant 1.000000e+00 : f32
    %12 = vector.broadcast %cst_7 : f32 to vector<16x512xf32>
    %13 = arith.addf %12, %11 : vector<16x512xf32>
    %14 = arith.mulf %8, %13 : vector<16x512xf32>
    %15 = arith.truncf %14 : vector<16x512xf32> to vector<16x512xbf16>
    %c0_8 = arith.constant 0 : index
    %c0_9 = arith.constant 0 : index
    %16 = vector.load %arg4[%c0_8, %c0_9] : memref<512x128xbf16, #tpu.memory_space<vmem>>, vector<512x128xbf16>
    %cst_10 = arith.constant dense<0.000000e+00> : vector<16x128xf32>
    %17 = tpu.matmul %15, %16, %cst_10 {dimension_numbers = #tpu.dot_dimension_numbers<[1], [0], [0], [1], [0, 0, 1, 1], [], []>} : vector<16x512xbf16>, vector<512x128xbf16>, vector<16x128xf32> -> vector<16x128xf32>
    %c0_11 = arith.constant 0 : index
    %c0_12 = arith.constant 0 : index
    %18 = vector.load %arg5[%c0_11, %c0_12] : memref<1x128xf32, #tpu.memory_space<vmem>>, vector<1x128xf32>
    %19 = vector.broadcast %18 : vector<1x128xf32> to vector<16x128xf32>
    %20 = arith.addf %17, %19 : vector<16x128xf32>
    %21 = arith.addf %20, %0 : vector<16x128xf32>
    %c0_13 = arith.constant 0 : index
    %c0_14 = arith.constant 0 : index
    %22 = vector.load %arg6[%c0_13, %c0_14] : memref<1x128xf32, #tpu.memory_space<vmem>>, vector<1x128xf32>
    %c0_15 = arith.constant 0 : index
    %c0_16 = arith.constant 0 : index
    %23 = vector.load %arg7[%c0_15, %c0_16] : memref<1x128xf32, #tpu.memory_space<vmem>>, vector<1x128xf32>
    %cst_17 = arith.constant dense<0.000000e+00> : vector<16xf32>
    %24 = vector.multi_reduction <add>, %21, %cst_17 [1] : vector<16x128xf32> to vector<16xf32>
    %25 = vector.shape_cast %24 : vector<16xf32> to vector<16x1xf32>
    %cst_18 = arith.constant 1.280000e+02 : f32
    %26 = vector.broadcast %cst_18 : f32 to vector<16x1xf32>
    %27 = arith.divf %25, %26 : vector<16x1xf32>
    %28 = vector.broadcast %27 : vector<16x1xf32> to vector<16x128xf32>
    %29 = arith.subf %21, %28 : vector<16x128xf32>
    %30 = arith.mulf %29, %29 : vector<16x128xf32>
    %cst_19 = arith.constant dense<0.000000e+00> : vector<16xf32>
    %31 = vector.multi_reduction <add>, %30, %cst_19 [1] : vector<16x128xf32> to vector<16xf32>
    %32 = vector.shape_cast %31 : vector<16xf32> to vector<16x1xf32>
    %cst_20 = arith.constant 1.280000e+02 : f32
    %33 = vector.broadcast %cst_20 : f32 to vector<16x1xf32>
    %34 = arith.divf %32, %33 : vector<16x1xf32>
    %cst_21 = arith.constant 9.99999996E-13 : f32
    %35 = vector.broadcast %cst_21 : f32 to vector<16x1xf32>
    %36 = arith.addf %34, %35 : vector<16x1xf32>
    %37 = math.rsqrt %36 : vector<16x1xf32>
    %38 = vector.broadcast %37 : vector<16x1xf32> to vector<16x128xf32>
    %39 = arith.mulf %29, %38 : vector<16x128xf32>
    %40 = vector.broadcast %22 : vector<1x128xf32> to vector<16x128xf32>
    %41 = arith.mulf %39, %40 : vector<16x128xf32>
    %42 = vector.broadcast %23 : vector<1x128xf32> to vector<16x128xf32>
    %43 = arith.addf %41, %42 : vector<16x128xf32>
    %c0_22 = arith.constant 0 : index
    %c0_23 = arith.constant 0 : index
    %44 = vector.load %arg8[%c0_22, %c0_23] : memref<16x128xf32, #tpu.memory_space<vmem>>, vector<16x128xf32>
    tpu.vector_store %arg8[%c0_22, %c0_23], %43 {strides = array<i32>} : memref<16x128xf32, #tpu.memory_space<vmem>>, vector<16x128xf32>,
    return
  }
  func.func @transform_0(%arg0: i32) -> (i32, i32) {
    %c0_i32 = arith.constant 0 : i32
    %c0_i32_0 = arith.constant 0 : i32
    return %arg0, %c0_i32 : i32, i32
  }
  func.func @transform_1(%arg0: i32) -> (i32, i32) {
    %c0_i32 = arith.constant 0 : i32
    %c0_i32_0 = arith.constant 0 : i32
    %c0_i32_1 = arith.constant 0 : i32
    return %c0_i32, %c0_i32_0 : i32, i32
  }
  func.func @transform_2(%arg0: i32) -> (i32, i32) {
    %c0_i32 = arith.constant 0 : i32
    %c0_i32_0 = arith.constant 0 : i32
    %c0_i32_1 = arith.constant 0 : i32
    return %c0_i32, %c0_i32_0 : i32, i32
  }
  func.func @transform_3(%arg0: i32) -> (i32, i32) {
    %c0_i32 = arith.constant 0 : i32
    %c0_i32_0 = arith.constant 0 : i32
    %c0_i32_1 = arith.constant 0 : i32
    return %c0_i32, %c0_i32_0 : i32, i32
  }
  func.func @transform_4(%arg0: i32) -> (i32, i32) {
    %c0_i32 = arith.constant 0 : i32
    %c0_i32_0 = arith.constant 0 : i32
    %c0_i32_1 = arith.constant 0 : i32
    return %c0_i32, %c0_i32_0 : i32, i32
  }
  func.func @transform_5(%arg0: i32) -> (i32, i32) {
    %c0_i32 = arith.constant 0 : i32
    %c0_i32_0 = arith.constant 0 : i32
    %c0_i32_1 = arith.constant 0 : i32
    return %c0_i32, %c0_i32_0 : i32, i32
  }
  func.func @transform_6(%arg0: i32) -> (i32, i32) {
    %c0_i32 = arith.constant 0 : i32
    %c0_i32_0 = arith.constant 0 : i32
    %c0_i32_1 = arith.constant 0 : i32
    return %c0_i32, %c0_i32_0 : i32, i32
  }
  func.func @transform_7(%arg0: i32) -> (i32, i32) {
    %c0_i32 = arith.constant 0 : i32
    %c0_i32_0 = arith.constant 0 : i32
    return %arg0, %c0_i32 : i32, i32
  }
}

module attributes {stable_mosaic.version = 11 : i64} {
  func.func @_linear_kernel(%arg0: i32, %arg1: memref<16x128xf32, #tpu.memory_space<vmem>>, %arg2: memref<128x16xbf16, #tpu.memory_space<vmem>>, %arg3: memref<1x16xf32, #tpu.memory_space<vmem>>, %arg4: memref<16x16xf32, #tpu.memory_space<vmem>>) attributes {dimension_semantics = [#tpu.dimension_semantics<parallel>], iteration_bounds = array<i64: 1>, scalar_prefetch = 0 : i64, scratch_operands = 0 : i64, tpu.core_type = #tpu.core_type<tc>, window_params = [{transform_indices = @transform_0, window_bounds = array<i64: 16, 128>}, {pipeline_mode = #tpu.pipeline_mode<synchronous>, transform_indices = @transform_1, window_bounds = array<i64: 128, 16>}, {pipeline_mode = #tpu.pipeline_mode<synchronous>, transform_indices = @transform_2, window_bounds = array<i64: 1, 16>}, {transform_indices = @transform_3, window_bounds = array<i64: 16, 16>}]} {
    %c0 = arith.constant 0 : index
    %c0_0 = arith.constant 0 : index
    %0 = vector.load %arg1[%c0, %c0_0] : memref<16x128xf32, #tpu.memory_space<vmem>>, vector<16x128xf32>
    %1 = arith.truncf %0 : vector<16x128xf32> to vector<16x128xbf16>
    %c0_1 = arith.constant 0 : index
    %c0_2 = arith.constant 0 : index
    %2 = vector.load %arg2[%c0_1, %c0_2] : memref<128x16xbf16, #tpu.memory_space<vmem>>, vector<128x16xbf16>
    %cst = arith.constant dense<0.000000e+00> : vector<16x16xf32>
    %3 = tpu.matmul %1, %2, %cst {dimension_numbers = #tpu.dot_dimension_numbers<[1], [0], [0], [1], [0, 0, 1, 1], [], []>} : vector<16x128xbf16>, vector<128x16xbf16>, vector<16x16xf32> -> vector<16x16xf32>
    %c0_3 = arith.constant 0 : index
    %c0_4 = arith.constant 0 : index
    %4 = vector.load %arg3[%c0_3, %c0_4] : memref<1x16xf32, #tpu.memory_space<vmem>>, vector<1x16xf32>
    %5 = vector.broadcast %4 : vector<1x16xf32> to vector<16x16xf32>
    %6 = arith.addf %3, %5 : vector<16x16xf32>
    %c0_5 = arith.constant 0 : index
    %c0_6 = arith.constant 0 : index
    %7 = vector.load %arg4[%c0_5, %c0_6] : memref<16x16xf32, #tpu.memory_space<vmem>>, vector<16x16xf32>
    tpu.vector_store %arg4[%c0_5, %c0_6], %6 {strides = array<i32>} : memref<16x16xf32, #tpu.memory_space<vmem>>, vector<16x16xf32>,
    return
  }
  func.func @transform_0(%arg0: i32) -> (i32, i32) {
    %c0_i32 = arith.constant 0 : i32
    %c0_i32_0 = arith.constant 0 : i32
    return %arg0, %c0_i32 : i32, i32
  }
  func.func @transform_1(%arg0: i32) -> (i32, i32) {
    %c0_i32 = arith.constant 0 : i32
    %c0_i32_0 = arith.constant 0 : i32
    %c0_i32_1 = arith.constant 0 : i32
    return %c0_i32, %c0_i32_0 : i32, i32
  }
  func.func @transform_2(%arg0: i32) -> (i32, i32) {
    %c0_i32 = arith.constant 0 : i32
    %c0_i32_0 = arith.constant 0 : i32
    %c0_i32_1 = arith.constant 0 : i32
    return %c0_i32, %c0_i32_0 : i32, i32
  }
  func.func @transform_3(%arg0: i32) -> (i32, i32) {
    %c0_i32 = arith.constant 0 : i32
    %c0_i32_0 = arith.constant 0 : i32
    return %arg0, %c0_i32 : i32, i32
  }
}

</mosaic_0001>

<llo_original>
// kernel: vector_bert_forward.6
$region0: #{vector_bert_forward.6}
  #allocation0 [shape = 'u32[]', space=smem, size = 0x4, offset = 0x4, fixed_abs, tag = 'smem constant byte address 0x4 - core index']
  #allocation1 [shape = 'u32[144,128]{1,0:T(1,128)}', space=vmem, size = 0x12000, scoped, tag = 'internal scratch']
  %s0 = inlined_call_operand.vmem [shape: f32[16,16], index: 0, kind: input, shape index: {}]
  %s1 = inlined_call_operand.hbm [shape: bf16[16,128], index: 1, kind: input, shape index: {}]
  %s2 = inlined_call_operand.hbm [shape: f32[1,128], index: 2, kind: input, shape index: {}]
  %s3 = inlined_call_operand.vmem [shape: f32[8,128], index: 3, kind: input, shape index: {}]
  %s4 = inlined_call_operand.hbm [shape: f32[1,128], index: 4, kind: input, shape index: {}]
  %s5 = inlined_call_operand.hbm [shape: f32[1,128], index: 5, kind: input, shape index: {}]
  %s6 = inlined_call_operand.vmem [shape: f32[16,128], index: 6, kind: output, shape index: {}]
  %s7 = sld [smem:[#allocation0]]
  $region73: #{vector_bert_forward.6} parent=0
    _
  %s9 = ssub.s32 1, %s7
  %s10 = scalar_select 0, %s9, %s7
  $region1: #{vector_bert_forward.6} parent=0
    #allocation2 [shape = 'u8[4096]{0}', space=vmem, size = 0x1000, scoped, tag = 'input window, operand 1, single buffered']
    #allocation3 [shape = 's32[2]{0}', space=sflag, size = 0x8, scoped, tag = 'scoped memory for vector_bert_forward.6']
    #allocation4 [shape = 'u8[512]{0}', space=vmem, size = 0x400, scoped, tag = 'input window, operand 2, single buffered']
    #allocation5 [shape = 's32[1]{0}', space=sflag, size = 0x4, scoped, tag = 'scoped memory for vector_bert_forward.6']
    #allocation6 [shape = 'u8[512]{0}', space=vmem, size = 0x400, scoped, tag = 'input window, operand 4, single buffered']
    #allocation7 [shape = 'u8[512]{0}', space=vmem, size = 0x400, scoped, tag = 'input window, operand 5, single buffered']
    #allocation8 [shape = 's32[1]{0}', space=sflag, size = 0x4, scoped, tag = 'scoped memory for vector_bert_forward.6']
    %11 = vsyncpa [#allocation3], 0
    %12 = vsyncpa [#allocation5], 0
    %13 = vsyncpa [#allocation8], 0
    loop: start=0, step=1, limit=4
    $region2: #{vector_bert_forward.6} parent=1 // loop_pre_header
      _
    $region3: #{vector_bert_forward.6} parent=1 // loop_header
      %s15 = sphi 0, %s19
      %p16 = scmp.ge.s32.totalorder %s15, 4
      %s25 = sphi 0, %s27
      %s28 = sphi 0, %s25
      %s29 = sphi 0, %s28
      %s45 = sphi 0, %s29
      %s49 = sphi 0, %s49
      %s51 = sphi 0, %s49
      %s52 = sphi 0, %s51
      %s66 = sphi 0, %s52
      %s70 = sphi 0, %s70
      %s72 = sphi 0, %s70
      %s73 = sphi 0, %s72
      %s87 = sphi 0, %s73
      %s91 = sphi 0, %s91
      %s93 = sphi 0, %s91
      %s94 = sphi 0, %s93
      %s108 = sphi 0, %s94
      %s112 = sphi 0, %s112
      %s114 = sphi 0, %s112
      %s115 = sphi 0, %s114
      %s129 = sphi 0, %s115
      %s133 = sphi 0, %s133
      %s135 = sphi 0, %s133
      %s136 = sphi 0, %s135
      %s150 = sphi 0, %s136
      %s156 = sphi 0, %s158
      %s159 = sphi 0, %s156
      %s160 = sphi 0, %s159
      %s176 = sphi 0, %s160
    $region4: #{vector_bert_forward.6} parent=1 // loop_header_branch
      %18 = sbr.rel (%p16) target = $region8
    $region5: #{vector_bert_forward.6} parent=1 // loop_body
      %s20 = ssub.s32 %s15, 1
      %s21 = ssub.s32 %s15, 2
      %s22 = sadd.s32 %s15, 1
      %s23 = ssub.s32 %s15, %s22
      %p24 = scmp.eq.s32.totalorder %s23, 0
      %s26 = sadd.s32 %s25, 1
      %s27 = scalar_select %p24, %s25, %s26
      %p30 = pneg %p24
      %p31 = scmp.eq.s32.totalorder %s15, 1
      %p32 = por %p30, %p31
      %p33 = scmp.ne.s32.totalorder %s25, %s28
      %p34 = scmp.eq.s32.totalorder %s15, 0
      %p35 = por %p33, %p34
      %p36 = scmp.ne.s32.totalorder %s25, %s28
      %p37 = scmp.eq.s32.totalorder %s20, 1
      %p38 = por %p36, %p37
      %p39 = scmp.ne.s32.totalorder %s28, %s29
      %p40 = scmp.eq.s32.totalorder %s20, 0
      %p41 = por %p39, %p40
      %p42 = scmp.ne.s32.totalorder %s28, %s29
      %p43 = scmp.eq.s32.totalorder %s21, 1
      %p44 = por %p42, %p43
      %p46 = scmp.ne.s32.totalorder %s29, %s45
      %p47 = scmp.eq.s32.totalorder %s21, 0
      %p48 = por %p46, %p47
      %s50 = sadd.s32 %s49, 1
      %p53 = scmp.eq.s32.totalorder %s15, 1
      %p54 = scmp.ne.s32.totalorder %s49, %s51
      %p55 = scmp.eq.s32.totalorder %s15, 0
      %p56 = por %p54, %p55
      %p57 = scmp.ne.s32.totalorder %s49, %s51
      %p58 = scmp.eq.s32.totalorder %s20, 1
      %p59 = por %p57, %p58
      %p60 = scmp.ne.s32.totalorder %s51, %s52
      %p61 = scmp.eq.s32.totalorder %s20, 0
      %p62 = por %p60, %p61
      %p63 = scmp.ne.s32.totalorder %s51, %s52
      %p64 = scmp.eq.s32.totalorder %s21, 1
      %p65 = por %p63, %p64
      %p67 = scmp.ne.s32.totalorder %s52, %s66
      %p68 = scmp.eq.s32.totalorder %s21, 0
      %p69 = por %p67, %p68
      %s71 = sadd.s32 %s70, 1
      %p74 = scmp.eq.s32.totalorder %s15, 1
      %p75 = scmp.ne.s32.totalorder %s70, %s72
      %p76 = scmp.eq.s32.totalorder %s15, 0
      %p77 = por %p75, %p76
      %p78 = scmp.ne.s32.totalorder %s70, %s72
      %p79 = scmp.eq.s32.totalorder %s20, 1
      %p80 = por %p78, %p79
      %p81 = scmp.ne.s32.totalorder %s72, %s73
      %p82 = scmp.eq.s32.totalorder %s20, 0
      %p83 = por %p81, %p82
      %p84 = scmp.ne.s32.totalorder %s72, %s73
      %p85 = scmp.eq.s32.totalorder %s21, 1
      %p86 = por %p84, %p85
      %p88 = scmp.ne.s32.totalorder %s73, %s87
      %p89 = scmp.eq.s32.totalorder %s21, 0
      %p90 = por %p88, %p89
      %s92 = sadd.s32 %s91, 1
      %p95 = scmp.eq.s32.totalorder %s15, 1
      %p96 = scmp.ne.s32.totalorder %s91, %s93
      %p97 = scmp.eq.s32.totalorder %s15, 0
      %p98 = por %p96, %p97
      %p99 = scmp.ne.s32.totalorder %s91, %s93
      %p100 = scmp.eq.s32.totalorder %s20, 1
      %p101 = por %p99, %p100
      %p102 = scmp.ne.s32.totalorder %s93, %s94
      %p103 = scmp.eq.s32.totalorder %s20, 0
      %p104 = por %p102, %p103
      %p105 = scmp.ne.s32.totalorder %s93, %s94
      %p106 = scmp.eq.s32.totalorder %s21, 1
      %p107 = por %p105, %p106
      %p109 = scmp.ne.s32.totalorder %s94, %s108
      %p110 = scmp.eq.s32.totalorder %s21, 0
      %p111 = por %p109, %p110
      %s113 = sadd.s32 %s112, 1
      %p116 = scmp.eq.s32.totalorder %s15, 1
      %p117 = scmp.ne.s32.totalorder %s112, %s114
      %p118 = scmp.eq.s32.totalorder %s15, 0
      %p119 = por %p117, %p118
      %p120 = scmp.ne.s32.totalorder %s112, %s114
      %p121 = scmp.eq.s32.totalorder %s20, 1
      %p122 = por %p120, %p121
      %p123 = scmp.ne.s32.totalorder %s114, %s115
      %p124 = scmp.eq.s32.totalorder %s20, 0
      %p125 = por %p123, %p124
      %p126 = scmp.ne.s32.totalorder %s114, %s115
      %p127 = scmp.eq.s32.totalorder %s21, 1
      %p128 = por %p126, %p127
      %p130 = scmp.ne.s32.totalorder %s115, %s129
      %p131 = scmp.eq.s32.totalorder %s21, 0
      %p132 = por %p130, %p131
      %s134 = sadd.s32 %s133, 1
      %p137 = scmp.eq.s32.totalorder %s15, 1
      %p138 = scmp.ne.s32.totalorder %s133, %s135
      %p139 = scmp.eq.s32.totalorder %s15, 0
      %p140 = por %p138, %p139
      %p141 = scmp.ne.s32.totalorder %s133, %s135
      %p142 = scmp.eq.s32.totalorder %s20, 1
      %p143 = por %p141, %p142
      %p144 = scmp.ne.s32.totalorder %s135, %s136
      %p145 = scmp.eq.s32.totalorder %s20, 0
      %p146 = por %p144, %p145
      %p147 = scmp.ne.s32.totalorder %s135, %s136
      %p148 = scmp.eq.s32.totalorder %s21, 1
      %p149 = por %p147, %p148
      %p151 = scmp.ne.s32.totalorder %s136, %s150
      %p152 = scmp.eq.s32.totalorder %s21, 0
      %p153 = por %p151, %p152
      %s154 = ssub.s32 %s15, %s22
      %p155 = scmp.eq.s32.totalorder %s154, 0
      %s157 = sadd.s32 %s156, 1
      %s158 = scalar_select %p155, %s156, %s157
      %p161 = pneg %p155
      %p162 = scmp.eq.s32.totalorder %s15, 1
      %p163 = por %p161, %p162
      %p164 = scmp.ne.s32.totalorder %s156, %s159
      %p165 = scmp.eq.s32.totalorder %s15, 0
      %p166 = por %p164, %p165
      %p167 = scmp.ne.s32.totalorder %s156, %s159
      %p168 = scmp.eq.s32.totalorder %s20, 1
      %p169 = por %p167, %p168
      %p170 = scmp.ne.s32.totalorder %s159, %s160
      %p171 = scmp.eq.s32.totalorder %s20, 0
      %p172 = por %p170, %p171
      %p173 = scmp.ne.s32.totalorder %s159, %s160
      %p174 = scmp.eq.s32.totalorder %s21, 1
      %p175 = por %p173, %p174
      %p177 = scmp.ne.s32.totalorder %s160, %s176
      %p178 = scmp.eq.s32.totalorder %s21, 0
      %p179 = por %p177, %p178
      %p180 = scmp.le.s32.totalorder 1, %s15
      %p181 = scmp.lt.s32.totalorder %s15, 3
      %p182 = pnand %p180, %p181
      %p183 = pneg %p182
      // Predicated region
      $region9: #{vector_bert_forward.6} parent=5 // pred_check
        _
      $region10: #{vector_bert_forward.6} parent=5 // pred_check_branch
        %185 = sbr.rel (%p182) target = $region12
      $region11: #{vector_bert_forward.6} parent=5 // pred_region
        %s186 = ssub.s32 %s15, 1
        // Predicated region
        $region13: #{vector_bert_forward.6} parent=11 // pred_check
          %p187 = pneg %p62
        $region14: #{vector_bert_forward.6} parent=11 // pred_check_branch
          %189 = sbr.rel (%p187) target = $region16
        $region15: #{vector_bert_forward.6} parent=11 // pred_region
          %s191 = ssub.s32 128, 128
          %192 = vsyncadd [#allocation3], %s191
          %s193 = sshll.u32 [#allocation2], 4
          %s194 = int_to_ptr.vmem [resolvable:$true] %s193
          %199 = dma.hbm_to_vmem [thread:$0]  %s1, 128, %s194, [#allocation3], 64, 64, 4
        $region16: #{vector_bert_forward.6} parent=11 // pred_fallthru
          _
        // Predicated region
        $region17: #{vector_bert_forward.6} parent=11 // pred_check
          %p200 = pneg %p83
        $region18: #{vector_bert_forward.6} parent=11 // pred_check_branch
          %202 = sbr.rel (%p200) target = $region20
        $region19: #{vector_bert_forward.6} parent=11 // pred_region
          %s204 = ssub.s32 16, 16
          %205 = vsyncadd [#allocation5], %s204
          %s207 = sshll.u32 [#allocation4], 4
          %s208 = int_to_ptr.vmem [resolvable:$true] %s207
          %210 = dma.hbm_to_vmem [thread:$0]  %s2, 16, %s208, [#allocation5]
        $region20: #{vector_bert_forward.6} parent=11 // pred_fallthru
          _
        // Predicated region
        $region21: #{vector_bert_forward.6} parent=11 // pred_check
          %p211 = pneg %p104
        $region22: #{vector_bert_forward.6} parent=11 // pred_check_branch
          %213 = sbr.rel (%p211) target = $region24
        $region23: #{vector_bert_forward.6} parent=11 // pred_region
          _
        $region24: #{vector_bert_forward.6} parent=11 // pred_fallthru
          _
        // Predicated region
        $region25: #{vector_bert_forward.6} parent=11 // pred_check
          %p214 = pneg %p125
        $region26: #{vector_bert_forward.6} parent=11 // pred_check_branch
          %216 = sbr.rel (%p214) target = $region28
        $region27: #{vector_bert_forward.6} parent=11 // pred_region
          %s218 = ssub.s32 16, 16
          %219 = vsyncadd [#allocation5], %s218
          %s221 = sshll.u32 [#allocation6], 4
          %s222 = int_to_ptr.vmem [resolvable:$true] %s221
          %224 = dma.hbm_to_vmem [thread:$0]  %s4, 16, %s222, [#allocation5]
        $region28: #{vector_bert_forward.6} parent=11 // pred_fallthru
          _
        // Predicated region
        $region29: #{vector_bert_forward.6} parent=11 // pred_check
          %p225 = pneg %p146
        $region30: #{vector_bert_forward.6} parent=11 // pred_check_branch
          %227 = sbr.rel (%p225) target = $region32
        $region31: #{vector_bert_forward.6} parent=11 // pred_region
          %s229 = ssub.s32 16, 16
          %230 = vsyncadd [#allocation8], %s229
          %s232 = sshll.u32 [#allocation7], 4
          %s233 = int_to_ptr.vmem [resolvable:$true] %s232
          %235 = dma.hbm_to_vmem [thread:$0]  %s5, 16, %s233, [#allocation8]
        $region32: #{vector_bert_forward.6} parent=11 // pred_fallthru
          _
      $region12: #{vector_bert_forward.6} parent=5 // pred_fallthru
        _
      %p236 = scmp.lt.s32.totalorder %s15, 2
      // Predicated region
      $region33: #{vector_bert_forward.6} parent=5 // pred_check
        %p237 = pneg %p236
      $region34: #{vector_bert_forward.6} parent=5 // pred_check_branch
        %239 = sbr.rel (%p237) target = $region36
      $region35: #{vector_bert_forward.6} parent=5 // pred_region
        // Predicated region
        $region37: #{vector_bert_forward.6} parent=35 // pred_check
          %p240 = pneg %p35
        $region38: #{vector_bert_forward.6} parent=35 // pred_check_branch
          %242 = sbr.rel (%p240) target = $region40
        $region39: #{vector_bert_forward.6} parent=35 // pred_region
          %p243 = scmp.lt.s32.totalorder %s15, 1
          %s244 = scalar_select %p243, %s15, 1
          %s245 = smul.addr %s244, 8
          %s246 = scalar_lea.vmem %s0, %s245
        $region40: #{vector_bert_forward.6} parent=35 // pred_fallthru
          _
      $region36: #{vector_bert_forward.6} parent=5 // pred_fallthru
        _
      %p247 = scmp.le.s32.totalorder 1, %s15
      %p248 = scmp.lt.s32.totalorder %s15, 3
      %p249 = pnand %p247, %p248
      %p250 = pneg %p249
      // Predicated region
      $region41: #{vector_bert_forward.6} parent=5 // pred_check
        _
      $region42: #{vector_bert_forward.6} parent=5 // pred_check_branch
        %252 = sbr.rel (%p249) target = $region44
      $region43: #{vector_bert_forward.6} parent=5 // pred_region
        %s253 = ssub.s32 %s15, 1
        // Predicated region
        $region45: #{vector_bert_forward.6} parent=43 // pred_check
          %p254 = pneg %p62
        $region46: #{vector_bert_forward.6} parent=43 // pred_check_branch
          %256 = sbr.rel (%p254) target = $region48
        $region47: #{vector_bert_forward.6} parent=43 // pred_region
          %257 = dma.done [#allocation3], 128
        $region48: #{vector_bert_forward.6} parent=43 // pred_fallthru
          _
        // Predicated region
        $region49: #{vector_bert_forward.6} parent=43 // pred_check
          %p258 = pneg %p83
        $region50: #{vector_bert_forward.6} parent=43 // pred_check_branch
          %260 = sbr.rel (%p258) target = $region52
        $region51: #{vector_bert_forward.6} parent=43 // pred_region
          %261 = dma.done [#allocation5], 16
        $region52: #{vector_bert_forward.6} parent=43 // pred_fallthru
          _
        // Predicated region
        $region53: #{vector_bert_forward.6} parent=43 // pred_check
          %p262 = pneg %p125
        $region54: #{vector_bert_forward.6} parent=43 // pred_check_branch
          %264 = sbr.rel (%p262) target = $region56
        $region55: #{vector_bert_forward.6} parent=43 // pred_region
          %265 = dma.done [#allocation5], 16
        $region56: #{vector_bert_forward.6} parent=43 // pred_fallthru
          _
        // Predicated region
        $region57: #{vector_bert_forward.6} parent=43 // pred_check
          %p266 = pneg %p146
        $region58: #{vector_bert_forward.6} parent=43 // pred_check_branch
          %268 = sbr.rel (%p266) target = $region60
        $region59: #{vector_bert_forward.6} parent=43 // pred_region
          %269 = dma.done [#allocation8], 16
        $region60: #{vector_bert_forward.6} parent=43 // pred_fallthru
          _
        %p270 = scmp.lt.s32.totalorder %s20, 1
        %s271 = scalar_select %p270, %s20, 1
        %s272 = smul.addr %s271, 8
        %s273 = scalar_lea.vmem %s0, %s272
        %p274 = pneg %p41
        %p275 = pneg %p38
        %p276 = pneg %p62
        %p277 = pneg %p59
        %p278 = pneg %p83
        %p279 = pneg %p80
        %p280 = pneg %p104
        %p281 = pneg %p101
        %p282 = pneg %p125
        %p283 = pneg %p122
        %p284 = pneg %p146
        %p285 = pneg %p143
        %p286 = pneg %p172
        %p287 = pneg %p169
        %p288 = scmp.lt.s32.totalorder %s20, 1
        %s289 = scalar_select %p288, %s20, 1
        %s290 = smul.addr %s289, 8
        %s291 = scalar_lea.vmem %s6, %s290
        %p292 = scmp.lt.s32.totalorder %s20, 1
        %s293 = scalar_select %p292, %s20, 1
        %s294 = smul.addr %s293, 8
        %s295 = scalar_lea.vmem %s0, %s294
        %p296 = scmp.lt.s32.totalorder %s20, 1
        %s297 = scalar_select %p296, %s20, 1
        %s298 = smul.addr %s297, 8
        %s299 = scalar_lea.vmem %s6, %s298
        %v301 = vld [vmem:[%s295] sm:$0xff]
        %v302 = vpack.c.bf16 %v301, %v301
        %v303 = vld [vmem:[#allocation2] sm:$0xf]
        %v304 = vld [vmem:[#allocation2 + $0x4] sm:$0xf]
        %v305 = vld [vmem:[#allocation4] sm:$0x1]
        %v307 = vlaneseq
        %v308 = vshrl.u32 %v307, 7
        %v309 = vsub.s32 0, %v308
        %v310 = vrot.slane %v305, %v309
        %v314 = vunpack.c.l.b16 %v303
        %v315 = vunpack.c.l.b16 %v304
        %v316 = vpack.c.b16 %v315, %v314
        %vm318 = vcmask 130048
        %v320 = vsel %vm318, %v302, 0
        %322 = vmatprep.subr.bf16.mxu0 0
        %323 = vmatpush1.bf16.msra.mxu0 0
        %324 = vmatprep.subr.bf16.mxu0 0
        %325 = vmatpush1.bf16.msra.mxu0 0
        %326 = vmatprep.subr.bf16.mxu0 0
        %327 = vmatpush1.bf16.msra.mxu0 0
        %328 = vmatprep.subr.bf16.mxu0 0
        %329 = vmatpush1.bf16.msra.mxu0 0
        %330 = vmatprep.subr.bf16.mxu0 0
        %331 = vmatpush1.bf16.msra.mxu0 0
        %332 = vmatprep.subr.bf16.mxu0 0
        %333 = vmatpush1.bf16.msra.mxu0 0
        %334 = vmatprep.subr.bf16.mxu0 0
        %335 = vmatpush1.bf16.msra.mxu0 0
        %336 = vmatprep.subr.bf16.mxu0 0
        %337 = vmatpush1.bf16.msra.mxu0 %v316
        %338 = vmatprep.subr.bf16.mxu0 0
        %339 = vmatpush2.bf16.msra.mxu0 0
        %340 = vmatprep.subr.bf16.mxu0 0
        %341 = vmatpush2.bf16.msra.mxu0 0
        %342 = vmatprep.subr.bf16.mxu0 0
        %343 = vmatpush2.bf16.msra.mxu0 0
        %344 = vmatprep.subr.bf16.mxu0 0
        %345 = vmatpush2.bf16.msra.mxu0 0
        %346 = vmatprep.subr.bf16.mxu0 0
        %347 = vmatpush2.bf16.msra.mxu0 0
        %348 = vmatprep.subr.bf16.mxu0 0
        %349 = vmatpush2.bf16.msra.mxu0 0
        %350 = vmatprep.subr.bf16.mxu0 0
        %351 = vmatpush2.bf16.msra.mxu0 0
        %352 = vmatprep.subr.bf16.mxu0 0
        %353 = vmatpush2.bf16.msra.mxu0 0
        %354 = vmatprep.mubr.bf16.mxu0 0
        %355 = vmatmul.mubr.bf16.gmra.mxu0 %v320
        %v356 = vpop.f32.mrf.mxu0
        %v357 = vadd.f32 %v310, %v356
        %v358 = vpop.f32.mrf.mxu0
        %v359 = vpop.f32.mrf.mxu0
        %v360 = vpop.f32.mrf.mxu0
        %361 = vdwg.mxu0
        %v362 = vld [vmem:[%s3] sm:$0xff]
        %v363 = vadd.f32 %v357, %v362
        %v364 = vld [vmem:[#allocation6] sm:$0x1]
        %v365 = vld [vmem:[#allocation7] sm:$0x1]
        %366 = vadd.xlane.f32.xlu0 %v363
        %v367 = vpop.xlane.xlu0 %366
        %v368 = vrcp.pop 128.0
        %v369 = vmul.f32 %v367, %v368
        %v370 = vsub.f32 %v363, %v369
        %v371 = vmul.f32 %v370, %v370
        %372 = vadd.xlane.f32.xlu0 %v371
        %v373 = vpop.xlane.xlu0 %372
        %v374 = vmul.f32 %v373, %v368
        %v375 = vadd.f32 %v374, 1e-12
        %v376 = vrsqrt.pop %v375
        %v377 = vmul.f32 %v370, %v376
        %v379 = vlaneseq
        %v380 = vshrl.u32 %v379, 7
        %v381 = vsub.s32 0, %v380
        %v382 = vrot.slane %v364, %v381
        %v384 = vmul.f32 %v377, %v382
        %v386 = vlaneseq
        %v387 = vshrl.u32 %v386, 7
        %v388 = vsub.s32 0, %v387
        %v389 = vrot.slane %v365, %v388
        %v391 = vadd.f32 %v384, %v389
        %392 = vst [vmem:[%s299] sm:$0xff] %v391
        %p393 = scmp.lt.s32.totalorder %s20, 1
        %s394 = scalar_select %p393, %s20, 1
        %s395 = smul.addr %s394, 8
        %s396 = scalar_lea.vmem %s6, %s395
        // Predicated region
        $region61: #{vector_bert_forward.6} parent=43 // pred_check
          %p397 = pneg %p169
        $region62: #{vector_bert_forward.6} parent=43 // pred_check_branch
          %399 = sbr.rel (%p397) target = $region64
        $region63: #{vector_bert_forward.6} parent=43 // pred_region
          _
        $region64: #{vector_bert_forward.6} parent=43 // pred_fallthru
          _
      $region44: #{vector_bert_forward.6} parent=5 // pred_fallthru
        _
      %p400 = scmp.le.s32.totalorder 2, %s15
      // Predicated region
      $region65: #{vector_bert_forward.6} parent=5 // pred_check
        %p401 = pneg %p400
      $region66: #{vector_bert_forward.6} parent=5 // pred_check_branch
        %403 = sbr.rel (%p401) target = $region68
      $region67: #{vector_bert_forward.6} parent=5 // pred_region
        %s404 = ssub.s32 %s15, 2
        // Predicated region
        $region69: #{vector_bert_forward.6} parent=67 // pred_check
          %p405 = pneg %p175
        $region70: #{vector_bert_forward.6} parent=67 // pred_check_branch
          %407 = sbr.rel (%p405) target = $region72
        $region71: #{vector_bert_forward.6} parent=67 // pred_region
          %p408 = scmp.lt.s32.totalorder %s21, 1
          %s409 = scalar_select %p408, %s21, 1
          %s410 = smul.addr %s409, 8
          %s411 = scalar_lea.vmem %s6, %s410
        $region72: #{vector_bert_forward.6} parent=67 // pred_fallthru
          _
      $region68: #{vector_bert_forward.6} parent=5 // pred_fallthru
        _
    $region6: #{vector_bert_forward.6} parent=1 // loop_footer
      %s19 = sadd.s32 1, %s15
    $region7: #{vector_bert_forward.6} parent=1 // loop_footer_branch
      %14 = sbr.rel target = $region3
    $region8: #{vector_bert_forward.6} parent=1 // loop_exit
      _
    %412 = vsyncpa [#allocation3], 1
    %s413 = scalar_lea.sflag [#allocation3], 1
    %414 = vsyncpa %s413, 1
    %415 = vsyncpa [#allocation5], 1
    %416 = vsyncpa [#allocation8], 1

// kernel: vector_bert_forward.7
$region0: #{vector_bert_forward.7}
  #allocation0 [shape = 'u32[]', space=smem, size = 0x4, offset = 0x4, fixed_abs, tag = 'smem constant byte address 0x4 - core index']
  #allocation1 [shape = 'u32[144,128]{1,0:T(1,128)}', space=vmem, size = 0x12000, scoped, tag = 'internal scratch']
  %s0 = inlined_call_operand.vmem [shape: f32[16,128], index: 0, kind: input, shape index: {}]
  %s1 = inlined_call_operand.hbm [shape: bf16[128,384], index: 1, kind: input, shape index: {}]
  %s2 = inlined_call_operand.vmem [shape: f32[1,384], index: 2, kind: input, shape index: {}]
  %s3 = inlined_call_operand.hbm [shape: bf16[128,128], index: 3, kind: input, shape index: {}]
  %s4 = inlined_call_operand.hbm [shape: f32[1,128], index: 4, kind: input, shape index: {}]
  %s5 = inlined_call_operand.vmem [shape: f32[1,128], index: 5, kind: input, shape index: {}]
  %s6 = inlined_call_operand.vmem [shape: f32[1,128], index: 6, kind: input, shape index: {}]
  %s7 = inlined_call_operand.vmem [shape: f32[16,128], index: 7, kind: output, shape index: {}]
  %s8 = sld [smem:[#allocation0]]
  $region73: #{vector_bert_forward.7} parent=0
    _
  %s10 = ssub.s32 1, %s8
  %s11 = scalar_select 0, %s10, %s8
  $region1: #{vector_bert_forward.7} parent=0
    #allocation2 [shape = 'u8[98304]{0}', space=vmem, size = 0x18000, scoped, tag = 'input window, operand 1, single buffered']
    #allocation3 [shape = 's32[2]{0}', space=sflag, size = 0x8, scoped, tag = 'scoped memory for vector_bert_forward.7']
    #allocation4 [shape = 'u8[32768]{0}', space=vmem, size = 0x8000, scoped, tag = 'input window, operand 3, single buffered']
    #allocation5 [shape = 's32[1]{0}', space=sflag, size = 0x4, scoped, tag = 'scoped memory for vector_bert_forward.7']
    #allocation6 [shape = 'u8[512]{0}', space=vmem, size = 0x400, scoped, tag = 'input window, operand 4, single buffered']
    %12 = vsyncpa [#allocation3], 0
    %13 = vsyncpa [#allocation5], 0
    loop: start=0, step=1, limit=4
    $region2: #{vector_bert_forward.7} parent=1 // loop_pre_header
      _
    $region3: #{vector_bert_forward.7} parent=1 // loop_header
      %s15 = sphi 0, %s19
      %p16 = scmp.ge.s32.totalorder %s15, 4
      %s25 = sphi 0, %s27
      %s28 = sphi 0, %s25
      %s29 = sphi 0, %s28
      %s45 = sphi 0, %s29
      %s49 = sphi 0, %s49
      %s51 = sphi 0, %s49
      %s52 = sphi 0, %s51
      %s66 = sphi 0, %s52
      %s70 = sphi 0, %s70
      %s72 = sphi 0, %s70
      %s73 = sphi 0, %s72
      %s87 = sphi 0, %s73
      %s91 = sphi 0, %s91
      %s93 = sphi 0, %s91
      %s94 = sphi 0, %s93
      %s108 = sphi 0, %s94
      %s112 = sphi 0, %s112
      %s114 = sphi 0, %s112
      %s115 = sphi 0, %s114
      %s129 = sphi 0, %s115
      %s133 = sphi 0, %s133
      %s135 = sphi 0, %s133
      %s136 = sphi 0, %s135
      %s150 = sphi 0, %s136
      %s154 = sphi 0, %s154
      %s156 = sphi 0, %s154
      %s157 = sphi 0, %s156
      %s171 = sphi 0, %s157
      %s177 = sphi 0, %s179
      %s180 = sphi 0, %s177
      %s181 = sphi 0, %s180
      %s197 = sphi 0, %s181
    $region4: #{vector_bert_forward.7} parent=1 // loop_header_branch
      %18 = sbr.rel (%p16) target = $region8
    $region5: #{vector_bert_forward.7} parent=1 // loop_body
      %s20 = ssub.s32 %s15, 1
      %s21 = ssub.s32 %s15, 2
      %s22 = sadd.s32 %s15, 1
      %s23 = ssub.s32 %s15, %s22
      %p24 = scmp.eq.s32.totalorder %s23, 0
      %s26 = sadd.s32 %s25, 1
      %s27 = scalar_select %p24, %s25, %s26
      %p30 = pneg %p24
      %p31 = scmp.eq.s32.totalorder %s15, 1
      %p32 = por %p30, %p31
      %p33 = scmp.ne.s32.totalorder %s25, %s28
      %p34 = scmp.eq.s32.totalorder %s15, 0
      %p35 = por %p33, %p34
      %p36 = scmp.ne.s32.totalorder %s25, %s28
      %p37 = scmp.eq.s32.totalorder %s20, 1
      %p38 = por %p36, %p37
      %p39 = scmp.ne.s32.totalorder %s28, %s29
      %p40 = scmp.eq.s32.totalorder %s20, 0
      %p41 = por %p39, %p40
      %p42 = scmp.ne.s32.totalorder %s28, %s29
      %p43 = scmp.eq.s32.totalorder %s21, 1
      %p44 = por %p42, %p43
      %p46 = scmp.ne.s32.totalorder %s29, %s45
      %p47 = scmp.eq.s32.totalorder %s21, 0
      %p48 = por %p46, %p47
      %s50 = sadd.s32 %s49, 1
      %p53 = scmp.eq.s32.totalorder %s15, 1
      %p54 = scmp.ne.s32.totalorder %s49, %s51
      %p55 = scmp.eq.s32.totalorder %s15, 0
      %p56 = por %p54, %p55
      %p57 = scmp.ne.s32.totalorder %s49, %s51
      %p58 = scmp.eq.s32.totalorder %s20, 1
      %p59 = por %p57, %p58
      %p60 = scmp.ne.s32.totalorder %s51, %s52
      %p61 = scmp.eq.s32.totalorder %s20, 0
      %p62 = por %p60, %p61
      %p63 = scmp.ne.s32.totalorder %s51, %s52
      %p64 = scmp.eq.s32.totalorder %s21, 1
      %p65 = por %p63, %p64
      %p67 = scmp.ne.s32.totalorder %s52, %s66
      %p68 = scmp.eq.s32.totalorder %s21, 0
      %p69 = por %p67, %p68
      %s71 = sadd.s32 %s70, 1
      %p74 = scmp.eq.s32.totalorder %s15, 1
      %p75 = scmp.ne.s32.totalorder %s70, %s72
      %p76 = scmp.eq.s32.totalorder %s15, 0
      %p77 = por %p75, %p76
      %p78 = scmp.ne.s32.totalorder %s70, %s72
      %p79 = scmp.eq.s32.totalorder %s20, 1
      %p80 = por %p78, %p79
      %p81 = scmp.ne.s32.totalorder %s72, %s73
      %p82 = scmp.eq.s32.totalorder %s20, 0
      %p83 = por %p81, %p82
      %p84 = scmp.ne.s32.totalorder %s72, %s73
      %p85 = scmp.eq.s32.totalorder %s21, 1
      %p86 = por %p84, %p85
      %p88 = scmp.ne.s32.totalorder %s73, %s87
      %p89 = scmp.eq.s32.totalorder %s21, 0
      %p90 = por %p88, %p89
      %s92 = sadd.s32 %s91, 1
      %p95 = scmp.eq.s32.totalorder %s15, 1
      %p96 = scmp.ne.s32.totalorder %s91, %s93
      %p97 = scmp.eq.s32.totalorder %s15, 0
      %p98 = por %p96, %p97
      %p99 = scmp.ne.s32.totalorder %s91, %s93
      %p100 = scmp.eq.s32.totalorder %s20, 1
      %p101 = por %p99, %p100
      %p102 = scmp.ne.s32.totalorder %s93, %s94
      %p103 = scmp.eq.s32.totalorder %s20, 0
      %p104 = por %p102, %p103
      %p105 = scmp.ne.s32.totalorder %s93, %s94
      %p106 = scmp.eq.s32.totalorder %s21, 1
      %p107 = por %p105, %p106
      %p109 = scmp.ne.s32.totalorder %s94, %s108
      %p110 = scmp.eq.s32.totalorder %s21, 0
      %p111 = por %p109, %p110
      %s113 = sadd.s32 %s112, 1
      %p116 = scmp.eq.s32.totalorder %s15, 1
      %p117 = scmp.ne.s32.totalorder %s112, %s114
      %p118 = scmp.eq.s32.totalorder %s15, 0
      %p119 = por %p117, %p118
      %p120 = scmp.ne.s32.totalorder %s112, %s114
      %p121 = scmp.eq.s32.totalorder %s20, 1
      %p122 = por %p120, %p121
      %p123 = scmp.ne.s32.totalorder %s114, %s115
      %p124 = scmp.eq.s32.totalorder %s20, 0
      %p125 = por %p123, %p124
      %p126 = scmp.ne.s32.totalorder %s114, %s115
      %p127 = scmp.eq.s32.totalorder %s21, 1
      %p128 = por %p126, %p127
      %p130 = scmp.ne.s32.totalorder %s115, %s129
      %p131 = scmp.eq.s32.totalorder %s21, 0
      %p132 = por %p130, %p131
      %s134 = sadd.s32 %s133, 1
      %p137 = scmp.eq.s32.totalorder %s15, 1
      %p138 = scmp.ne.s32.totalorder %s133, %s135
      %p139 = scmp.eq.s32.totalorder %s15, 0
      %p140 = por %p138, %p139
      %p141 = scmp.ne.s32.totalorder %s133, %s135
      %p142 = scmp.eq.s32.totalorder %s20, 1
      %p143 = por %p141, %p142
      %p144 = scmp.ne.s32.totalorder %s135, %s136
      %p145 = scmp.eq.s32.totalorder %s20, 0
      %p146 = por %p144, %p145
      %p147 = scmp.ne.s32.totalorder %s135, %s136
      %p148 = scmp.eq.s32.totalorder %s21, 1
      %p149 = por %p147, %p148
      %p151 = scmp.ne.s32.totalorder %s136, %s150
      %p152 = scmp.eq.s32.totalorder %s21, 0
      %p153 = por %p151, %p152
      %s155 = sadd.s32 %s154, 1
      %p158 = scmp.eq.s32.totalorder %s15, 1
      %p159 = scmp.ne.s32.totalorder %s154, %s156
      %p160 = scmp.eq.s32.totalorder %s15, 0
      %p161 = por %p159, %p160
      %p162 = scmp.ne.s32.totalorder %s154, %s156
      %p163 = scmp.eq.s32.totalorder %s20, 1
      %p164 = por %p162, %p163
      %p165 = scmp.ne.s32.totalorder %s156, %s157
      %p166 = scmp.eq.s32.totalorder %s20, 0
      %p167 = por %p165, %p166
      %p168 = scmp.ne.s32.totalorder %s156, %s157
      %p169 = scmp.eq.s32.totalorder %s21, 1
      %p170 = por %p168, %p169
      %p172 = scmp.ne.s32.totalorder %s157, %s171
      %p173 = scmp.eq.s32.totalorder %s21, 0
      %p174 = por %p172, %p173
      %s175 = ssub.s32 %s15, %s22
      %p176 = scmp.eq.s32.totalorder %s175, 0
      %s178 = sadd.s32 %s177, 1
      %s179 = scalar_select %p176, %s177, %s178
      %p182 = pneg %p176
      %p183 = scmp.eq.s32.totalorder %s15, 1
      %p184 = por %p182, %p183
      %p185 = scmp.ne.s32.totalorder %s177, %s180
      %p186 = scmp.eq.s32.totalorder %s15, 0
      %p187 = por %p185, %p186
      %p188 = scmp.ne.s32.totalorder %s177, %s180
      %p189 = scmp.eq.s32.totalorder %s20, 1
      %p190 = por %p188, %p189
      %p191 = scmp.ne.s32.totalorder %s180, %s181
      %p192 = scmp.eq.s32.totalorder %s20, 0
      %p193 = por %p191, %p192
      %p194 = scmp.ne.s32.totalorder %s180, %s181
      %p195 = scmp.eq.s32.totalorder %s21, 1
      %p196 = por %p194, %p195
      %p198 = scmp.ne.s32.totalorder %s181, %s197
      %p199 = scmp.eq.s32.totalorder %s21, 0
      %p200 = por %p198, %p199
      %p201 = scmp.le.s32.totalorder 1, %s15
      %p202 = scmp.lt.s32.totalorder %s15, 3
      %p203 = pnand %p201, %p202
      %p204 = pneg %p203
      // Predicated region
      $region9: #{vector_bert_forward.7} parent=5 // pred_check
        _
      $region10: #{vector_bert_forward.7} parent=5 // pred_check_branch
        %206 = sbr.rel (%p203) target = $region12
      $region11: #{vector_bert_forward.7} parent=5 // pred_region
        %s207 = ssub.s32 %s15, 1
        // Predicated region
        $region13: #{vector_bert_forward.7} parent=11 // pred_check
          %p208 = pneg %p62
        $region14: #{vector_bert_forward.7} parent=11 // pred_check_branch
          %210 = sbr.rel (%p208) target = $region16
        $region15: #{vector_bert_forward.7} parent=11 // pred_region
          %s212 = ssub.s32 3072, 3072
          %213 = vsyncadd [#allocation3], %s212
          %s214 = sshll.u32 [#allocation2], 4
          %s215 = int_to_ptr.vmem [resolvable:$true] %s214
          %220 = dma.hbm_to_vmem [thread:$0]  %s1, 3072, %s215, [#allocation3], 192, 192, 12
        $region16: #{vector_bert_forward.7} parent=11 // pred_fallthru
          _
        // Predicated region
        $region17: #{vector_bert_forward.7} parent=11 // pred_check
          %p221 = pneg %p83
        $region18: #{vector_bert_forward.7} parent=11 // pred_check_branch
          %223 = sbr.rel (%p221) target = $region20
        $region19: #{vector_bert_forward.7} parent=11 // pred_region
          _
        $region20: #{vector_bert_forward.7} parent=11 // pred_fallthru
          _
        // Predicated region
        $region21: #{vector_bert_forward.7} parent=11 // pred_check
          %p224 = pneg %p104
        $region22: #{vector_bert_forward.7} parent=11 // pred_check_branch
          %226 = sbr.rel (%p224) target = $region24
        $region23: #{vector_bert_forward.7} parent=11 // pred_region
          %s228 = ssub.s32 1024, 1024
          %229 = vsyncadd [#allocation5], %s228
          %s230 = sshll.u32 [#allocation4], 4
          %s231 = int_to_ptr.vmem [resolvable:$true] %s230
          %236 = dma.hbm_to_vmem [thread:$0]  %s3, 1024, %s231, [#allocation5], 64, 64, 4
        $region24: #{vector_bert_forward.7} parent=11 // pred_fallthru
          _
        // Predicated region
        $region25: #{vector_bert_forward.7} parent=11 // pred_check
          %p237 = pneg %p125
        $region26: #{vector_bert_forward.7} parent=11 // pred_check_branch
          %239 = sbr.rel (%p237) target = $region28
        $region27: #{vector_bert_forward.7} parent=11 // pred_region
          %s241 = ssub.s32 16, 16
          %242 = vsyncadd [#allocation5], %s241
          %s244 = sshll.u32 [#allocation6], 4
          %s245 = int_to_ptr.vmem [resolvable:$true] %s244
          %247 = dma.hbm_to_vmem [thread:$0]  %s4, 16, %s245, [#allocation5]
        $region28: #{vector_bert_forward.7} parent=11 // pred_fallthru
          _
        // Predicated region
        $region29: #{vector_bert_forward.7} parent=11 // pred_check
          %p248 = pneg %p146
        $region30: #{vector_bert_forward.7} parent=11 // pred_check_branch
          %250 = sbr.rel (%p248) target = $region32
        $region31: #{vector_bert_forward.7} parent=11 // pred_region
          _
        $region32: #{vector_bert_forward.7} parent=11 // pred_fallthru
          _
        // Predicated region
        $region33: #{vector_bert_forward.7} parent=11 // pred_check
          %p251 = pneg %p167
        $region34: #{vector_bert_forward.7} parent=11 // pred_check_branch
          %253 = sbr.rel (%p251) target = $region36
        $region35: #{vector_bert_forward.7} parent=11 // pred_region
          _
        $region36: #{vector_bert_forward.7} parent=11 // pred_fallthru
          _
      $region12: #{vector_bert_forward.7} parent=5 // pred_fallthru
        _
      %p254 = scmp.lt.s32.totalorder %s15, 2
      // Predicated region
      $region37: #{vector_bert_forward.7} parent=5 // pred_check
        %p255 = pneg %p254
      $region38: #{vector_bert_forward.7} parent=5 // pred_check_branch
        %257 = sbr.rel (%p255) target = $region40
      $region39: #{vector_bert_forward.7} parent=5 // pred_region
        // Predicated region
        $region41: #{vector_bert_forward.7} parent=39 // pred_check
          %p258 = pneg %p35
        $region42: #{vector_bert_forward.7} parent=39 // pred_check_branch
          %260 = sbr.rel (%p258) target = $region44
        $region43: #{vector_bert_forward.7} parent=39 // pred_region
          %p261 = scmp.lt.s32.totalorder %s15, 1
          %s262 = scalar_select %p261, %s15, 1
          %s263 = smul.addr %s262, 8
          %s264 = scalar_lea.vmem %s0, %s263
        $region44: #{vector_bert_forward.7} parent=39 // pred_fallthru
          _
      $region40: #{vector_bert_forward.7} parent=5 // pred_fallthru
        _
      %p265 = scmp.le.s32.totalorder 1, %s15
      %p266 = scmp.lt.s32.totalorder %s15, 3
      %p267 = pnand %p265, %p266
      %p268 = pneg %p267
      // Predicated region
      $region45: #{vector_bert_forward.7} parent=5 // pred_check
        _
      $region46: #{vector_bert_forward.7} parent=5 // pred_check_branch
        %270 = sbr.rel (%p267) target = $region48
      $region47: #{vector_bert_forward.7} parent=5 // pred_region
        %s271 = ssub.s32 %s15, 1
        // Predicated region
        $region49: #{vector_bert_forward.7} parent=47 // pred_check
          %p272 = pneg %p62
        $region50: #{vector_bert_forward.7} parent=47 // pred_check_branch
          %274 = sbr.rel (%p272) target = $region52
        $region51: #{vector_bert_forward.7} parent=47 // pred_region
          %275 = dma.done [#allocation3], 3072
        $region52: #{vector_bert_forward.7} parent=47 // pred_fallthru
          _
        // Predicated region
        $region53: #{vector_bert_forward.7} parent=47 // pred_check
          %p276 = pneg %p104
        $region54: #{vector_bert_forward.7} parent=47 // pred_check_branch
          %278 = sbr.rel (%p276) target = $region56
        $region55: #{vector_bert_forward.7} parent=47 // pred_region
          %279 = dma.done [#allocation5], 1024
        $region56: #{vector_bert_forward.7} parent=47 // pred_fallthru
          _
        // Predicated region
        $region57: #{vector_bert_forward.7} parent=47 // pred_check
          %p280 = pneg %p125
        $region58: #{vector_bert_forward.7} parent=47 // pred_check_branch
          %282 = sbr.rel (%p280) target = $region60
        $region59: #{vector_bert_forward.7} parent=47 // pred_region
          %283 = dma.done [#allocation5], 16
        $region60: #{vector_bert_forward.7} parent=47 // pred_fallthru
          _
        %p284 = scmp.lt.s32.totalorder %s20, 1
        %s285 = scalar_select %p284, %s20, 1
        %s286 = smul.addr %s285, 8
        %s287 = scalar_lea.vmem %s0, %s286
        %p288 = pneg %p41
        %p289 = pneg %p38
        %p290 = pneg %p62
        %p291 = pneg %p59
        %p292 = pneg %p83
        %p293 = pneg %p80
        %p294 = pneg %p104
        %p295 = pneg %p101
        %p296 = pneg %p125
        %p297 = pneg %p122
        %p298 = pneg %p146
        %p299 = pneg %p143
        %p300 = pneg %p167
        %p301 = pneg %p164
        %p302 = pneg %p193
        %p303 = pneg %p190
        %p304 = scmp.lt.s32.totalorder %s20, 1
        %s305 = scalar_select %p304, %s20, 1
        %s306 = smul.addr %s305, 8
        %s307 = scalar_lea.vmem %s7, %s306
        %p308 = scmp.lt.s32.totalorder %s20, 1
        %s309 = scalar_select %p308, %s20, 1
        %s310 = smul.addr %s309, 8
        %s311 = scalar_lea.vmem %s0, %s310
        %p312 = scmp.lt.s32.totalorder %s20, 1
        %s313 = scalar_select %p312, %s20, 1
        %s314 = smul.addr %s313, 8
        %s315 = scalar_lea.vmem %s7, %s314
        %v317 = vld [vmem:[%s311] sm:$0xff]
        %v318 = vpack.c.bf16 %v317, %v317
        %v319 = vld [vmem:[#allocation2] sm:$0xff]
        %v320 = vld [vmem:[#allocation2 + $0x8] sm:$0xf]
        %v321 = vld [vmem:[#allocation2 + $0xc] sm:$0xff]
        %v322 = vld [vmem:[#allocation2 + $0x14] sm:$0xf]
        %v323 = vld [vmem:[#allocation2 + $0x18] sm:$0xff]
        %v324 = vld [vmem:[#allocation2 + $0x20] sm:$0xf]
        %v325 = vld [vmem:[#allocation2 + $0x24] sm:$0xff]
        %v326 = vld [vmem:[#allocation2 + $0x2c] sm:$0xf]
        %v327 = vld [vmem:[#allocation2 + $0x30] sm:$0xff]
        %v328 = vld [vmem:[#allocation2 + $0x38] sm:$0xf]
        %v329 = vld [vmem:[#allocation2 + $0x3c] sm:$0xff]
        %v330 = vld [vmem:[#allocation2 + $0x44] sm:$0xf]
        %v331 = vld [vmem:[#allocation2 + $0x48] sm:$0xff]
        %v332 = vld [vmem:[#allocation2 + $0x50] sm:$0xf]
        %v333 = vld [vmem:[#allocation2 + $0x54] sm:$0xff]
        %v334 = vld [vmem:[#allocation2 + $0x5c] sm:$0xf]
        %v335 = vld [vmem:[#allocation2 + $0x60] sm:$0xff]
        %v336 = vld [vmem:[#allocation2 + $0x68] sm:$0xf]
        %v337 = vld [vmem:[#allocation2 + $0x6c] sm:$0xff]
        %v338 = vld [vmem:[#allocation2 + $0x74] sm:$0xf]
        %v339 = vld [vmem:[#allocation2 + $0x78] sm:$0xff]
        %v340 = vld [vmem:[#allocation2 + $0x80] sm:$0xf]
        %v341 = vld [vmem:[#allocation2 + $0x84] sm:$0xff]
        %v342 = vld [vmem:[#allocation2 + $0x8c] sm:$0xf]
        %v343 = vld [vmem:[#allocation2 + $0x90] sm:$0xff]
        %v344 = vld [vmem:[#allocation2 + $0x98] sm:$0xf]
        %v345 = vld [vmem:[#allocation2 + $0x9c] sm:$0xff]
        %v346 = vld [vmem:[#allocation2 + $0xa4] sm:$0xf]
        %v347 = vld [vmem:[#allocation2 + $0xa8] sm:$0xff]
        %v348 = vld [vmem:[#allocation2 + $0xb0] sm:$0xf]
        %v349 = vld [vmem:[#allocation2 + $0xb4] sm:$0xff]
        %v350 = vld [vmem:[#allocation2 + $0xbc] sm:$0xf]
        %v351 = vld [vmem:[%s2] sm:$0x7]
        %v353 = vlaneseq
        %v354 = vshrl.u32 %v353, 7
        %v355 = vsub.s32 0, %v354
        %v356 = vrot.slane %v351, %v355
        %v357 = vlaneseq
        %v358 = vshrl.u32 %v357, 7
        %v359 = vsub.s32 1, %v358
        %v360 = vrot.slane %v351, %v359
        %v361 = vlaneseq
        %v362 = vshrl.u32 %v361, 7
        %v363 = vsub.s32 2, %v362
        %v364 = vrot.slane %v351, %v363
        %v400 = vunpack.c.l.b16 %v319
        %v401 = vunpack.c.h.b16 %v319
        %v402 = vunpack.c.l.b16 %v320
        %v403 = vunpack.c.l.b16 %v321
        %v404 = vunpack.c.h.b16 %v321
        %v405 = vunpack.c.l.b16 %v322
        %v406 = vunpack.c.l.b16 %v323
        %v407 = vunpack.c.h.b16 %v323
        %v408 = vunpack.c.l.b16 %v324
        %v409 = vunpack.c.l.b16 %v325
        %v410 = vunpack.c.h.b16 %v325
        %v411 = vunpack.c.l.b16 %v326
        %v412 = vunpack.c.l.b16 %v327
        %v413 = vunpack.c.h.b16 %v327
        %v414 = vunpack.c.l.b16 %v328
        %v415 = vunpack.c.l.b16 %v329
        %v416 = vunpack.c.h.b16 %v329
        %v417 = vunpack.c.l.b16 %v330
        %v418 = vunpack.c.l.b16 %v331
        %v419 = vunpack.c.h.b16 %v331
        %v420 = vunpack.c.l.b16 %v332
        %v421 = vunpack.c.l.b16 %v333
        %v422 = vunpack.c.h.b16 %v333
        %v423 = vunpack.c.l.b16 %v334
        %v424 = vunpack.c.l.b16 %v335
        %v425 = vunpack.c.h.b16 %v335
        %v426 = vunpack.c.l.b16 %v336
        %v427 = vunpack.c.l.b16 %v337
        %v428 = vunpack.c.h.b16 %v337
        %v429 = vunpack.c.l.b16 %v338
        %v430 = vunpack.c.l.b16 %v339
        %v431 = vunpack.c.h.b16 %v339
        %v432 = vunpack.c.l.b16 %v340
        %v433 = vunpack.c.l.b16 %v341
        %v434 = vunpack.c.h.b16 %v341
        %v435 = vunpack.c.l.b16 %v342
        %v436 = vunpack.c.l.b16 %v343
        %v437 = vunpack.c.h.b16 %v343
        %v438 = vunpack.c.l.b16 %v344
        %v439 = vunpack.c.l.b16 %v345
        %v440 = vunpack.c.h.b16 %v345
        %v441 = vunpack.c.l.b16 %v346
        %v442 = vunpack.c.l.b16 %v347
        %v443 = vunpack.c.h.b16 %v347
        %v444 = vunpack.c.l.b16 %v348
        %v445 = vunpack.c.l.b16 %v349
        %v446 = vunpack.c.h.b16 %v349
        %v447 = vunpack.c.l.b16 %v350
        %v448 = vpack.c.b16 %v403, %v400
        %v449 = vpack.c.b16 %v404, %v401
        %v450 = vpack.c.b16 %v405, %v402
        %v451 = vpack.c.b16 %v409, %v406
        %v452 = vpack.c.b16 %v410, %v407
        %v453 = vpack.c.b16 %v411, %v408
        %v454 = vpack.c.b16 %v415, %v412
        %v455 = vpack.c.b16 %v416, %v413
        %v456 = vpack.c.b16 %v417, %v414
        %v457 = vpack.c.b16 %v421, %v418
        %v458 = vpack.c.b16 %v422, %v419
        %v459 = vpack.c.b16 %v423, %v420
        %v460 = vpack.c.b16 %v427, %v424
        %v461 = vpack.c.b16 %v428, %v425
        %v462 = vpack.c.b16 %v429, %v426
        %v463 = vpack.c.b16 %v433, %v430
        %v464 = vpack.c.b16 %v434, %v431
        %v465 = vpack.c.b16 %v435, %v432
        %v466 = vpack.c.b16 %v439, %v436
        %v467 = vpack.c.b16 %v440, %v437
        %v468 = vpack.c.b16 %v441, %v438
        %v469 = vpack.c.b16 %v445, %v442
        %v470 = vpack.c.b16 %v446, %v443
        %v471 = vpack.c.b16 %v447, %v444
        %496 = vmatprep.subr.bf16.mxu0 %v470
        %497 = vmatpush1.bf16.msra.mxu0 %v469
        %498 = vmatprep.subr.bf16.mxu0 %v467
        %499 = vmatpush1.bf16.msra.mxu0 %v466
        %500 = vmatprep.subr.bf16.mxu0 %v464
        %501 = vmatpush1.bf16.msra.mxu0 %v463
        %502 = vmatprep.subr.bf16.mxu0 %v461
        %503 = vmatpush1.bf16.msra.mxu0 %v460
        %504 = vmatprep.subr.bf16.mxu0 %v458
        %505 = vmatpush1.bf16.msra.mxu0 %v457
        %506 = vmatprep.subr.bf16.mxu0 %v455
        %507 = vmatpush1.bf16.msra.mxu0 %v454
        %508 = vmatprep.subr.bf16.mxu0 %v452
        %509 = vmatpush1.bf16.msra.mxu0 %v451
        %510 = vmatprep.subr.bf16.mxu0 %v449
        %511 = vmatpush1.bf16.msra.mxu0 %v448
        %512 = vmatprep.subr.bf16.mxu0 0
        %513 = vmatpush2.bf16.msra.mxu0 0
        %514 = vmatprep.subr.bf16.mxu0 0
        %515 = vmatpush2.bf16.msra.mxu0 0
        %516 = vmatprep.subr.bf16.mxu0 0
        %517 = vmatpush2.bf16.msra.mxu0 0
        %518 = vmatprep.subr.bf16.mxu0 0
        %519 = vmatpush2.bf16.msra.mxu0 0
        %520 = vmatprep.subr.bf16.mxu0 0
        %521 = vmatpush2.bf16.msra.mxu0 0
        %522 = vmatprep.subr.bf16.mxu0 0
        %523 = vmatpush2.bf16.msra.mxu0 0
        %524 = vmatprep.subr.bf16.mxu0 0
        %525 = vmatpush2.bf16.msra.mxu0 0
        %526 = vmatprep.subr.bf16.mxu0 0
        %527 = vmatpush2.bf16.msra.mxu0 0
        %528 = vmatprep.mubr.bf16.mxu0 0
        %529 = vmatmul.mubr.bf16.gmra.mxu0 %v318
        %v530 = vpop.f32.mrf.mxu0
        %v531 = vadd.f32 %v356, %v530
        %v532 = vpop.f32.mrf.mxu0
        %v533 = vadd.f32 %v360, %v532
        %v534 = vpop.f32.mrf.mxu0
        %v535 = vpop.f32.mrf.mxu0
        %536 = vdwg.mxu0
        %537 = vmatprep.subr.bf16.mxu0 0
        %538 = vmatpush1.bf16.msra.mxu0 %v471
        %539 = vmatprep.subr.bf16.mxu0 0
        %540 = vmatpush1.bf16.msra.mxu0 %v468
        %541 = vmatprep.subr.bf16.mxu0 0
        %542 = vmatpush1.bf16.msra.mxu0 %v465
        %543 = vmatprep.subr.bf16.mxu0 0
        %544 = vmatpush1.bf16.msra.mxu0 %v462
        %545 = vmatprep.subr.bf16.mxu0 0
        %546 = vmatpush1.bf16.msra.mxu0 %v459
        %547 = vmatprep.subr.bf16.mxu0 0
        %548 = vmatpush1.bf16.msra.mxu0 %v456
        %549 = vmatprep.subr.bf16.mxu0 0
        %550 = vmatpush1.bf16.msra.mxu0 %v453
        %551 = vmatprep.subr.bf16.mxu0 0
        %552 = vmatpush1.bf16.msra.mxu0 %v450
        %553 = vmatprep.subr.bf16.mxu0 0
        %554 = vmatpush2.bf16.msra.mxu0 0
        %555 = vmatprep.subr.bf16.mxu0 0
        %556 = vmatpush2.bf16.msra.mxu0 0
        %557 = vmatprep.subr.bf16.mxu0 0
        %558 = vmatpush2.bf16.msra.mxu0 0
        %559 = vmatprep.subr.bf16.mxu0 0
        %560 = vmatpush2.bf16.msra.mxu0 0
        %561 = vmatprep.subr.bf16.mxu0 0
        %562 = vmatpush2.bf16.msra.mxu0 0
        %563 = vmatprep.subr.bf16.mxu0 0
        %564 = vmatpush2.bf16.msra.mxu0 0
        %565 = vmatprep.subr.bf16.mxu0 0
        %566 = vmatpush2.bf16.msra.mxu0 0
        %567 = vmatprep.subr.bf16.mxu0 0
        %568 = vmatpush2.bf16.msra.mxu0 0
        %569 = vmatprep.mubr.bf16.mxu0 0
        %570 = vmatmul.mubr.bf16.gmra.mxu0 %v318
        %v571 = vpop.f32.mrf.mxu0
        %v572 = vadd.f32 %v364, %v571
        %v573 = vpop.f32.mrf.mxu0
        %v574 = vpop.f32.mrf.mxu0
        %v575 = vpop.f32.mrf.mxu0
        %576 = vdwg.mxu0
        %v577 = vld [vmem:[#allocation4] sm:$0xf]
        %v578 = vld [vmem:[#allocation4 + $0x4] sm:$0xf]
        %v579 = vld [vmem:[#allocation4 + $0x8] sm:$0xf]
        %v580 = vld [vmem:[#allocation4 + $0xc] sm:$0xf]
        %v581 = vld [vmem:[#allocation4 + $0x10] sm:$0xf]
        %v582 = vld [vmem:[#allocation4 + $0x14] sm:$0xf]
        %v583 = vld [vmem:[#allocation4 + $0x18] sm:$0xf]
        %v584 = vld [vmem:[#allocation4 + $0x1c] sm:$0xf]
        %v585 = vld [vmem:[#allocation4 + $0x20] sm:$0xf]
        %v586 = vld [vmem:[#allocation4 + $0x24] sm:$0xf]
        %v587 = vld [vmem:[#allocation4 + $0x28] sm:$0xf]
        %v588 = vld [vmem:[#allocation4 + $0x2c] sm:$0xf]
        %v589 = vld [vmem:[#allocation4 + $0x30] sm:$0xf]
        %v590 = vld [vmem:[#allocation4 + $0x34] sm:$0xf]
        %v591 = vld [vmem:[#allocation4 + $0x38] sm:$0xf]
        %v592 = vld [vmem:[#allocation4 + $0x3c] sm:$0xf]
        %v593 = vpack.c.bf16 %v531, %v531
        %v594 = vpack.c.bf16 %v533, %v533
        %v595 = vpack.c.bf16 %v572, %v572
        %vm596 = vcmask 523264
        %v598 = vsel %vm596, %v593, 0
        %v601 = vsel %vm596, %v594, 0
        %603 = vmatprep.subr.bf16.mxu0 0
        %604 = vmatpush1.bf16.xpose.msra.mxu0 0
        %605 = vmatprep.subr.bf16.mxu0 0
        %606 = vmatpush1.bf16.xpose.msra.mxu0 0
        %607 = vmatprep.subr.bf16.mxu0 0
        %608 = vmatpush1.bf16.xpose.msra.mxu0 0
        %609 = vmatprep.subr.bf16.mxu0 0
        %610 = vmatpush1.bf16.xpose.msra.mxu0 0
        %611 = vmatprep.subr.bf16.mxu0 0
        %612 = vmatpush1.bf16.xpose.msra.mxu0 0
        %613 = vmatprep.subr.bf16.mxu0 0
        %614 = vmatpush1.bf16.xpose.msra.mxu0 0
        %615 = vmatprep.subr.bf16.mxu0 0
        %616 = vmatpush1.bf16.xpose.msra.mxu0 0
        %617 = vmatprep.subr.bf16.mxu0 0
        %618 = vmatpush1.bf16.xpose.msra.mxu0 %v601
        %619 = vmatprep.subr.bf16.mxu0 0
        %620 = vmatpush2.bf16.xpose.msra.mxu0 0
        %621 = vmatprep.subr.bf16.mxu0 0
        %622 = vmatpush2.bf16.xpose.msra.mxu0 0
        %623 = vmatprep.subr.bf16.mxu0 0
        %624 = vmatpush2.bf16.xpose.msra.mxu0 0
        %625 = vmatprep.subr.bf16.mxu0 0
        %626 = vmatpush2.bf16.xpose.msra.mxu0 0
        %627 = vmatprep.subr.bf16.mxu0 0
        %628 = vmatpush2.bf16.xpose.msra.mxu0 0
        %629 = vmatprep.subr.bf16.mxu0 0
        %630 = vmatpush2.bf16.xpose.msra.mxu0 0
        %631 = vmatprep.subr.bf16.mxu0 0
        %632 = vmatpush2.bf16.xpose.msra.mxu0 0
        %633 = vmatprep.subr.bf16.mxu0 0
        %634 = vmatpush2.bf16.xpose.msra.mxu0 0
        %635 = vmatprep.mubr.bf16.mxu0 0
        %636 = vmatmul.mubr.bf16.gmra.mxu0 %v598
        %v637 = vpop.f32.mrf.mxu0
        %v638 = vadd.f32 0.0, %v637
        %v639 = vpop.f32.mrf.mxu0
        %v640 = vpop.f32.mrf.mxu0
        %v641 = vpop.f32.mrf.mxu0
        %642 = vdwg.mxu0
        %v643 = vmul.f32 %v638, 0.125
        %vm644 = vcmask 64512
        %v645 = vsel %vm644, %v643, -inf
        %646 = vmax.xlane.f32.xlu0 %v645
        %v647 = vpop.xlane.xlu0 %646
        %v648 = vsub.f32 %v643, %v647
        %v649 = vmul.f32 %v648, 1.442695
        %v650 = vpow.pop %v649
        %v651 = vsel %vm644, %v650, 0.0
        %652 = vadd.xlane.f32.xlu0 %v651
        %v653 = vpop.xlane.xlu0 %652
        %v654 = vpack.c.bf16 %v650, %v650
        %v656 = vsel %vm644, %v654, 0
        %vm658 = vcmask 1043456
        %v660 = vsel %vm658, %v595, 0
        %662 = vmatprep.subr.bf16.mxu0 0
        %663 = vmatpush1.bf16.msra.mxu0 0
        %664 = vmatprep.subr.bf16.mxu0 0
        %665 = vmatpush1.bf16.msra.mxu0 0
        %666 = vmatprep.subr.bf16.mxu0 0
        %667 = vmatpush1.bf16.msra.mxu0 0
        %668 = vmatprep.subr.bf16.mxu0 0
        %669 = vmatpush1.bf16.msra.mxu0 0
        %670 = vmatprep.subr.bf16.mxu0 0
        %671 = vmatpush1.bf16.msra.mxu0 0
        %672 = vmatprep.subr.bf16.mxu0 0
        %673 = vmatpush1.bf16.msra.mxu0 0
        %674 = vmatprep.subr.bf16.mxu0 0
        %675 = vmatpush1.bf16.msra.mxu0 0
        %676 = vmatprep.subr.bf16.mxu0 0
        %677 = vmatpush1.bf16.msra.mxu0 %v660
        %678 = vmatprep.subr.bf16.mxu0 0
        %679 = vmatpush2.bf16.msra.mxu0 0
        %680 = vmatprep.subr.bf16.mxu0 0
        %681 = vmatpush2.bf16.msra.mxu0 0
        %682 = vmatprep.subr.bf16.mxu0 0
        %683 = vmatpush2.bf16.msra.mxu0 0
        %684 = vmatprep.subr.bf16.mxu0 0
        %685 = vmatpush2.bf16.msra.mxu0 0
        %686 = vmatprep.subr.bf16.mxu0 0
        %687 = vmatpush2.bf16.msra.mxu0 0
        %688 = vmatprep.subr.bf16.mxu0 0
        %689 = vmatpush2.bf16.msra.mxu0 0
        %690 = vmatprep.subr.bf16.mxu0 0
        %691 = vmatpush2.bf16.msra.mxu0 0
        %692 = vmatprep.subr.bf16.mxu0 0
        %693 = vmatpush2.bf16.msra.mxu0 0
        %694 = vmatprep.mubr.bf16.mxu0 0
        %695 = vmatmul.mubr.bf16.gmra.mxu0 %v656
        %v696 = vpop.f32.mrf.mxu0
        %v697 = vadd.f32 0.0, %v696
        %v698 = vpop.f32.mrf.mxu0
        %v699 = vpop.f32.mrf.mxu0
        %v700 = vpop.f32.mrf.mxu0
        %701 = vdwg.mxu0
        %v702 = vrcp.pop %v653
        %v703 = vmul.f32 %v697, %v702
        %v704 = vpack.c.bf16 %v703, %v703
        %706 = vrot.lane.b32.xlu0 %v593, 64
        %v707 = vpop.permute.xlu0 %706
        %709 = vrot.lane.b32.xlu0 %v594, 64
        %v710 = vpop.permute.xlu0 %709
        %v712 = vsel %vm596, %v707, 0
        %v715 = vsel %vm596, %v710, 0
        %717 = vmatprep.subr.bf16.mxu0 0
        %718 = vmatpush1.bf16.xpose.msra.mxu0 0
        %719 = vmatprep.subr.bf16.mxu0 0
        %720 = vmatpush1.bf16.xpose.msra.mxu0 0
        %721 = vmatprep.subr.bf16.mxu0 0
        %722 = vmatpush1.bf16.xpose.msra.mxu0 0
        %723 = vmatprep.subr.bf16.mxu0 0
        %724 = vmatpush1.bf16.xpose.msra.mxu0 0
        %725 = vmatprep.subr.bf16.mxu0 0
        %726 = vmatpush1.bf16.xpose.msra.mxu0 0
        %727 = vmatprep.subr.bf16.mxu0 0
        %728 = vmatpush1.bf16.xpose.msra.mxu0 0
        %729 = vmatprep.subr.bf16.mxu0 0
        %730 = vmatpush1.bf16.xpose.msra.mxu0 0
        %731 = vmatprep.subr.bf16.mxu0 0
        %732 = vmatpush1.bf16.xpose.msra.mxu0 %v715
        %733 = vmatprep.subr.bf16.mxu0 0
        %734 = vmatpush2.bf16.xpose.msra.mxu0 0
        %735 = vmatprep.subr.bf16.mxu0 0
        %736 = vmatpush2.bf16.xpose.msra.mxu0 0
        %737 = vmatprep.subr.bf16.mxu0 0
        %738 = vmatpush2.bf16.xpose.msra.mxu0 0
        %739 = vmatprep.subr.bf16.mxu0 0
        %740 = vmatpush2.bf16.xpose.msra.mxu0 0
        %741 = vmatprep.subr.bf16.mxu0 0
        %742 = vmatpush2.bf16.xpose.msra.mxu0 0
        %743 = vmatprep.subr.bf16.mxu0 0
        %744 = vmatpush2.bf16.xpose.msra.mxu0 0
        %745 = vmatprep.subr.bf16.mxu0 0
        %746 = vmatpush2.bf16.xpose.msra.mxu0 0
        %747 = vmatprep.subr.bf16.mxu0 0
        %748 = vmatpush2.bf16.xpose.msra.mxu0 0
        %749 = vmatprep.mubr.bf16.mxu0 0
        %750 = vmatmul.mubr.bf16.gmra.mxu0 %v712
        %v751 = vpop.f32.mrf.mxu0
        %v752 = vadd.f32 0.0, %v751
        %v753 = vpop.f32.mrf.mxu0
        %v754 = vpop.f32.mrf.mxu0
        %v755 = vpop.f32.mrf.mxu0
        %756 = vdwg.mxu0
        %v757 = vmul.f32 %v752, 0.125
        %v758 = vsel %vm644, %v757, -inf
        %759 = vmax.xlane.f32.xlu0 %v758
        %v760 = vpop.xlane.xlu0 %759
        %v761 = vsub.f32 %v757, %v760
        %v762 = vmul.f32 %v761, 1.442695
        %v763 = vpow.pop %v762
        %v764 = vsel %vm644, %v763, 0.0
        %765 = vadd.xlane.f32.xlu0 %v764
        %v766 = vpop.xlane.xlu0 %765
        %v767 = vpack.c.bf16 %v763, %v763
        %769 = vrot.lane.b32.xlu0 %v595, 64
        %v770 = vpop.permute.xlu0 %769
        %v772 = vsel %vm644, %v767, 0
        %v775 = vsel %vm658, %v770, 0
        %777 = vmatprep.subr.bf16.mxu0 0
        %778 = vmatpush1.bf16.msra.mxu0 0
        %779 = vmatprep.subr.bf16.mxu0 0
        %780 = vmatpush1.bf16.msra.mxu0 0
        %781 = vmatprep.subr.bf16.mxu0 0
        %782 = vmatpush1.bf16.msra.mxu0 0
        %783 = vmatprep.subr.bf16.mxu0 0
        %784 = vmatpush1.bf16.msra.mxu0 0
        %785 = vmatprep.subr.bf16.mxu0 0
        %786 = vmatpush1.bf16.msra.mxu0 0
        %787 = vmatprep.subr.bf16.mxu0 0
        %788 = vmatpush1.bf16.msra.mxu0 0
        %789 = vmatprep.subr.bf16.mxu0 0
        %790 = vmatpush1.bf16.msra.mxu0 0
        %791 = vmatprep.subr.bf16.mxu0 0
        %792 = vmatpush1.bf16.msra.mxu0 %v775
        %793 = vmatprep.subr.bf16.mxu0 0
        %794 = vmatpush2.bf16.msra.mxu0 0
        %795 = vmatprep.subr.bf16.mxu0 0
        %796 = vmatpush2.bf16.msra.mxu0 0
        %797 = vmatprep.subr.bf16.mxu0 0
        %798 = vmatpush2.bf16.msra.mxu0 0
        %799 = vmatprep.subr.bf16.mxu0 0
        %800 = vmatpush2.bf16.msra.mxu0 0
        %801 = vmatprep.subr.bf16.mxu0 0
        %802 = vmatpush2.bf16.msra.mxu0 0
        %803 = vmatprep.subr.bf16.mxu0 0
        %804 = vmatpush2.bf16.msra.mxu0 0
        %805 = vmatprep.subr.bf16.mxu0 0
        %806 = vmatpush2.bf16.msra.mxu0 0
        %807 = vmatprep.subr.bf16.mxu0 0
        %808 = vmatpush2.bf16.msra.mxu0 0
        %809 = vmatprep.mubr.bf16.mxu0 0
        %810 = vmatmul.mubr.bf16.gmra.mxu0 %v772
        %v811 = vpop.f32.mrf.mxu0
        %v812 = vadd.f32 0.0, %v811
        %v813 = vpop.f32.mrf.mxu0
        %v814 = vpop.f32.mrf.mxu0
        %v815 = vpop.f32.mrf.mxu0
        %816 = vdwg.mxu0
        %v817 = vrcp.pop %v766
        %v818 = vmul.f32 %v812, %v817
        %v819 = vpack.c.bf16 %v818, %v818
        %v828 = vunpack.c.l.b16 %v585
        %v829 = vunpack.c.l.b16 %v586
        %v830 = vunpack.c.l.b16 %v587
        %v831 = vunpack.c.l.b16 %v588
        %v832 = vunpack.c.l.b16 %v589
        %v833 = vunpack.c.l.b16 %v590
        %v834 = vunpack.c.l.b16 %v591
        %v835 = vunpack.c.l.b16 %v592
        %v836 = vpack.c.b16 %v829, %v828
        %v837 = vpack.c.b16 %v831, %v830
        %v838 = vpack.c.b16 %v833, %v832
        %v839 = vpack.c.b16 %v835, %v834
        %v845 = vsel %vm596, %v819, 0
        %847 = vmatprep.subr.bf16.mxu0 0
        %848 = vmatpush1.bf16.msra.mxu0 0
        %849 = vmatprep.subr.bf16.mxu0 0
        %850 = vmatpush1.bf16.msra.mxu0 0
        %851 = vmatprep.subr.bf16.mxu0 0
        %852 = vmatpush1.bf16.msra.mxu0 0
        %853 = vmatprep.subr.bf16.mxu0 0
        %854 = vmatpush1.bf16.msra.mxu0 0
        %855 = vmatprep.subr.bf16.mxu0 0
        %856 = vmatpush1.bf16.msra.mxu0 %v839
        %857 = vmatprep.subr.bf16.mxu0 0
        %858 = vmatpush1.bf16.msra.mxu0 %v838
        %859 = vmatprep.subr.bf16.mxu0 0
        %860 = vmatpush1.bf16.msra.mxu0 %v837
        %861 = vmatprep.subr.bf16.mxu0 0
        %862 = vmatpush1.bf16.msra.mxu0 %v836
        %863 = vmatprep.subr.bf16.mxu0 0
        %864 = vmatpush2.bf16.msra.mxu0 0
        %865 = vmatprep.subr.bf16.mxu0 0
        %866 = vmatpush2.bf16.msra.mxu0 0
        %867 = vmatprep.subr.bf16.mxu0 0
        %868 = vmatpush2.bf16.msra.mxu0 0
        %869 = vmatprep.subr.bf16.mxu0 0
        %870 = vmatpush2.bf16.msra.mxu0 0
        %871 = vmatprep.subr.bf16.mxu0 0
        %872 = vmatpush2.bf16.msra.mxu0 0
        %873 = vmatprep.subr.bf16.mxu0 0
        %874 = vmatpush2.bf16.msra.mxu0 0
        %875 = vmatprep.subr.bf16.mxu0 0
        %876 = vmatpush2.bf16.msra.mxu0 0
        %877 = vmatprep.subr.bf16.mxu0 0
        %878 = vmatpush2.bf16.msra.mxu0 0
        %879 = vmatprep.mubr.bf16.mxu0 0
        %880 = vmatmul.mubr.bf16.gmra.mxu0 %v845
        %v881 = vpop.f32.mrf.mxu0
        %v882 = vadd.f32 0.0, %v881
        %v883 = vpop.f32.mrf.mxu0
        %v884 = vpop.f32.mrf.mxu0
        %v885 = vpop.f32.mrf.mxu0
        %886 = vdwg.mxu0
        %v895 = vunpack.c.l.b16 %v577
        %v896 = vunpack.c.l.b16 %v578
        %v897 = vunpack.c.l.b16 %v579
        %v898 = vunpack.c.l.b16 %v580
        %v899 = vunpack.c.l.b16 %v581
        %v900 = vunpack.c.l.b16 %v582
        %v901 = vunpack.c.l.b16 %v583
        %v902 = vunpack.c.l.b16 %v584
        %v903 = vpack.c.b16 %v896, %v895
        %v904 = vpack.c.b16 %v898, %v897
        %v905 = vpack.c.b16 %v900, %v899
        %v906 = vpack.c.b16 %v902, %v901
        %v912 = vsel %vm596, %v704, 0
        %914 = vmatprep.subr.bf16.mxu0 0
        %915 = vmatpush1.bf16.msra.mxu0 0
        %916 = vmatprep.subr.bf16.mxu0 0
        %917 = vmatpush1.bf16.msra.mxu0 0
        %918 = vmatprep.subr.bf16.mxu0 0
        %919 = vmatpush1.bf16.msra.mxu0 0
        %920 = vmatprep.subr.bf16.mxu0 0
        %921 = vmatpush1.bf16.msra.mxu0 0
        %922 = vmatprep.subr.bf16.mxu0 0
        %923 = vmatpush1.bf16.msra.mxu0 %v906
        %924 = vmatprep.subr.bf16.mxu0 0
        %925 = vmatpush1.bf16.msra.mxu0 %v905
        %926 = vmatprep.subr.bf16.mxu0 0
        %927 = vmatpush1.bf16.msra.mxu0 %v904
        %928 = vmatprep.subr.bf16.mxu0 0
        %929 = vmatpush1.bf16.msra.mxu0 %v903
        %930 = vmatprep.subr.bf16.mxu0 0
        %931 = vmatpush2.bf16.msra.mxu0 0
        %932 = vmatprep.subr.bf16.mxu0 0
        %933 = vmatpush2.bf16.msra.mxu0 0
        %934 = vmatprep.subr.bf16.mxu0 0
        %935 = vmatpush2.bf16.msra.mxu0 0
        %936 = vmatprep.subr.bf16.mxu0 0
        %937 = vmatpush2.bf16.msra.mxu0 0
        %938 = vmatprep.subr.bf16.mxu0 0
        %939 = vmatpush2.bf16.msra.mxu0 0
        %940 = vmatprep.subr.bf16.mxu0 0
        %941 = vmatpush2.bf16.msra.mxu0 0
        %942 = vmatprep.subr.bf16.mxu0 0
        %943 = vmatpush2.bf16.msra.mxu0 0
        %944 = vmatprep.subr.bf16.mxu0 0
        %945 = vmatpush2.bf16.msra.mxu0 0
        %946 = vmatprep.mubr.bf16.mxu0 0
        %947 = vmatmul.mubr.bf16.gmra.mxu0 %v912
        %v948 = vpop.f32.mrf.mxu0
        %v949 = vadd.f32 %v882, %v948
        %v950 = vpop.f32.mrf.mxu0
        %v951 = vpop.f32.mrf.mxu0
        %v952 = vpop.f32.mrf.mxu0
        %953 = vdwg.mxu0
        %v954 = vld [vmem:[#allocation6] sm:$0x1]
        %v956 = vlaneseq
        %v957 = vshrl.u32 %v956, 7
        %v958 = vsub.s32 0, %v957
        %v959 = vrot.slane %v954, %v958
        %v961 = vadd.f32 %v949, %v959
        %v962 = vadd.f32 %v961, %v317
        %v963 = vld [vmem:[%s5] sm:$0x1]
        %v964 = vld [vmem:[%s6] sm:$0x1]
        %965 = vadd.xlane.f32.xlu0 %v962
        %v966 = vpop.xlane.xlu0 %965
        %v967 = vrcp.pop 128.0
        %v968 = vmul.f32 %v966, %v967
        %v969 = vsub.f32 %v962, %v968
        %v970 = vmul.f32 %v969, %v969
        %971 = vadd.xlane.f32.xlu0 %v970
        %v972 = vpop.xlane.xlu0 %971
        %v973 = vmul.f32 %v972, %v967
        %v974 = vadd.f32 %v973, 1e-12
        %v975 = vrsqrt.pop %v974
        %v976 = vmul.f32 %v969, %v975
        %v978 = vlaneseq
        %v979 = vshrl.u32 %v978, 7
        %v980 = vsub.s32 0, %v979
        %v981 = vrot.slane %v963, %v980
        %v983 = vmul.f32 %v976, %v981
        %v985 = vlaneseq
        %v986 = vshrl.u32 %v985, 7
        %v987 = vsub.s32 0, %v986
        %v988 = vrot.slane %v964, %v987
        %v990 = vadd.f32 %v983, %v988
        %991 = vst [vmem:[%s315] sm:$0xff] %v990
        %p992 = scmp.lt.s32.totalorder %s20, 1
        %s993 = scalar_select %p992, %s20, 1
        %s994 = smul.addr %s993, 8
        %s995 = scalar_lea.vmem %s7, %s994
        // Predicated region
        $region61: #{vector_bert_forward.7} parent=47 // pred_check
          %p996 = pneg %p190
        $region62: #{vector_bert_forward.7} parent=47 // pred_check_branch
          %998 = sbr.rel (%p996) target = $region64
        $region63: #{vector_bert_forward.7} parent=47 // pred_region
          _
        $region64: #{vector_bert_forward.7} parent=47 // pred_fallthru
          _
      $region48: #{vector_bert_forward.7} parent=5 // pred_fallthru
        _
      %p999 = scmp.le.s32.totalorder 2, %s15
      // Predicated region
      $region65: #{vector_bert_forward.7} parent=5 // pred_check
        %p1000 = pneg %p999
      $region66: #{vector_bert_forward.7} parent=5 // pred_check_branch
        %1002 = sbr.rel (%p1000) target = $region68
      $region67: #{vector_bert_forward.7} parent=5 // pred_region
        %s1003 = ssub.s32 %s15, 2
        // Predicated region
        $region69: #{vector_bert_forward.7} parent=67 // pred_check
          %p1004 = pneg %p196
        $region70: #{vector_bert_forward.7} parent=67 // pred_check_branch
          %1006 = sbr.rel (%p1004) target = $region72
        $region71: #{vector_bert_forward.7} parent=67 // pred_region
          %p1007 = scmp.lt.s32.totalorder %s21, 1
          %s1008 = scalar_select %p1007, %s21, 1
          %s1009 = smul.addr %s1008, 8
          %s1010 = scalar_lea.vmem %s7, %s1009
        $region72: #{vector_bert_forward.7} parent=67 // pred_fallthru
          _
      $region68: #{vector_bert_forward.7} parent=5 // pred_fallthru
        _
    $region6: #{vector_bert_forward.7} parent=1 // loop_footer
      %s19 = sadd.s32 1, %s15
    $region7: #{vector_bert_forward.7} parent=1 // loop_footer_branch
      %14 = sbr.rel target = $region3
    $region8: #{vector_bert_forward.7} parent=1 // loop_exit
      _
    %1011 = vsyncpa [#allocation3], 1
    %s1012 = scalar_lea.sflag [#allocation3], 1
    %1013 = vsyncpa %s1012, 1
    %1014 = vsyncpa [#allocation5], 1

// kernel: vector_bert_forward.8
$region0: #{vector_bert_forward.8}
  #allocation0 [shape = 'u32[]', space=smem, size = 0x4, offset = 0x4, fixed_abs, tag = 'smem constant byte address 0x4 - core index']
  #allocation1 [shape = 'u32[144,128]{1,0:T(1,128)}', space=vmem, size = 0x12000, scoped, tag = 'internal scratch']
  %s0 = inlined_call_operand.vmem [shape: f32[16,128], index: 0, kind: input, shape index: {}]
  %s1 = inlined_call_operand.vmem [shape: bf16[128,512], index: 1, kind: input, shape index: {}]
  %s2 = inlined_call_operand.vmem [shape: f32[1,512], index: 2, kind: input, shape index: {}]
  %s3 = inlined_call_operand.hbm [shape: bf16[512,128], index: 3, kind: input, shape index: {}]
  %s4 = inlined_call_operand.vmem [shape: f32[1,128], index: 4, kind: input, shape index: {}]
  %s5 = inlined_call_operand.vmem [shape: f32[1,128], index: 5, kind: input, shape index: {}]
  %s6 = inlined_call_operand.vmem [shape: f32[1,128], index: 6, kind: input, shape index: {}]
  %s7 = inlined_call_operand.vmem [shape: f32[16,128], index: 7, kind: output, shape index: {}]
  %s8 = sld [smem:[#allocation0]]
  $region42: #{vector_bert_forward.8} parent=0
    _
  %s10 = ssub.s32 1, %s8
  %s11 = scalar_select 0, %s10, %s8
  $region1: #{vector_bert_forward.8} parent=0
    #allocation2 [shape = 'u8[131072]{0}', space=vmem, size = 0x20000, scoped, tag = 'input window, operand 3, single buffered']
    #allocation3 [shape = 's32[1]{0}', space=sflag, size = 0x4, scoped, tag = 'scoped memory for vector_bert_forward.8']
    %12 = vsyncpa [#allocation3], 0
    // Predicated region
    $region2: #{vector_bert_forward.8} parent=1 // pred_check
      _
    $region3: #{vector_bert_forward.8} parent=1 // pred_check_branch
      %14 = sbr.rel (0) target = $region5
    $region4: #{vector_bert_forward.8} parent=1 // pred_region
      _
    $region5: #{vector_bert_forward.8} parent=1 // pred_fallthru
      _
    // Predicated region
    $region6: #{vector_bert_forward.8} parent=1 // pred_check
      _
    $region7: #{vector_bert_forward.8} parent=1 // pred_check_branch
      %16 = sbr.rel (0) target = $region9
    $region8: #{vector_bert_forward.8} parent=1 // pred_region
      _
    $region9: #{vector_bert_forward.8} parent=1 // pred_fallthru
      _
    // Predicated region
    $region10: #{vector_bert_forward.8} parent=1 // pred_check
      _
    $region11: #{vector_bert_forward.8} parent=1 // pred_check_branch
      %18 = sbr.rel (0) target = $region13
    $region12: #{vector_bert_forward.8} parent=1 // pred_region
      _
    $region13: #{vector_bert_forward.8} parent=1 // pred_fallthru
      _
    // Predicated region
    $region14: #{vector_bert_forward.8} parent=1 // pred_check
      _
    $region15: #{vector_bert_forward.8} parent=1 // pred_check_branch
      %20 = sbr.rel (0) target = $region17
    $region16: #{vector_bert_forward.8} parent=1 // pred_region
      %s22 = ssub.s32 4096, 4096
      %23 = vsyncadd [#allocation3], %s22
      %s24 = sshll.u32 [#allocation2], 4
      %s25 = int_to_ptr.vmem [resolvable:$true] %s24
      %30 = dma.hbm_to_vmem [thread:$0]  %s3, 4096, %s25, [#allocation3], 64, 64, 4
    $region17: #{vector_bert_forward.8} parent=1 // pred_fallthru
      _
    // Predicated region
    $region18: #{vector_bert_forward.8} parent=1 // pred_check
      _
    $region19: #{vector_bert_forward.8} parent=1 // pred_check_branch
      %32 = sbr.rel (0) target = $region21
    $region20: #{vector_bert_forward.8} parent=1 // pred_region
      _
    $region21: #{vector_bert_forward.8} parent=1 // pred_fallthru
      _
    // Predicated region
    $region22: #{vector_bert_forward.8} parent=1 // pred_check
      _
    $region23: #{vector_bert_forward.8} parent=1 // pred_check_branch
      %34 = sbr.rel (0) target = $region25
    $region24: #{vector_bert_forward.8} parent=1 // pred_region
      _
    $region25: #{vector_bert_forward.8} parent=1 // pred_fallthru
      _
    // Predicated region
    $region26: #{vector_bert_forward.8} parent=1 // pred_check
      _
    $region27: #{vector_bert_forward.8} parent=1 // pred_check_branch
      %36 = sbr.rel (0) target = $region29
    $region28: #{vector_bert_forward.8} parent=1 // pred_region
      _
    $region29: #{vector_bert_forward.8} parent=1 // pred_fallthru
      _
    // Predicated region
    $region30: #{vector_bert_forward.8} parent=1 // pred_check
      _
    $region31: #{vector_bert_forward.8} parent=1 // pred_check_branch
      %38 = sbr.rel (0) target = $region33
    $region32: #{vector_bert_forward.8} parent=1 // pred_region
      %39 = dma.done [#allocation3], 4096
    $region33: #{vector_bert_forward.8} parent=1 // pred_fallthru
      _
    %v41 = vld [vmem:[%s0] sm:$0xff]
    %v42 = vld [vmem:[%s0 + $0x8] sm:$0xff]
    %v43 = vpack.c.bf16 %v42, %v41
    %v44 = vld [vmem:[%s1] sm:$0xff]
    %v45 = vld [vmem:[%s1 + $0x8] sm:$0xff]
    %v46 = vld [vmem:[%s1 + $0x10] sm:$0xff]
    %v47 = vld [vmem:[%s1 + $0x18] sm:$0xff]
    %v48 = vld [vmem:[%s1 + $0x20] sm:$0xff]
    %v49 = vld [vmem:[%s1 + $0x28] sm:$0xff]
    %v50 = vld [vmem:[%s1 + $0x30] sm:$0xff]
    %v51 = vld [vmem:[%s1 + $0x38] sm:$0xff]
    %v52 = vld [vmem:[%s1 + $0x40] sm:$0xff]
    %v53 = vld [vmem:[%s1 + $0x48] sm:$0xff]
    %v54 = vld [vmem:[%s1 + $0x50] sm:$0xff]
    %v55 = vld [vmem:[%s1 + $0x58] sm:$0xff]
    %v56 = vld [vmem:[%s1 + $0x60] sm:$0xff]
    %v57 = vld [vmem:[%s1 + $0x68] sm:$0xff]
    %v58 = vld [vmem:[%s1 + $0x70] sm:$0xff]
    %v59 = vld [vmem:[%s1 + $0x78] sm:$0xff]
    %v60 = vld [vmem:[%s1 + $0x80] sm:$0xff]
    %v61 = vld [vmem:[%s1 + $0x88] sm:$0xff]
    %v62 = vld [vmem:[%s1 + $0x90] sm:$0xff]
    %v63 = vld [vmem:[%s1 + $0x98] sm:$0xff]
    %v64 = vld [vmem:[%s1 + $0xa0] sm:$0xff]
    %v65 = vld [vmem:[%s1 + $0xa8] sm:$0xff]
    %v66 = vld [vmem:[%s1 + $0xb0] sm:$0xff]
    %v67 = vld [vmem:[%s1 + $0xb8] sm:$0xff]
    %v68 = vld [vmem:[%s1 + $0xc0] sm:$0xff]
    %v69 = vld [vmem:[%s1 + $0xc8] sm:$0xff]
    %v70 = vld [vmem:[%s1 + $0xd0] sm:$0xff]
    %v71 = vld [vmem:[%s1 + $0xd8] sm:$0xff]
    %v72 = vld [vmem:[%s1 + $0xe0] sm:$0xff]
    %v73 = vld [vmem:[%s1 + $0xe8] sm:$0xff]
    %v74 = vld [vmem:[%s1 + $0xf0] sm:$0xff]
    %v75 = vld [vmem:[%s1 + $0xf8] sm:$0xff]
    %v76 = vld [vmem:[%s2] sm:$0xf]
    %v78 = vlaneseq
    %v79 = vshrl.u32 %v78, 7
    %v80 = vsub.s32 0, %v79
    %v81 = vrot.slane %v76, %v80
    %v82 = vlaneseq
    %v83 = vshrl.u32 %v82, 7
    %v84 = vsub.s32 1, %v83
    %v85 = vrot.slane %v76, %v84
    %v86 = vlaneseq
    %v87 = vshrl.u32 %v86, 7
    %v88 = vsub.s32 2, %v87
    %v89 = vrot.slane %v76, %v88
    %v90 = vlaneseq
    %v91 = vshrl.u32 %v90, 7
    %v92 = vsub.s32 3, %v91
    %v93 = vrot.slane %v76, %v92
    %v130 = vunpack.c.l.b16 %v44
    %v131 = vunpack.c.h.b16 %v44
    %v132 = vunpack.c.l.b16 %v45
    %v133 = vunpack.c.h.b16 %v45
    %v134 = vunpack.c.l.b16 %v46
    %v135 = vunpack.c.h.b16 %v46
    %v136 = vunpack.c.l.b16 %v47
    %v137 = vunpack.c.h.b16 %v47
    %v138 = vunpack.c.l.b16 %v48
    %v139 = vunpack.c.h.b16 %v48
    %v140 = vunpack.c.l.b16 %v49
    %v141 = vunpack.c.h.b16 %v49
    %v142 = vunpack.c.l.b16 %v50
    %v143 = vunpack.c.h.b16 %v50
    %v144 = vunpack.c.l.b16 %v51
    %v145 = vunpack.c.h.b16 %v51
    %v146 = vunpack.c.l.b16 %v52
    %v147 = vunpack.c.h.b16 %v52
    %v148 = vunpack.c.l.b16 %v53
    %v149 = vunpack.c.h.b16 %v53
    %v150 = vunpack.c.l.b16 %v54
    %v151 = vunpack.c.h.b16 %v54
    %v152 = vunpack.c.l.b16 %v55
    %v153 = vunpack.c.h.b16 %v55
    %v154 = vunpack.c.l.b16 %v56
    %v155 = vunpack.c.h.b16 %v56
    %v156 = vunpack.c.l.b16 %v57
    %v157 = vunpack.c.h.b16 %v57
    %v158 = vunpack.c.l.b16 %v58
    %v159 = vunpack.c.h.b16 %v58
    %v160 = vunpack.c.l.b16 %v59
    %v161 = vunpack.c.h.b16 %v59
    %v162 = vunpack.c.l.b16 %v60
    %v163 = vunpack.c.h.b16 %v60
    %v164 = vunpack.c.l.b16 %v61
    %v165 = vunpack.c.h.b16 %v61
    %v166 = vunpack.c.l.b16 %v62
    %v167 = vunpack.c.h.b16 %v62
    %v168 = vunpack.c.l.b16 %v63
    %v169 = vunpack.c.h.b16 %v63
    %v170 = vunpack.c.l.b16 %v64
    %v171 = vunpack.c.h.b16 %v64
    %v172 = vunpack.c.l.b16 %v65
    %v173 = vunpack.c.h.b16 %v65
    %v174 = vunpack.c.l.b16 %v66
    %v175 = vunpack.c.h.b16 %v66
    %v176 = vunpack.c.l.b16 %v67
    %v177 = vunpack.c.h.b16 %v67
    %v178 = vunpack.c.l.b16 %v68
    %v179 = vunpack.c.h.b16 %v68
    %v180 = vunpack.c.l.b16 %v69
    %v181 = vunpack.c.h.b16 %v69
    %v182 = vunpack.c.l.b16 %v70
    %v183 = vunpack.c.h.b16 %v70
    %v184 = vunpack.c.l.b16 %v71
    %v185 = vunpack.c.h.b16 %v71
    %v186 = vunpack.c.l.b16 %v72
    %v187 = vunpack.c.h.b16 %v72
    %v188 = vunpack.c.l.b16 %v73
    %v189 = vunpack.c.h.b16 %v73
    %v190 = vunpack.c.l.b16 %v74
    %v191 = vunpack.c.h.b16 %v74
    %v192 = vunpack.c.l.b16 %v75
    %v193 = vunpack.c.h.b16 %v75
    %v194 = vpack.c.b16 %v134, %v130
    %v195 = vpack.c.b16 %v135, %v131
    %v196 = vpack.c.b16 %v136, %v132
    %v197 = vpack.c.b16 %v137, %v133
    %v198 = vpack.c.b16 %v142, %v138
    %v199 = vpack.c.b16 %v143, %v139
    %v200 = vpack.c.b16 %v144, %v140
    %v201 = vpack.c.b16 %v145, %v141
    %v202 = vpack.c.b16 %v150, %v146
    %v203 = vpack.c.b16 %v151, %v147
    %v204 = vpack.c.b16 %v152, %v148
    %v205 = vpack.c.b16 %v153, %v149
    %v206 = vpack.c.b16 %v158, %v154
    %v207 = vpack.c.b16 %v159, %v155
    %v208 = vpack.c.b16 %v160, %v156
    %v209 = vpack.c.b16 %v161, %v157
    %v210 = vpack.c.b16 %v166, %v162
    %v211 = vpack.c.b16 %v167, %v163
    %v212 = vpack.c.b16 %v168, %v164
    %v213 = vpack.c.b16 %v169, %v165
    %v214 = vpack.c.b16 %v174, %v170
    %v215 = vpack.c.b16 %v175, %v171
    %v216 = vpack.c.b16 %v176, %v172
    %v217 = vpack.c.b16 %v177, %v173
    %v218 = vpack.c.b16 %v182, %v178
    %v219 = vpack.c.b16 %v183, %v179
    %v220 = vpack.c.b16 %v184, %v180
    %v221 = vpack.c.b16 %v185, %v181
    %v222 = vpack.c.b16 %v190, %v186
    %v223 = vpack.c.b16 %v191, %v187
    %v224 = vpack.c.b16 %v192, %v188
    %v225 = vpack.c.b16 %v193, %v189
    %258 = vmatprep.subr.bf16.mxu0 %v223
    %259 = vmatpush1.bf16.msra.mxu0 %v222
    %260 = vmatprep.subr.bf16.mxu0 %v219
    %261 = vmatpush1.bf16.msra.mxu0 %v218
    %262 = vmatprep.subr.bf16.mxu0 %v215
    %263 = vmatpush1.bf16.msra.mxu0 %v214
    %264 = vmatprep.subr.bf16.mxu0 %v211
    %265 = vmatpush1.bf16.msra.mxu0 %v210
    %266 = vmatprep.subr.bf16.mxu0 %v207
    %267 = vmatpush1.bf16.msra.mxu0 %v206
    %268 = vmatprep.subr.bf16.mxu0 %v203
    %269 = vmatpush1.bf16.msra.mxu0 %v202
    %270 = vmatprep.subr.bf16.mxu0 %v199
    %271 = vmatpush1.bf16.msra.mxu0 %v198
    %272 = vmatprep.subr.bf16.mxu0 %v195
    %273 = vmatpush1.bf16.msra.mxu0 %v194
    %274 = vmatprep.subr.bf16.mxu0 0
    %275 = vmatpush2.bf16.msra.mxu0 0
    %276 = vmatprep.subr.bf16.mxu0 0
    %277 = vmatpush2.bf16.msra.mxu0 0
    %278 = vmatprep.subr.bf16.mxu0 0
    %279 = vmatpush2.bf16.msra.mxu0 0
    %280 = vmatprep.subr.bf16.mxu0 0
    %281 = vmatpush2.bf16.msra.mxu0 0
    %282 = vmatprep.subr.bf16.mxu0 0
    %283 = vmatpush2.bf16.msra.mxu0 0
    %284 = vmatprep.subr.bf16.mxu0 0
    %285 = vmatpush2.bf16.msra.mxu0 0
    %286 = vmatprep.subr.bf16.mxu0 0
    %287 = vmatpush2.bf16.msra.mxu0 0
    %288 = vmatprep.subr.bf16.mxu0 0
    %289 = vmatpush2.bf16.msra.mxu0 0
    %290 = vmatprep.mubr.bf16.mxu0 0
    %291 = vmatmul.mubr.bf16.gmra.mxu0 %v43
    %v292 = vpop.f32.mrf.mxu0
    %v293 = vadd.f32 %v81, %v292
    %v294 = vpop.f32.mrf.mxu0
    %v295 = vadd.f32 %v85, %v294
    %v296 = vpop.f32.mrf.mxu0
    %v297 = vadd.f32 %v81, %v296
    %v298 = vpop.f32.mrf.mxu0
    %v299 = vadd.f32 %v85, %v298
    %300 = vdwg.mxu0
    %301 = vmatprep.subr.bf16.mxu0 %v225
    %302 = vmatpush1.bf16.msra.mxu0 %v224
    %303 = vmatprep.subr.bf16.mxu0 %v221
    %304 = vmatpush1.bf16.msra.mxu0 %v220
    %305 = vmatprep.subr.bf16.mxu0 %v217
    %306 = vmatpush1.bf16.msra.mxu0 %v216
    %307 = vmatprep.subr.bf16.mxu0 %v213
    %308 = vmatpush1.bf16.msra.mxu0 %v212
    %309 = vmatprep.subr.bf16.mxu0 %v209
    %310 = vmatpush1.bf16.msra.mxu0 %v208
    %311 = vmatprep.subr.bf16.mxu0 %v205
    %312 = vmatpush1.bf16.msra.mxu0 %v204
    %313 = vmatprep.subr.bf16.mxu0 %v201
    %314 = vmatpush1.bf16.msra.mxu0 %v200
    %315 = vmatprep.subr.bf16.mxu0 %v197
    %316 = vmatpush1.bf16.msra.mxu0 %v196
    %317 = vmatprep.subr.bf16.mxu0 0
    %318 = vmatpush2.bf16.msra.mxu0 0
    %319 = vmatprep.subr.bf16.mxu0 0
    %320 = vmatpush2.bf16.msra.mxu0 0
    %321 = vmatprep.subr.bf16.mxu0 0
    %322 = vmatpush2.bf16.msra.mxu0 0
    %323 = vmatprep.subr.bf16.mxu0 0
    %324 = vmatpush2.bf16.msra.mxu0 0
    %325 = vmatprep.subr.bf16.mxu0 0
    %326 = vmatpush2.bf16.msra.mxu0 0
    %327 = vmatprep.subr.bf16.mxu0 0
    %328 = vmatpush2.bf16.msra.mxu0 0
    %329 = vmatprep.subr.bf16.mxu0 0
    %330 = vmatpush2.bf16.msra.mxu0 0
    %331 = vmatprep.subr.bf16.mxu0 0
    %332 = vmatpush2.bf16.msra.mxu0 0
    %333 = vmatprep.mubr.bf16.mxu0 0
    %334 = vmatmul.mubr.bf16.gmra.mxu0 %v43
    %v335 = vpop.f32.mrf.mxu0
    %v336 = vadd.f32 %v89, %v335
    %v337 = vpop.f32.mrf.mxu0
    %v338 = vadd.f32 %v93, %v337
    %v339 = vpop.f32.mrf.mxu0
    %v340 = vadd.f32 %v89, %v339
    %v341 = vpop.f32.mrf.mxu0
    %v342 = vadd.f32 %v93, %v341
    %343 = vdwg.mxu0
    %v344 = vmul.f32 %v293, 0.5
    %v345 = vmul.f32 %v295, 0.5
    %v346 = vmul.f32 %v336, 0.5
    %v347 = vmul.f32 %v338, 0.5
    %v348 = vmul.f32 %v297, 0.5
    %v349 = vmul.f32 %v299, 0.5
    %v350 = vmul.f32 %v340, 0.5
    %v351 = vmul.f32 %v342, 0.5
    %v352 = vmul.f32 %v293, 0.70710677
    %v353 = vmul.f32 %v295, 0.70710677
    %v354 = vmul.f32 %v336, 0.70710677
    %v355 = vmul.f32 %v338, 0.70710677
    %v356 = vmul.f32 %v297, 0.70710677
    %v357 = vmul.f32 %v299, 0.70710677
    %v358 = vmul.f32 %v340, 0.70710677
    %v359 = vmul.f32 %v342, 0.70710677
    %v360 = verf.f32.pop %v352
    %v361 = verf.f32.pop %v353
    %v362 = verf.f32.pop %v354
    %v363 = verf.f32.pop %v355
    %v364 = verf.f32.pop %v356
    %v365 = verf.f32.pop %v357
    %v366 = verf.f32.pop %v358
    %v367 = verf.f32.pop %v359
    %v368 = vadd.f32 %v360, 1.0
    %v369 = vadd.f32 %v361, 1.0
    %v370 = vadd.f32 %v362, 1.0
    %v371 = vadd.f32 %v363, 1.0
    %v372 = vadd.f32 %v364, 1.0
    %v373 = vadd.f32 %v365, 1.0
    %v374 = vadd.f32 %v366, 1.0
    %v375 = vadd.f32 %v367, 1.0
    %v376 = vmul.f32 %v344, %v368
    %v377 = vmul.f32 %v345, %v369
    %v378 = vmul.f32 %v346, %v370
    %v379 = vmul.f32 %v347, %v371
    %v380 = vmul.f32 %v348, %v372
    %v381 = vmul.f32 %v349, %v373
    %v382 = vmul.f32 %v350, %v374
    %v383 = vmul.f32 %v351, %v375
    %v384 = vpack.c.bf16 %v380, %v376
    %v385 = vpack.c.bf16 %v381, %v377
    %v386 = vpack.c.bf16 %v382, %v378
    %v387 = vpack.c.bf16 %v383, %v379
    %v388 = vld [vmem:[#allocation2] sm:$0xf]
    %v389 = vld [vmem:[#allocation2 + $0x4] sm:$0xf]
    %v390 = vld [vmem:[#allocation2 + $0x8] sm:$0xf]
    %v391 = vld [vmem:[#allocation2 + $0xc] sm:$0xf]
    %v392 = vld [vmem:[#allocation2 + $0x10] sm:$0xf]
    %v393 = vld [vmem:[#allocation2 + $0x14] sm:$0xf]
    %v394 = vld [vmem:[#allocation2 + $0x18] sm:$0xf]
    %v395 = vld [vmem:[#allocation2 + $0x1c] sm:$0xf]
    %v396 = vld [vmem:[#allocation2 + $0x20] sm:$0xf]
    %v397 = vld [vmem:[#allocation2 + $0x24] sm:$0xf]
    %v398 = vld [vmem:[#allocation2 + $0x28] sm:$0xf]
    %v399 = vld [vmem:[#allocation2 + $0x2c] sm:$0xf]
    %v400 = vld [vmem:[#allocation2 + $0x30] sm:$0xf]
    %v401 = vld [vmem:[#allocation2 + $0x34] sm:$0xf]
    %v402 = vld [vmem:[#allocation2 + $0x38] sm:$0xf]
    %v403 = vld [vmem:[#allocation2 + $0x3c] sm:$0xf]
    %v404 = vld [vmem:[#allocation2 + $0x40] sm:$0xf]
    %v405 = vld [vmem:[#allocation2 + $0x44] sm:$0xf]
    %v406 = vld [vmem:[#allocation2 + $0x48] sm:$0xf]
    %v407 = vld [vmem:[#allocation2 + $0x4c] sm:$0xf]
    %v408 = vld [vmem:[#allocation2 + $0x50] sm:$0xf]
    %v409 = vld [vmem:[#allocation2 + $0x54] sm:$0xf]
    %v410 = vld [vmem:[#allocation2 + $0x58] sm:$0xf]
    %v411 = vld [vmem:[#allocation2 + $0x5c] sm:$0xf]
    %v412 = vld [vmem:[#allocation2 + $0x60] sm:$0xf]
    %v413 = vld [vmem:[#allocation2 + $0x64] sm:$0xf]
    %v414 = vld [vmem:[#allocation2 + $0x68] sm:$0xf]
    %v415 = vld [vmem:[#allocation2 + $0x6c] sm:$0xf]
    %v416 = vld [vmem:[#allocation2 + $0x70] sm:$0xf]
    %v417 = vld [vmem:[#allocation2 + $0x74] sm:$0xf]
    %v418 = vld [vmem:[#allocation2 + $0x78] sm:$0xf]
    %v419 = vld [vmem:[#allocation2 + $0x7c] sm:$0xf]
    %v420 = vld [vmem:[#allocation2 + $0x80] sm:$0xf]
    %v421 = vld [vmem:[#allocation2 + $0x84] sm:$0xf]
    %v422 = vld [vmem:[#allocation2 + $0x88] sm:$0xf]
    %v423 = vld [vmem:[#allocation2 + $0x8c] sm:$0xf]
    %v424 = vld [vmem:[#allocation2 + $0x90] sm:$0xf]
    %v425 = vld [vmem:[#allocation2 + $0x94] sm:$0xf]
    %v426 = vld [vmem:[#allocation2 + $0x98] sm:$0xf]
    %v427 = vld [vmem:[#allocation2 + $0x9c] sm:$0xf]
    %v428 = vld [vmem:[#allocation2 + $0xa0] sm:$0xf]
    %v429 = vld [vmem:[#allocation2 + $0xa4] sm:$0xf]
    %v430 = vld [vmem:[#allocation2 + $0xa8] sm:$0xf]
    %v431 = vld [vmem:[#allocation2 + $0xac] sm:$0xf]
    %v432 = vld [vmem:[#allocation2 + $0xb0] sm:$0xf]
    %v433 = vld [vmem:[#allocation2 + $0xb4] sm:$0xf]
    %v434 = vld [vmem:[#allocation2 + $0xb8] sm:$0xf]
    %v435 = vld [vmem:[#allocation2 + $0xbc] sm:$0xf]
    %v436 = vld [vmem:[#allocation2 + $0xc0] sm:$0xf]
    %v437 = vld [vmem:[#allocation2 + $0xc4] sm:$0xf]
    %v438 = vld [vmem:[#allocation2 + $0xc8] sm:$0xf]
    %v439 = vld [vmem:[#allocation2 + $0xcc] sm:$0xf]
    %v440 = vld [vmem:[#allocation2 + $0xd0] sm:$0xf]
    %v441 = vld [vmem:[#allocation2 + $0xd4] sm:$0xf]
    %v442 = vld [vmem:[#allocation2 + $0xd8] sm:$0xf]
    %v443 = vld [vmem:[#allocation2 + $0xdc] sm:$0xf]
    %v444 = vld [vmem:[#allocation2 + $0xe0] sm:$0xf]
    %v445 = vld [vmem:[#allocation2 + $0xe4] sm:$0xf]
    %v446 = vld [vmem:[#allocation2 + $0xe8] sm:$0xf]
    %v447 = vld [vmem:[#allocation2 + $0xec] sm:$0xf]
    %v448 = vld [vmem:[#allocation2 + $0xf0] sm:$0xf]
    %v449 = vld [vmem:[#allocation2 + $0xf4] sm:$0xf]
    %v450 = vld [vmem:[#allocation2 + $0xf8] sm:$0xf]
    %v451 = vld [vmem:[#allocation2 + $0xfc] sm:$0xf]
    %v452 = vld [vmem:[%s4] sm:$0x1]
    %v454 = vlaneseq
    %v455 = vshrl.u32 %v454, 7
    %v456 = vsub.s32 0, %v455
    %v457 = vrot.slane %v452, %v456
    %v523 = vunpack.c.l.b16 %v388
    %v524 = vunpack.c.l.b16 %v389
    %v525 = vunpack.c.l.b16 %v390
    %v526 = vunpack.c.l.b16 %v391
    %v527 = vunpack.c.l.b16 %v392
    %v528 = vunpack.c.l.b16 %v393
    %v529 = vunpack.c.l.b16 %v394
    %v530 = vunpack.c.l.b16 %v395
    %v531 = vunpack.c.l.b16 %v396
    %v532 = vunpack.c.l.b16 %v397
    %v533 = vunpack.c.l.b16 %v398
    %v534 = vunpack.c.l.b16 %v399
    %v535 = vunpack.c.l.b16 %v400
    %v536 = vunpack.c.l.b16 %v401
    %v537 = vunpack.c.l.b16 %v402
    %v538 = vunpack.c.l.b16 %v403
    %v539 = vunpack.c.l.b16 %v404
    %v540 = vunpack.c.l.b16 %v405
    %v541 = vunpack.c.l.b16 %v406
    %v542 = vunpack.c.l.b16 %v407
    %v543 = vunpack.c.l.b16 %v408
    %v544 = vunpack.c.l.b16 %v409
    %v545 = vunpack.c.l.b16 %v410
    %v546 = vunpack.c.l.b16 %v411
    %v547 = vunpack.c.l.b16 %v412
    %v548 = vunpack.c.l.b16 %v413
    %v549 = vunpack.c.l.b16 %v414
    %v550 = vunpack.c.l.b16 %v415
    %v551 = vunpack.c.l.b16 %v416
    %v552 = vunpack.c.l.b16 %v417
    %v553 = vunpack.c.l.b16 %v418
    %v554 = vunpack.c.l.b16 %v419
    %v555 = vunpack.c.l.b16 %v420
    %v556 = vunpack.c.l.b16 %v421
    %v557 = vunpack.c.l.b16 %v422
    %v558 = vunpack.c.l.b16 %v423
    %v559 = vunpack.c.l.b16 %v424
    %v560 = vunpack.c.l.b16 %v425
    %v561 = vunpack.c.l.b16 %v426
    %v562 = vunpack.c.l.b16 %v427
    %v563 = vunpack.c.l.b16 %v428
    %v564 = vunpack.c.l.b16 %v429
    %v565 = vunpack.c.l.b16 %v430
    %v566 = vunpack.c.l.b16 %v431
    %v567 = vunpack.c.l.b16 %v432
    %v568 = vunpack.c.l.b16 %v433
    %v569 = vunpack.c.l.b16 %v434
    %v570 = vunpack.c.l.b16 %v435
    %v571 = vunpack.c.l.b16 %v436
    %v572 = vunpack.c.l.b16 %v437
    %v573 = vunpack.c.l.b16 %v438
    %v574 = vunpack.c.l.b16 %v439
    %v575 = vunpack.c.l.b16 %v440
    %v576 = vunpack.c.l.b16 %v441
    %v577 = vunpack.c.l.b16 %v442
    %v578 = vunpack.c.l.b16 %v443
    %v579 = vunpack.c.l.b16 %v444
    %v580 = vunpack.c.l.b16 %v445
    %v581 = vunpack.c.l.b16 %v446
    %v582 = vunpack.c.l.b16 %v447
    %v583 = vunpack.c.l.b16 %v448
    %v584 = vunpack.c.l.b16 %v449
    %v585 = vunpack.c.l.b16 %v450
    %v586 = vunpack.c.l.b16 %v451
    %v587 = vpack.c.b16 %v524, %v523
    %v588 = vpack.c.b16 %v526, %v525
    %v589 = vpack.c.b16 %v528, %v527
    %v590 = vpack.c.b16 %v530, %v529
    %v591 = vpack.c.b16 %v532, %v531
    %v592 = vpack.c.b16 %v534, %v533
    %v593 = vpack.c.b16 %v536, %v535
    %v594 = vpack.c.b16 %v538, %v537
    %v595 = vpack.c.b16 %v540, %v539
    %v596 = vpack.c.b16 %v542, %v541
    %v597 = vpack.c.b16 %v544, %v543
    %v598 = vpack.c.b16 %v546, %v545
    %v599 = vpack.c.b16 %v548, %v547
    %v600 = vpack.c.b16 %v550, %v549
    %v601 = vpack.c.b16 %v552, %v551
    %v602 = vpack.c.b16 %v554, %v553
    %v603 = vpack.c.b16 %v556, %v555
    %v604 = vpack.c.b16 %v558, %v557
    %v605 = vpack.c.b16 %v560, %v559
    %v606 = vpack.c.b16 %v562, %v561
    %v607 = vpack.c.b16 %v564, %v563
    %v608 = vpack.c.b16 %v566, %v565
    %v609 = vpack.c.b16 %v568, %v567
    %v610 = vpack.c.b16 %v570, %v569
    %v611 = vpack.c.b16 %v572, %v571
    %v612 = vpack.c.b16 %v574, %v573
    %v613 = vpack.c.b16 %v576, %v575
    %v614 = vpack.c.b16 %v578, %v577
    %v615 = vpack.c.b16 %v580, %v579
    %v616 = vpack.c.b16 %v582, %v581
    %v617 = vpack.c.b16 %v584, %v583
    %v618 = vpack.c.b16 %v586, %v585
    %651 = vmatprep.subr.bf16.mxu0 0
    %652 = vmatpush1.bf16.msra.mxu0 %v594
    %653 = vmatprep.subr.bf16.mxu0 0
    %654 = vmatpush1.bf16.msra.mxu0 %v593
    %655 = vmatprep.subr.bf16.mxu0 0
    %656 = vmatpush1.bf16.msra.mxu0 %v592
    %657 = vmatprep.subr.bf16.mxu0 0
    %658 = vmatpush1.bf16.msra.mxu0 %v591
    %659 = vmatprep.subr.bf16.mxu0 0
    %660 = vmatpush1.bf16.msra.mxu0 %v590
    %661 = vmatprep.subr.bf16.mxu0 0
    %662 = vmatpush1.bf16.msra.mxu0 %v589
    %663 = vmatprep.subr.bf16.mxu0 0
    %664 = vmatpush1.bf16.msra.mxu0 %v588
    %665 = vmatprep.subr.bf16.mxu0 0
    %666 = vmatpush1.bf16.msra.mxu0 %v587
    %667 = vmatprep.subr.bf16.mxu0 0
    %668 = vmatpush2.bf16.msra.mxu0 %v602
    %669 = vmatprep.subr.bf16.mxu0 0
    %670 = vmatpush2.bf16.msra.mxu0 %v601
    %671 = vmatprep.subr.bf16.mxu0 0
    %672 = vmatpush2.bf16.msra.mxu0 %v600
    %673 = vmatprep.subr.bf16.mxu0 0
    %674 = vmatpush2.bf16.msra.mxu0 %v599
    %675 = vmatprep.subr.bf16.mxu0 0
    %676 = vmatpush2.bf16.msra.mxu0 %v598
    %677 = vmatprep.subr.bf16.mxu0 0
    %678 = vmatpush2.bf16.msra.mxu0 %v597
    %679 = vmatprep.subr.bf16.mxu0 0
    %680 = vmatpush2.bf16.msra.mxu0 %v596
    %681 = vmatprep.subr.bf16.mxu0 0
    %682 = vmatpush2.bf16.msra.mxu0 %v595
    %683 = vmatprep.mubr.bf16.mxu0 %v385
    %684 = vmatmul.mubr.bf16.gmra.mxu0 %v384
    %v685 = vpop.f32.mrf.mxu0
    %v686 = vadd.f32 %v457, %v685
    %v687 = vpop.f32.mrf.mxu0
    %v688 = vpop.f32.mrf.mxu0
    %v689 = vadd.f32 %v457, %v688
    %v690 = vpop.f32.mrf.mxu0
    %691 = vdwg.mxu0
    %692 = vmatprep.subr.bf16.mxu0 0
    %693 = vmatpush1.bf16.msra.mxu0 %v610
    %694 = vmatprep.subr.bf16.mxu0 0
    %695 = vmatpush1.bf16.msra.mxu0 %v609
    %696 = vmatprep.subr.bf16.mxu0 0
    %697 = vmatpush1.bf16.msra.mxu0 %v608
    %698 = vmatprep.subr.bf16.mxu0 0
    %699 = vmatpush1.bf16.msra.mxu0 %v607
    %700 = vmatprep.subr.bf16.mxu0 0
    %701 = vmatpush1.bf16.msra.mxu0 %v606
    %702 = vmatprep.subr.bf16.mxu0 0
    %703 = vmatpush1.bf16.msra.mxu0 %v605
    %704 = vmatprep.subr.bf16.mxu0 0
    %705 = vmatpush1.bf16.msra.mxu0 %v604
    %706 = vmatprep.subr.bf16.mxu0 0
    %707 = vmatpush1.bf16.msra.mxu0 %v603
    %708 = vmatprep.subr.bf16.mxu0 0
    %709 = vmatpush2.bf16.msra.mxu0 %v618
    %710 = vmatprep.subr.bf16.mxu0 0
    %711 = vmatpush2.bf16.msra.mxu0 %v617
    %712 = vmatprep.subr.bf16.mxu0 0
    %713 = vmatpush2.bf16.msra.mxu0 %v616
    %714 = vmatprep.subr.bf16.mxu0 0
    %715 = vmatpush2.bf16.msra.mxu0 %v615
    %716 = vmatprep.subr.bf16.mxu0 0
    %717 = vmatpush2.bf16.msra.mxu0 %v614
    %718 = vmatprep.subr.bf16.mxu0 0
    %719 = vmatpush2.bf16.msra.mxu0 %v613
    %720 = vmatprep.subr.bf16.mxu0 0
    %721 = vmatpush2.bf16.msra.mxu0 %v612
    %722 = vmatprep.subr.bf16.mxu0 0
    %723 = vmatpush2.bf16.msra.mxu0 %v611
    %724 = vmatprep.mubr.bf16.mxu0 %v387
    %725 = vmatmul.mubr.bf16.gmra.mxu0 %v386
    %v726 = vpop.f32.mrf.mxu0
    %v727 = vadd.f32 %v686, %v726
    %v728 = vpop.f32.mrf.mxu0
    %v729 = vpop.f32.mrf.mxu0
    %v730 = vadd.f32 %v689, %v729
    %v731 = vpop.f32.mrf.mxu0
    %732 = vdwg.mxu0
    %v733 = vadd.f32 %v727, %v41
    %v734 = vadd.f32 %v730, %v42
    %v735 = vld [vmem:[%s5] sm:$0x1]
    %v736 = vld [vmem:[%s6] sm:$0x1]
    %737 = vadd.xlane.f32.xlu0 %v733
    %v738 = vpop.xlane.xlu0 %737
    %739 = vadd.xlane.f32.xlu0 %v734
    %v740 = vpop.xlane.xlu0 %739
    %v741 = vrcp.pop 128.0
    %v742 = vmul.f32 %v738, %v741
    %v743 = vmul.f32 %v740, %v741
    %v744 = vsub.f32 %v733, %v742
    %v745 = vsub.f32 %v734, %v743
    %v746 = vmul.f32 %v744, %v744
    %v747 = vmul.f32 %v745, %v745
    %748 = vadd.xlane.f32.xlu0 %v746
    %v749 = vpop.xlane.xlu0 %748
    %750 = vadd.xlane.f32.xlu0 %v747
    %v751 = vpop.xlane.xlu0 %750
    %v752 = vmul.f32 %v749, %v741
    %v753 = vmul.f32 %v751, %v741
    %v754 = vadd.f32 %v752, 1e-12
    %v755 = vadd.f32 %v753, 1e-12
    %v756 = vrsqrt.pop %v754
    %v757 = vrsqrt.pop %v755
    %v758 = vmul.f32 %v744, %v756
    %v759 = vmul.f32 %v745, %v757
    %v761 = vlaneseq
    %v762 = vshrl.u32 %v761, 7
    %v763 = vsub.s32 0, %v762
    %v764 = vrot.slane %v735, %v763
    %v766 = vmul.f32 %v758, %v764
    %v767 = vmul.f32 %v759, %v764
    %v769 = vlaneseq
    %v770 = vshrl.u32 %v769, 7
    %v771 = vsub.s32 0, %v770
    %v772 = vrot.slane %v736, %v771
    %v774 = vadd.f32 %v766, %v772
    %v775 = vadd.f32 %v767, %v772
    %776 = vst [vmem:[%s7] sm:$0xff] %v774
    %777 = vst [vmem:[%s7 + $0x8] sm:$0xff] %v775
    // Predicated region
    $region34: #{vector_bert_forward.8} parent=1 // pred_check
      _
    $region35: #{vector_bert_forward.8} parent=1 // pred_check_branch
      %779 = sbr.rel (0) target = $region37
    $region36: #{vector_bert_forward.8} parent=1 // pred_region
      _
    $region37: #{vector_bert_forward.8} parent=1 // pred_fallthru
      _
    // Predicated region
    $region38: #{vector_bert_forward.8} parent=1 // pred_check
      _
    $region39: #{vector_bert_forward.8} parent=1 // pred_check_branch
      %781 = sbr.rel (0) target = $region41
    $region40: #{vector_bert_forward.8} parent=1 // pred_region
      _
    $region41: #{vector_bert_forward.8} parent=1 // pred_fallthru
      _
    %782 = vsyncpa [#allocation3], 1

// kernel: vector_bert_forward.9
$region0: #{vector_bert_forward.9}
  #allocation0 [shape = 'u32[]', space=smem, size = 0x4, offset = 0x4, fixed_abs, tag = 'smem constant byte address 0x4 - core index']
  #allocation1 [shape = 'u32[144,128]{1,0:T(1,128)}', space=vmem, size = 0x12000, scoped, tag = 'internal scratch']
  %s0 = inlined_call_operand.vmem [shape: f32[16,128], index: 0, kind: input, shape index: {}]
  %s1 = inlined_call_operand.vmem [shape: bf16[128,384], index: 1, kind: input, shape index: {}]
  %s2 = inlined_call_operand.vmem [shape: f32[1,384], index: 2, kind: input, shape index: {}]
  %s3 = inlined_call_operand.vmem [shape: bf16[128,128], index: 3, kind: input, shape index: {}]
  %s4 = inlined_call_operand.vmem [shape: f32[1,128], index: 4, kind: input, shape index: {}]
  %s5 = inlined_call_operand.vmem [shape: f32[1,128], index: 5, kind: input, shape index: {}]
  %s6 = inlined_call_operand.vmem [shape: f32[1,128], index: 6, kind: input, shape index: {}]
  %s7 = inlined_call_operand.vmem [shape: f32[16,128], index: 7, kind: output, shape index: {}]
  %s8 = sld [smem:[#allocation0]]
  $region61: #{vector_bert_forward.9} parent=0
    _
  %s10 = ssub.s32 1, %s8
  %s11 = scalar_select 0, %s10, %s8
  loop: start=0, step=1, limit=4
  $region2: #{vector_bert_forward.9} parent=0 // loop_pre_header
    _
  $region3: #{vector_bert_forward.9} parent=0 // loop_header
    %s13 = sphi 0, %s17
    %p14 = scmp.ge.s32.totalorder %s13, 4
    %s23 = sphi 0, %s25
    %s26 = sphi 0, %s23
    %s27 = sphi 0, %s26
    %s43 = sphi 0, %s27
    %s47 = sphi 0, %s47
    %s49 = sphi 0, %s47
    %s50 = sphi 0, %s49
    %s64 = sphi 0, %s50
    %s68 = sphi 0, %s68
    %s70 = sphi 0, %s68
    %s71 = sphi 0, %s70
    %s85 = sphi 0, %s71
    %s89 = sphi 0, %s89
    %s91 = sphi 0, %s89
    %s92 = sphi 0, %s91
    %s106 = sphi 0, %s92
    %s110 = sphi 0, %s110
    %s112 = sphi 0, %s110
    %s113 = sphi 0, %s112
    %s127 = sphi 0, %s113
    %s131 = sphi 0, %s131
    %s133 = sphi 0, %s131
    %s134 = sphi 0, %s133
    %s148 = sphi 0, %s134
    %s152 = sphi 0, %s152
    %s154 = sphi 0, %s152
    %s155 = sphi 0, %s154
    %s169 = sphi 0, %s155
    %s175 = sphi 0, %s177
    %s178 = sphi 0, %s175
    %s179 = sphi 0, %s178
    %s195 = sphi 0, %s179
  $region4: #{vector_bert_forward.9} parent=0 // loop_header_branch
    %16 = sbr.rel (%p14) target = $region8
  $region5: #{vector_bert_forward.9} parent=0 // loop_body
    %s18 = ssub.s32 %s13, 1
    %s19 = ssub.s32 %s13, 2
    %s20 = sadd.s32 %s13, 1
    %s21 = ssub.s32 %s13, %s20
    %p22 = scmp.eq.s32.totalorder %s21, 0
    %s24 = sadd.s32 %s23, 1
    %s25 = scalar_select %p22, %s23, %s24
    %p28 = pneg %p22
    %p29 = scmp.eq.s32.totalorder %s13, 1
    %p30 = por %p28, %p29
    %p31 = scmp.ne.s32.totalorder %s23, %s26
    %p32 = scmp.eq.s32.totalorder %s13, 0
    %p33 = por %p31, %p32
    %p34 = scmp.ne.s32.totalorder %s23, %s26
    %p35 = scmp.eq.s32.totalorder %s18, 1
    %p36 = por %p34, %p35
    %p37 = scmp.ne.s32.totalorder %s26, %s27
    %p38 = scmp.eq.s32.totalorder %s18, 0
    %p39 = por %p37, %p38
    %p40 = scmp.ne.s32.totalorder %s26, %s27
    %p41 = scmp.eq.s32.totalorder %s19, 1
    %p42 = por %p40, %p41
    %p44 = scmp.ne.s32.totalorder %s27, %s43
    %p45 = scmp.eq.s32.totalorder %s19, 0
    %p46 = por %p44, %p45
    %s48 = sadd.s32 %s47, 1
    %p51 = scmp.eq.s32.totalorder %s13, 1
    %p52 = scmp.ne.s32.totalorder %s47, %s49
    %p53 = scmp.eq.s32.totalorder %s13, 0
    %p54 = por %p52, %p53
    %p55 = scmp.ne.s32.totalorder %s47, %s49
    %p56 = scmp.eq.s32.totalorder %s18, 1
    %p57 = por %p55, %p56
    %p58 = scmp.ne.s32.totalorder %s49, %s50
    %p59 = scmp.eq.s32.totalorder %s18, 0
    %p60 = por %p58, %p59
    %p61 = scmp.ne.s32.totalorder %s49, %s50
    %p62 = scmp.eq.s32.totalorder %s19, 1
    %p63 = por %p61, %p62
    %p65 = scmp.ne.s32.totalorder %s50, %s64
    %p66 = scmp.eq.s32.totalorder %s19, 0
    %p67 = por %p65, %p66
    %s69 = sadd.s32 %s68, 1
    %p72 = scmp.eq.s32.totalorder %s13, 1
    %p73 = scmp.ne.s32.totalorder %s68, %s70
    %p74 = scmp.eq.s32.totalorder %s13, 0
    %p75 = por %p73, %p74
    %p76 = scmp.ne.s32.totalorder %s68, %s70
    %p77 = scmp.eq.s32.totalorder %s18, 1
    %p78 = por %p76, %p77
    %p79 = scmp.ne.s32.totalorder %s70, %s71
    %p80 = scmp.eq.s32.totalorder %s18, 0
    %p81 = por %p79, %p80
    %p82 = scmp.ne.s32.totalorder %s70, %s71
    %p83 = scmp.eq.s32.totalorder %s19, 1
    %p84 = por %p82, %p83
    %p86 = scmp.ne.s32.totalorder %s71, %s85
    %p87 = scmp.eq.s32.totalorder %s19, 0
    %p88 = por %p86, %p87
    %s90 = sadd.s32 %s89, 1
    %p93 = scmp.eq.s32.totalorder %s13, 1
    %p94 = scmp.ne.s32.totalorder %s89, %s91
    %p95 = scmp.eq.s32.totalorder %s13, 0
    %p96 = por %p94, %p95
    %p97 = scmp.ne.s32.totalorder %s89, %s91
    %p98 = scmp.eq.s32.totalorder %s18, 1
    %p99 = por %p97, %p98
    %p100 = scmp.ne.s32.totalorder %s91, %s92
    %p101 = scmp.eq.s32.totalorder %s18, 0
    %p102 = por %p100, %p101
    %p103 = scmp.ne.s32.totalorder %s91, %s92
    %p104 = scmp.eq.s32.totalorder %s19, 1
    %p105 = por %p103, %p104
    %p107 = scmp.ne.s32.totalorder %s92, %s106
    %p108 = scmp.eq.s32.totalorder %s19, 0
    %p109 = por %p107, %p108
    %s111 = sadd.s32 %s110, 1
    %p114 = scmp.eq.s32.totalorder %s13, 1
    %p115 = scmp.ne.s32.totalorder %s110, %s112
    %p116 = scmp.eq.s32.totalorder %s13, 0
    %p117 = por %p115, %p116
    %p118 = scmp.ne.s32.totalorder %s110, %s112
    %p119 = scmp.eq.s32.totalorder %s18, 1
    %p120 = por %p118, %p119
    %p121 = scmp.ne.s32.totalorder %s112, %s113
    %p122 = scmp.eq.s32.totalorder %s18, 0
    %p123 = por %p121, %p122
    %p124 = scmp.ne.s32.totalorder %s112, %s113
    %p125 = scmp.eq.s32.totalorder %s19, 1
    %p126 = por %p124, %p125
    %p128 = scmp.ne.s32.totalorder %s113, %s127
    %p129 = scmp.eq.s32.totalorder %s19, 0
    %p130 = por %p128, %p129
    %s132 = sadd.s32 %s131, 1
    %p135 = scmp.eq.s32.totalorder %s13, 1
    %p136 = scmp.ne.s32.totalorder %s131, %s133
    %p137 = scmp.eq.s32.totalorder %s13, 0
    %p138 = por %p136, %p137
    %p139 = scmp.ne.s32.totalorder %s131, %s133
    %p140 = scmp.eq.s32.totalorder %s18, 1
    %p141 = por %p139, %p140
    %p142 = scmp.ne.s32.totalorder %s133, %s134
    %p143 = scmp.eq.s32.totalorder %s18, 0
    %p144 = por %p142, %p143
    %p145 = scmp.ne.s32.totalorder %s133, %s134
    %p146 = scmp.eq.s32.totalorder %s19, 1
    %p147 = por %p145, %p146
    %p149 = scmp.ne.s32.totalorder %s134, %s148
    %p150 = scmp.eq.s32.totalorder %s19, 0
    %p151 = por %p149, %p150
    %s153 = sadd.s32 %s152, 1
    %p156 = scmp.eq.s32.totalorder %s13, 1
    %p157 = scmp.ne.s32.totalorder %s152, %s154
    %p158 = scmp.eq.s32.totalorder %s13, 0
    %p159 = por %p157, %p158
    %p160 = scmp.ne.s32.totalorder %s152, %s154
    %p161 = scmp.eq.s32.totalorder %s18, 1
    %p162 = por %p160, %p161
    %p163 = scmp.ne.s32.totalorder %s154, %s155
    %p164 = scmp.eq.s32.totalorder %s18, 0
    %p165 = por %p163, %p164
    %p166 = scmp.ne.s32.totalorder %s154, %s155
    %p167 = scmp.eq.s32.totalorder %s19, 1
    %p168 = por %p166, %p167
    %p170 = scmp.ne.s32.totalorder %s155, %s169
    %p171 = scmp.eq.s32.totalorder %s19, 0
    %p172 = por %p170, %p171
    %s173 = ssub.s32 %s13, %s20
    %p174 = scmp.eq.s32.totalorder %s173, 0
    %s176 = sadd.s32 %s175, 1
    %s177 = scalar_select %p174, %s175, %s176
    %p180 = pneg %p174
    %p181 = scmp.eq.s32.totalorder %s13, 1
    %p182 = por %p180, %p181
    %p183 = scmp.ne.s32.totalorder %s175, %s178
    %p184 = scmp.eq.s32.totalorder %s13, 0
    %p185 = por %p183, %p184
    %p186 = scmp.ne.s32.totalorder %s175, %s178
    %p187 = scmp.eq.s32.totalorder %s18, 1
    %p188 = por %p186, %p187
    %p189 = scmp.ne.s32.totalorder %s178, %s179
    %p190 = scmp.eq.s32.totalorder %s18, 0
    %p191 = por %p189, %p190
    %p192 = scmp.ne.s32.totalorder %s178, %s179
    %p193 = scmp.eq.s32.totalorder %s19, 1
    %p194 = por %p192, %p193
    %p196 = scmp.ne.s32.totalorder %s179, %s195
    %p197 = scmp.eq.s32.totalorder %s19, 0
    %p198 = por %p196, %p197
    %p199 = scmp.le.s32.totalorder 1, %s13
    %p200 = scmp.lt.s32.totalorder %s13, 3
    %p201 = pnand %p199, %p200
    %p202 = pneg %p201
    // Predicated region
    $region9: #{vector_bert_forward.9} parent=5 // pred_check
      _
    $region10: #{vector_bert_forward.9} parent=5 // pred_check_branch
      %204 = sbr.rel (%p201) target = $region12
    $region11: #{vector_bert_forward.9} parent=5 // pred_region
      %s205 = ssub.s32 %s13, 1
      // Predicated region
      $region13: #{vector_bert_forward.9} parent=11 // pred_check
        %p206 = pneg %p60
      $region14: #{vector_bert_forward.9} parent=11 // pred_check_branch
        %208 = sbr.rel (%p206) target = $region16
      $region15: #{vector_bert_forward.9} parent=11 // pred_region
        _
      $region16: #{vector_bert_forward.9} parent=11 // pred_fallthru
        _
      // Predicated region
      $region17: #{vector_bert_forward.9} parent=11 // pred_check
        %p209 = pneg %p81
      $region18: #{vector_bert_forward.9} parent=11 // pred_check_branch
        %211 = sbr.rel (%p209) target = $region20
      $region19: #{vector_bert_forward.9} parent=11 // pred_region
        _
      $region20: #{vector_bert_forward.9} parent=11 // pred_fallthru
        _
      // Predicated region
      $region21: #{vector_bert_forward.9} parent=11 // pred_check
        %p212 = pneg %p102
      $region22: #{vector_bert_forward.9} parent=11 // pred_check_branch
        %214 = sbr.rel (%p212) target = $region24
      $region23: #{vector_bert_forward.9} parent=11 // pred_region
        _
      $region24: #{vector_bert_forward.9} parent=11 // pred_fallthru
        _
      // Predicated region
      $region25: #{vector_bert_forward.9} parent=11 // pred_check
        %p215 = pneg %p123
      $region26: #{vector_bert_forward.9} parent=11 // pred_check_branch
        %217 = sbr.rel (%p215) target = $region28
      $region27: #{vector_bert_forward.9} parent=11 // pred_region
        _
      $region28: #{vector_bert_forward.9} parent=11 // pred_fallthru
        _
      // Predicated region
      $region29: #{vector_bert_forward.9} parent=11 // pred_check
        %p218 = pneg %p144
      $region30: #{vector_bert_forward.9} parent=11 // pred_check_branch
        %220 = sbr.rel (%p218) target = $region32
      $region31: #{vector_bert_forward.9} parent=11 // pred_region
        _
      $region32: #{vector_bert_forward.9} parent=11 // pred_fallthru
        _
      // Predicated region
      $region33: #{vector_bert_forward.9} parent=11 // pred_check
        %p221 = pneg %p165
      $region34: #{vector_bert_forward.9} parent=11 // pred_check_branch
        %223 = sbr.rel (%p221) target = $region36
      $region35: #{vector_bert_forward.9} parent=11 // pred_region
        _
      $region36: #{vector_bert_forward.9} parent=11 // pred_fallthru
        _
    $region12: #{vector_bert_forward.9} parent=5 // pred_fallthru
      _
    %p224 = scmp.lt.s32.totalorder %s13, 2
    // Predicated region
    $region37: #{vector_bert_forward.9} parent=5 // pred_check
      %p225 = pneg %p224
    $region38: #{vector_bert_forward.9} parent=5 // pred_check_branch
      %227 = sbr.rel (%p225) target = $region40
    $region39: #{vector_bert_forward.9} parent=5 // pred_region
      // Predicated region
      $region41: #{vector_bert_forward.9} parent=39 // pred_check
        %p228 = pneg %p33
      $region42: #{vector_bert_forward.9} parent=39 // pred_check_branch
        %230 = sbr.rel (%p228) target = $region44
      $region43: #{vector_bert_forward.9} parent=39 // pred_region
        %p231 = scmp.lt.s32.totalorder %s13, 1
        %s232 = scalar_select %p231, %s13, 1
        %s233 = smul.addr %s232, 8
        %s234 = scalar_lea.vmem %s0, %s233
      $region44: #{vector_bert_forward.9} parent=39 // pred_fallthru
        _
    $region40: #{vector_bert_forward.9} parent=5 // pred_fallthru
      _
    %p235 = scmp.le.s32.totalorder 1, %s13
    %p236 = scmp.lt.s32.totalorder %s13, 3
    %p237 = pnand %p235, %p236
    %p238 = pneg %p237
    // Predicated region
    $region45: #{vector_bert_forward.9} parent=5 // pred_check
      _
    $region46: #{vector_bert_forward.9} parent=5 // pred_check_branch
      %240 = sbr.rel (%p237) target = $region48
    $region47: #{vector_bert_forward.9} parent=5 // pred_region
      %s241 = ssub.s32 %s13, 1
      %p242 = scmp.lt.s32.totalorder %s18, 1
      %s243 = scalar_select %p242, %s18, 1
      %s244 = smul.addr %s243, 8
      %s245 = scalar_lea.vmem %s0, %s244
      %p246 = pneg %p39
      %p247 = pneg %p36
      %p248 = pneg %p60
      %p249 = pneg %p57
      %p250 = pneg %p81
      %p251 = pneg %p78
      %p252 = pneg %p102
      %p253 = pneg %p99
      %p254 = pneg %p123
      %p255 = pneg %p120
      %p256 = pneg %p144
      %p257 = pneg %p141
      %p258 = pneg %p165
      %p259 = pneg %p162
      %p260 = pneg %p191
      %p261 = pneg %p188
      %p262 = scmp.lt.s32.totalorder %s18, 1
      %s263 = scalar_select %p262, %s18, 1
      %s264 = smul.addr %s263, 8
      %s265 = scalar_lea.vmem %s7, %s264
      %p266 = scmp.lt.s32.totalorder %s18, 1
      %s267 = scalar_select %p266, %s18, 1
      %s268 = smul.addr %s267, 8
      %s269 = scalar_lea.vmem %s0, %s268
      %p270 = scmp.lt.s32.totalorder %s18, 1
      %s271 = scalar_select %p270, %s18, 1
      %s272 = smul.addr %s271, 8
      %s273 = scalar_lea.vmem %s7, %s272
      %v275 = vld [vmem:[%s269] sm:$0xff]
      %v276 = vpack.c.bf16 %v275, %v275
      %v277 = vld [vmem:[%s1] sm:$0xff]
      %v278 = vld [vmem:[%s1 + $0x8] sm:$0xf]
      %v279 = vld [vmem:[%s1 + $0xc] sm:$0xff]
      %v280 = vld [vmem:[%s1 + $0x14] sm:$0xf]
      %v281 = vld [vmem:[%s1 + $0x18] sm:$0xff]
      %v282 = vld [vmem:[%s1 + $0x20] sm:$0xf]
      %v283 = vld [vmem:[%s1 + $0x24] sm:$0xff]
      %v284 = vld [vmem:[%s1 + $0x2c] sm:$0xf]
      %v285 = vld [vmem:[%s1 + $0x30] sm:$0xff]
      %v286 = vld [vmem:[%s1 + $0x38] sm:$0xf]
      %v287 = vld [vmem:[%s1 + $0x3c] sm:$0xff]
      %v288 = vld [vmem:[%s1 + $0x44] sm:$0xf]
      %v289 = vld [vmem:[%s1 + $0x48] sm:$0xff]
      %v290 = vld [vmem:[%s1 + $0x50] sm:$0xf]
      %v291 = vld [vmem:[%s1 + $0x54] sm:$0xff]
      %v292 = vld [vmem:[%s1 + $0x5c] sm:$0xf]
      %v293 = vld [vmem:[%s1 + $0x60] sm:$0xff]
      %v294 = vld [vmem:[%s1 + $0x68] sm:$0xf]
      %v295 = vld [vmem:[%s1 + $0x6c] sm:$0xff]
      %v296 = vld [vmem:[%s1 + $0x74] sm:$0xf]
      %v297 = vld [vmem:[%s1 + $0x78] sm:$0xff]
      %v298 = vld [vmem:[%s1 + $0x80] sm:$0xf]
      %v299 = vld [vmem:[%s1 + $0x84] sm:$0xff]
      %v300 = vld [vmem:[%s1 + $0x8c] sm:$0xf]
      %v301 = vld [vmem:[%s1 + $0x90] sm:$0xff]
      %v302 = vld [vmem:[%s1 + $0x98] sm:$0xf]
      %v303 = vld [vmem:[%s1 + $0x9c] sm:$0xff]
      %v304 = vld [vmem:[%s1 + $0xa4] sm:$0xf]
      %v305 = vld [vmem:[%s1 + $0xa8] sm:$0xff]
      %v306 = vld [vmem:[%s1 + $0xb0] sm:$0xf]
      %v307 = vld [vmem:[%s1 + $0xb4] sm:$0xff]
      %v308 = vld [vmem:[%s1 + $0xbc] sm:$0xf]
      %v309 = vld [vmem:[%s2] sm:$0x7]
      %v311 = vlaneseq
      %v312 = vshrl.u32 %v311, 7
      %v313 = vsub.s32 0, %v312
      %v314 = vrot.slane %v309, %v313
      %v315 = vlaneseq
      %v316 = vshrl.u32 %v315, 7
      %v317 = vsub.s32 1, %v316
      %v318 = vrot.slane %v309, %v317
      %v319 = vlaneseq
      %v320 = vshrl.u32 %v319, 7
      %v321 = vsub.s32 2, %v320
      %v322 = vrot.slane %v309, %v321
      %v358 = vunpack.c.l.b16 %v277
      %v359 = vunpack.c.h.b16 %v277
      %v360 = vunpack.c.l.b16 %v278
      %v361 = vunpack.c.l.b16 %v279
      %v362 = vunpack.c.h.b16 %v279
      %v363 = vunpack.c.l.b16 %v280
      %v364 = vunpack.c.l.b16 %v281
      %v365 = vunpack.c.h.b16 %v281
      %v366 = vunpack.c.l.b16 %v282
      %v367 = vunpack.c.l.b16 %v283
      %v368 = vunpack.c.h.b16 %v283
      %v369 = vunpack.c.l.b16 %v284
      %v370 = vunpack.c.l.b16 %v285
      %v371 = vunpack.c.h.b16 %v285
      %v372 = vunpack.c.l.b16 %v286
      %v373 = vunpack.c.l.b16 %v287
      %v374 = vunpack.c.h.b16 %v287
      %v375 = vunpack.c.l.b16 %v288
      %v376 = vunpack.c.l.b16 %v289
      %v377 = vunpack.c.h.b16 %v289
      %v378 = vunpack.c.l.b16 %v290
      %v379 = vunpack.c.l.b16 %v291
      %v380 = vunpack.c.h.b16 %v291
      %v381 = vunpack.c.l.b16 %v292
      %v382 = vunpack.c.l.b16 %v293
      %v383 = vunpack.c.h.b16 %v293
      %v384 = vunpack.c.l.b16 %v294
      %v385 = vunpack.c.l.b16 %v295
      %v386 = vunpack.c.h.b16 %v295
      %v387 = vunpack.c.l.b16 %v296
      %v388 = vunpack.c.l.b16 %v297
      %v389 = vunpack.c.h.b16 %v297
      %v390 = vunpack.c.l.b16 %v298
      %v391 = vunpack.c.l.b16 %v299
      %v392 = vunpack.c.h.b16 %v299
      %v393 = vunpack.c.l.b16 %v300
      %v394 = vunpack.c.l.b16 %v301
      %v395 = vunpack.c.h.b16 %v301
      %v396 = vunpack.c.l.b16 %v302
      %v397 = vunpack.c.l.b16 %v303
      %v398 = vunpack.c.h.b16 %v303
      %v399 = vunpack.c.l.b16 %v304
      %v400 = vunpack.c.l.b16 %v305
      %v401 = vunpack.c.h.b16 %v305
      %v402 = vunpack.c.l.b16 %v306
      %v403 = vunpack.c.l.b16 %v307
      %v404 = vunpack.c.h.b16 %v307
      %v405 = vunpack.c.l.b16 %v308
      %v406 = vpack.c.b16 %v361, %v358
      %v407 = vpack.c.b16 %v362, %v359
      %v408 = vpack.c.b16 %v363, %v360
      %v409 = vpack.c.b16 %v367, %v364
      %v410 = vpack.c.b16 %v368, %v365
      %v411 = vpack.c.b16 %v369, %v366
      %v412 = vpack.c.b16 %v373, %v370
      %v413 = vpack.c.b16 %v374, %v371
      %v414 = vpack.c.b16 %v375, %v372
      %v415 = vpack.c.b16 %v379, %v376
      %v416 = vpack.c.b16 %v380, %v377
      %v417 = vpack.c.b16 %v381, %v378
      %v418 = vpack.c.b16 %v385, %v382
      %v419 = vpack.c.b16 %v386, %v383
      %v420 = vpack.c.b16 %v387, %v384
      %v421 = vpack.c.b16 %v391, %v388
      %v422 = vpack.c.b16 %v392, %v389
      %v423 = vpack.c.b16 %v393, %v390
      %v424 = vpack.c.b16 %v397, %v394
      %v425 = vpack.c.b16 %v398, %v395
      %v426 = vpack.c.b16 %v399, %v396
      %v427 = vpack.c.b16 %v403, %v400
      %v428 = vpack.c.b16 %v404, %v401
      %v429 = vpack.c.b16 %v405, %v402
      %454 = vmatprep.subr.bf16.mxu0 %v428
      %455 = vmatpush1.bf16.msra.mxu0 %v427
      %456 = vmatprep.subr.bf16.mxu0 %v425
      %457 = vmatpush1.bf16.msra.mxu0 %v424
      %458 = vmatprep.subr.bf16.mxu0 %v422
      %459 = vmatpush1.bf16.msra.mxu0 %v421
      %460 = vmatprep.subr.bf16.mxu0 %v419
      %461 = vmatpush1.bf16.msra.mxu0 %v418
      %462 = vmatprep.subr.bf16.mxu0 %v416
      %463 = vmatpush1.bf16.msra.mxu0 %v415
      %464 = vmatprep.subr.bf16.mxu0 %v413
      %465 = vmatpush1.bf16.msra.mxu0 %v412
      %466 = vmatprep.subr.bf16.mxu0 %v410
      %467 = vmatpush1.bf16.msra.mxu0 %v409
      %468 = vmatprep.subr.bf16.mxu0 %v407
      %469 = vmatpush1.bf16.msra.mxu0 %v406
      %470 = vmatprep.subr.bf16.mxu0 0
      %471 = vmatpush2.bf16.msra.mxu0 0
      %472 = vmatprep.subr.bf16.mxu0 0
      %473 = vmatpush2.bf16.msra.mxu0 0
      %474 = vmatprep.subr.bf16.mxu0 0
      %475 = vmatpush2.bf16.msra.mxu0 0
      %476 = vmatprep.subr.bf16.mxu0 0
      %477 = vmatpush2.bf16.msra.mxu0 0
      %478 = vmatprep.subr.bf16.mxu0 0
      %479 = vmatpush2.bf16.msra.mxu0 0
      %480 = vmatprep.subr.bf16.mxu0 0
      %481 = vmatpush2.bf16.msra.mxu0 0
      %482 = vmatprep.subr.bf16.mxu0 0
      %483 = vmatpush2.bf16.msra.mxu0 0
      %484 = vmatprep.subr.bf16.mxu0 0
      %485 = vmatpush2.bf16.msra.mxu0 0
      %486 = vmatprep.mubr.bf16.mxu0 0
      %487 = vmatmul.mubr.bf16.gmra.mxu0 %v276
      %v488 = vpop.f32.mrf.mxu0
      %v489 = vadd.f32 %v314, %v488
      %v490 = vpop.f32.mrf.mxu0
      %v491 = vadd.f32 %v318, %v490
      %v492 = vpop.f32.mrf.mxu0
      %v493 = vpop.f32.mrf.mxu0
      %494 = vdwg.mxu0
      %495 = vmatprep.subr.bf16.mxu0 0
      %496 = vmatpush1.bf16.msra.mxu0 %v429
      %497 = vmatprep.subr.bf16.mxu0 0
      %498 = vmatpush1.bf16.msra.mxu0 %v426
      %499 = vmatprep.subr.bf16.mxu0 0
      %500 = vmatpush1.bf16.msra.mxu0 %v423
      %501 = vmatprep.subr.bf16.mxu0 0
      %502 = vmatpush1.bf16.msra.mxu0 %v420
      %503 = vmatprep.subr.bf16.mxu0 0
      %504 = vmatpush1.bf16.msra.mxu0 %v417
      %505 = vmatprep.subr.bf16.mxu0 0
      %506 = vmatpush1.bf16.msra.mxu0 %v414
      %507 = vmatprep.subr.bf16.mxu0 0
      %508 = vmatpush1.bf16.msra.mxu0 %v411
      %509 = vmatprep.subr.bf16.mxu0 0
      %510 = vmatpush1.bf16.msra.mxu0 %v408
      %511 = vmatprep.subr.bf16.mxu0 0
      %512 = vmatpush2.bf16.msra.mxu0 0
      %513 = vmatprep.subr.bf16.mxu0 0
      %514 = vmatpush2.bf16.msra.mxu0 0
      %515 = vmatprep.subr.bf16.mxu0 0
      %516 = vmatpush2.bf16.msra.mxu0 0
      %517 = vmatprep.subr.bf16.mxu0 0
      %518 = vmatpush2.bf16.msra.mxu0 0
      %519 = vmatprep.subr.bf16.mxu0 0
      %520 = vmatpush2.bf16.msra.mxu0 0
      %521 = vmatprep.subr.bf16.mxu0 0
      %522 = vmatpush2.bf16.msra.mxu0 0
      %523 = vmatprep.subr.bf16.mxu0 0
      %524 = vmatpush2.bf16.msra.mxu0 0
      %525 = vmatprep.subr.bf16.mxu0 0
      %526 = vmatpush2.bf16.msra.mxu0 0
      %527 = vmatprep.mubr.bf16.mxu0 0
      %528 = vmatmul.mubr.bf16.gmra.mxu0 %v276
      %v529 = vpop.f32.mrf.mxu0
      %v530 = vadd.f32 %v322, %v529
      %v531 = vpop.f32.mrf.mxu0
      %v532 = vpop.f32.mrf.mxu0
      %v533 = vpop.f32.mrf.mxu0
      %534 = vdwg.mxu0
      %v535 = vld [vmem:[%s3] sm:$0xf]
      %v536 = vld [vmem:[%s3 + $0x4] sm:$0xf]
      %v537 = vld [vmem:[%s3 + $0x8] sm:$0xf]
      %v538 = vld [vmem:[%s3 + $0xc] sm:$0xf]
      %v539 = vld [vmem:[%s3 + $0x10] sm:$0xf]
      %v540 = vld [vmem:[%s3 + $0x14] sm:$0xf]
      %v541 = vld [vmem:[%s3 + $0x18] sm:$0xf]
      %v542 = vld [vmem:[%s3 + $0x1c] sm:$0xf]
      %v543 = vld [vmem:[%s3 + $0x20] sm:$0xf]
      %v544 = vld [vmem:[%s3 + $0x24] sm:$0xf]
      %v545 = vld [vmem:[%s3 + $0x28] sm:$0xf]
      %v546 = vld [vmem:[%s3 + $0x2c] sm:$0xf]
      %v547 = vld [vmem:[%s3 + $0x30] sm:$0xf]
      %v548 = vld [vmem:[%s3 + $0x34] sm:$0xf]
      %v549 = vld [vmem:[%s3 + $0x38] sm:$0xf]
      %v550 = vld [vmem:[%s3 + $0x3c] sm:$0xf]
      %v551 = vpack.c.bf16 %v489, %v489
      %v552 = vpack.c.bf16 %v491, %v491
      %v553 = vpack.c.bf16 %v530, %v530
      %vm554 = vcmask 523264
      %v556 = vsel %vm554, %v551, 0
      %v559 = vsel %vm554, %v552, 0
      %561 = vmatprep.subr.bf16.mxu0 0
      %562 = vmatpush1.bf16.xpose.msra.mxu0 0
      %563 = vmatprep.subr.bf16.mxu0 0
      %564 = vmatpush1.bf16.xpose.msra.mxu0 0
      %565 = vmatprep.subr.bf16.mxu0 0
      %566 = vmatpush1.bf16.xpose.msra.mxu0 0
      %567 = vmatprep.subr.bf16.mxu0 0
      %568 = vmatpush1.bf16.xpose.msra.mxu0 0
      %569 = vmatprep.subr.bf16.mxu0 0
      %570 = vmatpush1.bf16.xpose.msra.mxu0 0
      %571 = vmatprep.subr.bf16.mxu0 0
      %572 = vmatpush1.bf16.xpose.msra.mxu0 0
      %573 = vmatprep.subr.bf16.mxu0 0
      %574 = vmatpush1.bf16.xpose.msra.mxu0 0
      %575 = vmatprep.subr.bf16.mxu0 0
      %576 = vmatpush1.bf16.xpose.msra.mxu0 %v559
      %577 = vmatprep.subr.bf16.mxu0 0
      %578 = vmatpush2.bf16.xpose.msra.mxu0 0
      %579 = vmatprep.subr.bf16.mxu0 0
      %580 = vmatpush2.bf16.xpose.msra.mxu0 0
      %581 = vmatprep.subr.bf16.mxu0 0
      %582 = vmatpush2.bf16.xpose.msra.mxu0 0
      %583 = vmatprep.subr.bf16.mxu0 0
      %584 = vmatpush2.bf16.xpose.msra.mxu0 0
      %585 = vmatprep.subr.bf16.mxu0 0
      %586 = vmatpush2.bf16.xpose.msra.mxu0 0
      %587 = vmatprep.subr.bf16.mxu0 0
      %588 = vmatpush2.bf16.xpose.msra.mxu0 0
      %589 = vmatprep.subr.bf16.mxu0 0
      %590 = vmatpush2.bf16.xpose.msra.mxu0 0
      %591 = vmatprep.subr.bf16.mxu0 0
      %592 = vmatpush2.bf16.xpose.msra.mxu0 0
      %593 = vmatprep.mubr.bf16.mxu0 0
      %594 = vmatmul.mubr.bf16.gmra.mxu0 %v556
      %v595 = vpop.f32.mrf.mxu0
      %v596 = vadd.f32 0.0, %v595
      %v597 = vpop.f32.mrf.mxu0
      %v598 = vpop.f32.mrf.mxu0
      %v599 = vpop.f32.mrf.mxu0
      %600 = vdwg.mxu0
      %v601 = vmul.f32 %v596, 0.125
      %vm602 = vcmask 64512
      %v603 = vsel %vm602, %v601, -inf
      %604 = vmax.xlane.f32.xlu0 %v603
      %v605 = vpop.xlane.xlu0 %604
      %v606 = vsub.f32 %v601, %v605
      %v607 = vmul.f32 %v606, 1.442695
      %v608 = vpow.pop %v607
      %v609 = vsel %vm602, %v608, 0.0
      %610 = vadd.xlane.f32.xlu0 %v609
      %v611 = vpop.xlane.xlu0 %610
      %v612 = vpack.c.bf16 %v608, %v608
      %v614 = vsel %vm602, %v612, 0
      %vm616 = vcmask 1043456
      %v618 = vsel %vm616, %v553, 0
      %620 = vmatprep.subr.bf16.mxu0 0
      %621 = vmatpush1.bf16.msra.mxu0 0
      %622 = vmatprep.subr.bf16.mxu0 0
      %623 = vmatpush1.bf16.msra.mxu0 0
      %624 = vmatprep.subr.bf16.mxu0 0
      %625 = vmatpush1.bf16.msra.mxu0 0
      %626 = vmatprep.subr.bf16.mxu0 0
      %627 = vmatpush1.bf16.msra.mxu0 0
      %628 = vmatprep.subr.bf16.mxu0 0
      %629 = vmatpush1.bf16.msra.mxu0 0
      %630 = vmatprep.subr.bf16.mxu0 0
      %631 = vmatpush1.bf16.msra.mxu0 0
      %632 = vmatprep.subr.bf16.mxu0 0
      %633 = vmatpush1.bf16.msra.mxu0 0
      %634 = vmatprep.subr.bf16.mxu0 0
      %635 = vmatpush1.bf16.msra.mxu0 %v618
      %636 = vmatprep.subr.bf16.mxu0 0
      %637 = vmatpush2.bf16.msra.mxu0 0
      %638 = vmatprep.subr.bf16.mxu0 0
      %639 = vmatpush2.bf16.msra.mxu0 0
      %640 = vmatprep.subr.bf16.mxu0 0
      %641 = vmatpush2.bf16.msra.mxu0 0
      %642 = vmatprep.subr.bf16.mxu0 0
      %643 = vmatpush2.bf16.msra.mxu0 0
      %644 = vmatprep.subr.bf16.mxu0 0
      %645 = vmatpush2.bf16.msra.mxu0 0
      %646 = vmatprep.subr.bf16.mxu0 0
      %647 = vmatpush2.bf16.msra.mxu0 0
      %648 = vmatprep.subr.bf16.mxu0 0
      %649 = vmatpush2.bf16.msra.mxu0 0
      %650 = vmatprep.subr.bf16.mxu0 0
      %651 = vmatpush2.bf16.msra.mxu0 0
      %652 = vmatprep.mubr.bf16.mxu0 0
      %653 = vmatmul.mubr.bf16.gmra.mxu0 %v614
      %v654 = vpop.f32.mrf.mxu0
      %v655 = vadd.f32 0.0, %v654
      %v656 = vpop.f32.mrf.mxu0
      %v657 = vpop.f32.mrf.mxu0
      %v658 = vpop.f32.mrf.mxu0
      %659 = vdwg.mxu0
      %v660 = vrcp.pop %v611
      %v661 = vmul.f32 %v655, %v660
      %v662 = vpack.c.bf16 %v661, %v661
      %664 = vrot.lane.b32.xlu0 %v551, 64
      %v665 = vpop.permute.xlu0 %664
      %667 = vrot.lane.b32.xlu0 %v552, 64
      %v668 = vpop.permute.xlu0 %667
      %v670 = vsel %vm554, %v665, 0
      %v673 = vsel %vm554, %v668, 0
      %675 = vmatprep.subr.bf16.mxu0 0
      %676 = vmatpush1.bf16.xpose.msra.mxu0 0
      %677 = vmatprep.subr.bf16.mxu0 0
      %678 = vmatpush1.bf16.xpose.msra.mxu0 0
      %679 = vmatprep.subr.bf16.mxu0 0
      %680 = vmatpush1.bf16.xpose.msra.mxu0 0
      %681 = vmatprep.subr.bf16.mxu0 0
      %682 = vmatpush1.bf16.xpose.msra.mxu0 0
      %683 = vmatprep.subr.bf16.mxu0 0
      %684 = vmatpush1.bf16.xpose.msra.mxu0 0
      %685 = vmatprep.subr.bf16.mxu0 0
      %686 = vmatpush1.bf16.xpose.msra.mxu0 0
      %687 = vmatprep.subr.bf16.mxu0 0
      %688 = vmatpush1.bf16.xpose.msra.mxu0 0
      %689 = vmatprep.subr.bf16.mxu0 0
      %690 = vmatpush1.bf16.xpose.msra.mxu0 %v673
      %691 = vmatprep.subr.bf16.mxu0 0
      %692 = vmatpush2.bf16.xpose.msra.mxu0 0
      %693 = vmatprep.subr.bf16.mxu0 0
      %694 = vmatpush2.bf16.xpose.msra.mxu0 0
      %695 = vmatprep.subr.bf16.mxu0 0
      %696 = vmatpush2.bf16.xpose.msra.mxu0 0
      %697 = vmatprep.subr.bf16.mxu0 0
      %698 = vmatpush2.bf16.xpose.msra.mxu0 0
      %699 = vmatprep.subr.bf16.mxu0 0
      %700 = vmatpush2.bf16.xpose.msra.mxu0 0
      %701 = vmatprep.subr.bf16.mxu0 0
      %702 = vmatpush2.bf16.xpose.msra.mxu0 0
      %703 = vmatprep.subr.bf16.mxu0 0
      %704 = vmatpush2.bf16.xpose.msra.mxu0 0
      %705 = vmatprep.subr.bf16.mxu0 0
      %706 = vmatpush2.bf16.xpose.msra.mxu0 0
      %707 = vmatprep.mubr.bf16.mxu0 0
      %708 = vmatmul.mubr.bf16.gmra.mxu0 %v670
      %v709 = vpop.f32.mrf.mxu0
      %v710 = vadd.f32 0.0, %v709
      %v711 = vpop.f32.mrf.mxu0
      %v712 = vpop.f32.mrf.mxu0
      %v713 = vpop.f32.mrf.mxu0
      %714 = vdwg.mxu0
      %v715 = vmul.f32 %v710, 0.125
      %v716 = vsel %vm602, %v715, -inf
      %717 = vmax.xlane.f32.xlu0 %v716
      %v718 = vpop.xlane.xlu0 %717
      %v719 = vsub.f32 %v715, %v718
      %v720 = vmul.f32 %v719, 1.442695
      %v721 = vpow.pop %v720
      %v722 = vsel %vm602, %v721, 0.0
      %723 = vadd.xlane.f32.xlu0 %v722
      %v724 = vpop.xlane.xlu0 %723
      %v725 = vpack.c.bf16 %v721, %v721
      %727 = vrot.lane.b32.xlu0 %v553, 64
      %v728 = vpop.permute.xlu0 %727
      %v730 = vsel %vm602, %v725, 0
      %v733 = vsel %vm616, %v728, 0
      %735 = vmatprep.subr.bf16.mxu0 0
      %736 = vmatpush1.bf16.msra.mxu0 0
      %737 = vmatprep.subr.bf16.mxu0 0
      %738 = vmatpush1.bf16.msra.mxu0 0
      %739 = vmatprep.subr.bf16.mxu0 0
      %740 = vmatpush1.bf16.msra.mxu0 0
      %741 = vmatprep.subr.bf16.mxu0 0
      %742 = vmatpush1.bf16.msra.mxu0 0
      %743 = vmatprep.subr.bf16.mxu0 0
      %744 = vmatpush1.bf16.msra.mxu0 0
      %745 = vmatprep.subr.bf16.mxu0 0
      %746 = vmatpush1.bf16.msra.mxu0 0
      %747 = vmatprep.subr.bf16.mxu0 0
      %748 = vmatpush1.bf16.msra.mxu0 0
      %749 = vmatprep.subr.bf16.mxu0 0
      %750 = vmatpush1.bf16.msra.mxu0 %v733
      %751 = vmatprep.subr.bf16.mxu0 0
      %752 = vmatpush2.bf16.msra.mxu0 0
      %753 = vmatprep.subr.bf16.mxu0 0
      %754 = vmatpush2.bf16.msra.mxu0 0
      %755 = vmatprep.subr.bf16.mxu0 0
      %756 = vmatpush2.bf16.msra.mxu0 0
      %757 = vmatprep.subr.bf16.mxu0 0
      %758 = vmatpush2.bf16.msra.mxu0 0
      %759 = vmatprep.subr.bf16.mxu0 0
      %760 = vmatpush2.bf16.msra.mxu0 0
      %761 = vmatprep.subr.bf16.mxu0 0
      %762 = vmatpush2.bf16.msra.mxu0 0
      %763 = vmatprep.subr.bf16.mxu0 0
      %764 = vmatpush2.bf16.msra.mxu0 0
      %765 = vmatprep.subr.bf16.mxu0 0
      %766 = vmatpush2.bf16.msra.mxu0 0
      %767 = vmatprep.mubr.bf16.mxu0 0
      %768 = vmatmul.mubr.bf16.gmra.mxu0 %v730
      %v769 = vpop.f32.mrf.mxu0
      %v770 = vadd.f32 0.0, %v769
      %v771 = vpop.f32.mrf.mxu0
      %v772 = vpop.f32.mrf.mxu0
      %v773 = vpop.f32.mrf.mxu0
      %774 = vdwg.mxu0
      %v775 = vrcp.pop %v724
      %v776 = vmul.f32 %v770, %v775
      %v777 = vpack.c.bf16 %v776, %v776
      %v786 = vunpack.c.l.b16 %v543
      %v787 = vunpack.c.l.b16 %v544
      %v788 = vunpack.c.l.b16 %v545
      %v789 = vunpack.c.l.b16 %v546
      %v790 = vunpack.c.l.b16 %v547
      %v791 = vunpack.c.l.b16 %v548
      %v792 = vunpack.c.l.b16 %v549
      %v793 = vunpack.c.l.b16 %v550
      %v794 = vpack.c.b16 %v787, %v786
      %v795 = vpack.c.b16 %v789, %v788
      %v796 = vpack.c.b16 %v791, %v790
      %v797 = vpack.c.b16 %v793, %v792
      %v803 = vsel %vm554, %v777, 0
      %805 = vmatprep.subr.bf16.mxu0 0
      %806 = vmatpush1.bf16.msra.mxu0 0
      %807 = vmatprep.subr.bf16.mxu0 0
      %808 = vmatpush1.bf16.msra.mxu0 0
      %809 = vmatprep.subr.bf16.mxu0 0
      %810 = vmatpush1.bf16.msra.mxu0 0
      %811 = vmatprep.subr.bf16.mxu0 0
      %812 = vmatpush1.bf16.msra.mxu0 0
      %813 = vmatprep.subr.bf16.mxu0 0
      %814 = vmatpush1.bf16.msra.mxu0 %v797
      %815 = vmatprep.subr.bf16.mxu0 0
      %816 = vmatpush1.bf16.msra.mxu0 %v796
      %817 = vmatprep.subr.bf16.mxu0 0
      %818 = vmatpush1.bf16.msra.mxu0 %v795
      %819 = vmatprep.subr.bf16.mxu0 0
      %820 = vmatpush1.bf16.msra.mxu0 %v794
      %821 = vmatprep.subr.bf16.mxu0 0
      %822 = vmatpush2.bf16.msra.mxu0 0
      %823 = vmatprep.subr.bf16.mxu0 0
      %824 = vmatpush2.bf16.msra.mxu0 0
      %825 = vmatprep.subr.bf16.mxu0 0
      %826 = vmatpush2.bf16.msra.mxu0 0
      %827 = vmatprep.subr.bf16.mxu0 0
      %828 = vmatpush2.bf16.msra.mxu0 0
      %829 = vmatprep.subr.bf16.mxu0 0
      %830 = vmatpush2.bf16.msra.mxu0 0
      %831 = vmatprep.subr.bf16.mxu0 0
      %832 = vmatpush2.bf16.msra.mxu0 0
      %833 = vmatprep.subr.bf16.mxu0 0
      %834 = vmatpush2.bf16.msra.mxu0 0
      %835 = vmatprep.subr.bf16.mxu0 0
      %836 = vmatpush2.bf16.msra.mxu0 0
      %837 = vmatprep.mubr.bf16.mxu0 0
      %838 = vmatmul.mubr.bf16.gmra.mxu0 %v803
      %v839 = vpop.f32.mrf.mxu0
      %v840 = vadd.f32 0.0, %v839
      %v841 = vpop.f32.mrf.mxu0
      %v842 = vpop.f32.mrf.mxu0
      %v843 = vpop.f32.mrf.mxu0
      %844 = vdwg.mxu0
      %v853 = vunpack.c.l.b16 %v535
      %v854 = vunpack.c.l.b16 %v536
      %v855 = vunpack.c.l.b16 %v537
      %v856 = vunpack.c.l.b16 %v538
      %v857 = vunpack.c.l.b16 %v539
      %v858 = vunpack.c.l.b16 %v540
      %v859 = vunpack.c.l.b16 %v541
      %v860 = vunpack.c.l.b16 %v542
      %v861 = vpack.c.b16 %v854, %v853
      %v862 = vpack.c.b16 %v856, %v855
      %v863 = vpack.c.b16 %v858, %v857
      %v864 = vpack.c.b16 %v860, %v859
      %v870 = vsel %vm554, %v662, 0
      %872 = vmatprep.subr.bf16.mxu0 0
      %873 = vmatpush1.bf16.msra.mxu0 0
      %874 = vmatprep.subr.bf16.mxu0 0
      %875 = vmatpush1.bf16.msra.mxu0 0
      %876 = vmatprep.subr.bf16.mxu0 0
      %877 = vmatpush1.bf16.msra.mxu0 0
      %878 = vmatprep.subr.bf16.mxu0 0
      %879 = vmatpush1.bf16.msra.mxu0 0
      %880 = vmatprep.subr.bf16.mxu0 0
      %881 = vmatpush1.bf16.msra.mxu0 %v864
      %882 = vmatprep.subr.bf16.mxu0 0
      %883 = vmatpush1.bf16.msra.mxu0 %v863
      %884 = vmatprep.subr.bf16.mxu0 0
      %885 = vmatpush1.bf16.msra.mxu0 %v862
      %886 = vmatprep.subr.bf16.mxu0 0
      %887 = vmatpush1.bf16.msra.mxu0 %v861
      %888 = vmatprep.subr.bf16.mxu0 0
      %889 = vmatpush2.bf16.msra.mxu0 0
      %890 = vmatprep.subr.bf16.mxu0 0
      %891 = vmatpush2.bf16.msra.mxu0 0
      %892 = vmatprep.subr.bf16.mxu0 0
      %893 = vmatpush2.bf16.msra.mxu0 0
      %894 = vmatprep.subr.bf16.mxu0 0
      %895 = vmatpush2.bf16.msra.mxu0 0
      %896 = vmatprep.subr.bf16.mxu0 0
      %897 = vmatpush2.bf16.msra.mxu0 0
      %898 = vmatprep.subr.bf16.mxu0 0
      %899 = vmatpush2.bf16.msra.mxu0 0
      %900 = vmatprep.subr.bf16.mxu0 0
      %901 = vmatpush2.bf16.msra.mxu0 0
      %902 = vmatprep.subr.bf16.mxu0 0
      %903 = vmatpush2.bf16.msra.mxu0 0
      %904 = vmatprep.mubr.bf16.mxu0 0
      %905 = vmatmul.mubr.bf16.gmra.mxu0 %v870
      %v906 = vpop.f32.mrf.mxu0
      %v907 = vadd.f32 %v840, %v906
      %v908 = vpop.f32.mrf.mxu0
      %v909 = vpop.f32.mrf.mxu0
      %v910 = vpop.f32.mrf.mxu0
      %911 = vdwg.mxu0
      %v912 = vld [vmem:[%s4] sm:$0x1]
      %v914 = vlaneseq
      %v915 = vshrl.u32 %v914, 7
      %v916 = vsub.s32 0, %v915
      %v917 = vrot.slane %v912, %v916
      %v919 = vadd.f32 %v907, %v917
      %v920 = vadd.f32 %v919, %v275
      %v921 = vld [vmem:[%s5] sm:$0x1]
      %v922 = vld [vmem:[%s6] sm:$0x1]
      %923 = vadd.xlane.f32.xlu0 %v920
      %v924 = vpop.xlane.xlu0 %923
      %v925 = vrcp.pop 128.0
      %v926 = vmul.f32 %v924, %v925
      %v927 = vsub.f32 %v920, %v926
      %v928 = vmul.f32 %v927, %v927
      %929 = vadd.xlane.f32.xlu0 %v928
      %v930 = vpop.xlane.xlu0 %929
      %v931 = vmul.f32 %v930, %v925
      %v932 = vadd.f32 %v931, 1e-12
      %v933 = vrsqrt.pop %v932
      %v934 = vmul.f32 %v927, %v933
      %v936 = vlaneseq
      %v937 = vshrl.u32 %v936, 7
      %v938 = vsub.s32 0, %v937
      %v939 = vrot.slane %v921, %v938
      %v941 = vmul.f32 %v934, %v939
      %v943 = vlaneseq
      %v944 = vshrl.u32 %v943, 7
      %v945 = vsub.s32 0, %v944
      %v946 = vrot.slane %v922, %v945
      %v948 = vadd.f32 %v941, %v946
      %949 = vst [vmem:[%s273] sm:$0xff] %v948
      %p950 = scmp.lt.s32.totalorder %s18, 1
      %s951 = scalar_select %p950, %s18, 1
      %s952 = smul.addr %s951, 8
      %s953 = scalar_lea.vmem %s7, %s952
      // Predicated region
      $region49: #{vector_bert_forward.9} parent=47 // pred_check
        %p954 = pneg %p188
      $region50: #{vector_bert_forward.9} parent=47 // pred_check_branch
        %956 = sbr.rel (%p954) target = $region52
      $region51: #{vector_bert_forward.9} parent=47 // pred_region
        _
      $region52: #{vector_bert_forward.9} parent=47 // pred_fallthru
        _
    $region48: #{vector_bert_forward.9} parent=5 // pred_fallthru
      _
    %p957 = scmp.le.s32.totalorder 2, %s13
    // Predicated region
    $region53: #{vector_bert_forward.9} parent=5 // pred_check
      %p958 = pneg %p957
    $region54: #{vector_bert_forward.9} parent=5 // pred_check_branch
      %960 = sbr.rel (%p958) target = $region56
    $region55: #{vector_bert_forward.9} parent=5 // pred_region
      %s961 = ssub.s32 %s13, 2
      // Predicated region
      $region57: #{vector_bert_forward.9} parent=55 // pred_check
        %p962 = pneg %p194
      $region58: #{vector_bert_forward.9} parent=55 // pred_check_branch
        %964 = sbr.rel (%p962) target = $region60
      $region59: #{vector_bert_forward.9} parent=55 // pred_region
        %p965 = scmp.lt.s32.totalorder %s19, 1
        %s966 = scalar_select %p965, %s19, 1
        %s967 = smul.addr %s966, 8
        %s968 = scalar_lea.vmem %s7, %s967
      $region60: #{vector_bert_forward.9} parent=55 // pred_fallthru
        _
    $region56: #{vector_bert_forward.9} parent=5 // pred_fallthru
      _
  $region6: #{vector_bert_forward.9} parent=0 // loop_footer
    %s17 = sadd.s32 1, %s13
  $region7: #{vector_bert_forward.9} parent=0 // loop_footer_branch
    %12 = sbr.rel target = $region3
  $region8: #{vector_bert_forward.9} parent=0 // loop_exit
    _

// kernel: vector_bert_forward.11
$region0: #{vector_bert_forward.11}
  #allocation0 [shape = 'u32[]', space=smem, size = 0x4, offset = 0x4, fixed_abs, tag = 'smem constant byte address 0x4 - core index']
  #allocation1 [shape = 'u32[144,128]{1,0:T(1,128)}', space=vmem, size = 0x12000, scoped, tag = 'internal scratch']
  %s0 = inlined_call_operand.vmem [shape: f32[16,128], index: 0, kind: input, shape index: {}]
  %s1 = inlined_call_operand.vmem [shape: bf16[128,16], index: 1, kind: input, shape index: {}]
  %s2 = inlined_call_operand.vmem [shape: f32[1,16], index: 2, kind: input, shape index: {}]
  %s3 = inlined_call_operand.hbm [shape: f32[16,16], index: 3, kind: output, shape index: {}]
  %s4 = sld [smem:[#allocation0]]
  $region22: #{vector_bert_forward.11} parent=0
    _
  %s6 = ssub.s32 1, %s4
  %s7 = scalar_select 0, %s6, %s4
  $region1: #{vector_bert_forward.11} parent=0
    #allocation2 [shape = 'u8[8192]{0}', space=vmem, size = 0x2000, scoped, tag = 'output window, operand 0, single buffered']
    #allocation3 [shape = 's32[1]{0}', space=sflag, size = 0x4, scoped, tag = 'scoped memory for vector_bert_forward.11']
    %8 = vsyncpa [#allocation3], 0
    // Predicated region
    $region2: #{vector_bert_forward.11} parent=1 // pred_check
      _
    $region3: #{vector_bert_forward.11} parent=1 // pred_check_branch
      %10 = sbr.rel (0) target = $region5
    $region4: #{vector_bert_forward.11} parent=1 // pred_region
      _
    $region5: #{vector_bert_forward.11} parent=1 // pred_fallthru
      _
    // Predicated region
    $region6: #{vector_bert_forward.11} parent=1 // pred_check
      _
    $region7: #{vector_bert_forward.11} parent=1 // pred_check_branch
      %12 = sbr.rel (0) target = $region9
    $region8: #{vector_bert_forward.11} parent=1 // pred_region
      _
    $region9: #{vector_bert_forward.11} parent=1 // pred_fallthru
      _
    // Predicated region
    $region10: #{vector_bert_forward.11} parent=1 // pred_check
      _
    $region11: #{vector_bert_forward.11} parent=1 // pred_check_branch
      %14 = sbr.rel (0) target = $region13
    $region12: #{vector_bert_forward.11} parent=1 // pred_region
      _
    $region13: #{vector_bert_forward.11} parent=1 // pred_fallthru
      _
    %v16 = vld [vmem:[%s0] sm:$0xff]
    %v17 = vld [vmem:[%s0 + $0x8] sm:$0xff]
    %v18 = vpack.c.bf16 %v17, %v16
    %v19 = vld [vmem:[%s1] sm:$0xf]
    %v20 = vld [vmem:[%s1 + $0x4] sm:$0xf]
    %v21 = vld [vmem:[%s1 + $0x8] sm:$0xf]
    %v22 = vld [vmem:[%s1 + $0xc] sm:$0xf]
    %v23 = vld [vmem:[%s1 + $0x10] sm:$0xf]
    %v24 = vld [vmem:[%s1 + $0x14] sm:$0xf]
    %v25 = vld [vmem:[%s1 + $0x18] sm:$0xf]
    %v26 = vld [vmem:[%s1 + $0x1c] sm:$0xf]
    %v27 = vld [vmem:[%s1 + $0x20] sm:$0xf]
    %v28 = vld [vmem:[%s1 + $0x24] sm:$0xf]
    %v29 = vld [vmem:[%s1 + $0x28] sm:$0xf]
    %v30 = vld [vmem:[%s1 + $0x2c] sm:$0xf]
    %v31 = vld [vmem:[%s1 + $0x30] sm:$0xf]
    %v32 = vld [vmem:[%s1 + $0x34] sm:$0xf]
    %v33 = vld [vmem:[%s1 + $0x38] sm:$0xf]
    %v34 = vld [vmem:[%s1 + $0x3c] sm:$0xf]
    %v35 = vld [vmem:[%s2] sm:$0x1]
    %v37 = vlaneseq
    %v38 = vshrl.u32 %v37, 7
    %v39 = vsub.s32 0, %v38
    %v40 = vrot.slane %v35, %v39
    %v58 = vunpack.c.l.b16 %v19
    %v59 = vunpack.c.l.b16 %v20
    %v60 = vunpack.c.l.b16 %v21
    %v61 = vunpack.c.l.b16 %v22
    %v62 = vunpack.c.l.b16 %v23
    %v63 = vunpack.c.l.b16 %v24
    %v64 = vunpack.c.l.b16 %v25
    %v65 = vunpack.c.l.b16 %v26
    %v66 = vunpack.c.l.b16 %v27
    %v67 = vunpack.c.l.b16 %v28
    %v68 = vunpack.c.l.b16 %v29
    %v69 = vunpack.c.l.b16 %v30
    %v70 = vunpack.c.l.b16 %v31
    %v71 = vunpack.c.l.b16 %v32
    %v72 = vunpack.c.l.b16 %v33
    %v73 = vunpack.c.l.b16 %v34
    %v74 = vpack.c.b16 %v59, %v58
    %v75 = vpack.c.b16 %v61, %v60
    %v76 = vpack.c.b16 %v63, %v62
    %v77 = vpack.c.b16 %v65, %v64
    %v78 = vpack.c.b16 %v67, %v66
    %v79 = vpack.c.b16 %v69, %v68
    %v80 = vpack.c.b16 %v71, %v70
    %v81 = vpack.c.b16 %v73, %v72
    %90 = vmatprep.subr.bf16.mxu0 0
    %91 = vmatpush1.bf16.msra.mxu0 %v81
    %92 = vmatprep.subr.bf16.mxu0 0
    %93 = vmatpush1.bf16.msra.mxu0 %v80
    %94 = vmatprep.subr.bf16.mxu0 0
    %95 = vmatpush1.bf16.msra.mxu0 %v79
    %96 = vmatprep.subr.bf16.mxu0 0
    %97 = vmatpush1.bf16.msra.mxu0 %v78
    %98 = vmatprep.subr.bf16.mxu0 0
    %99 = vmatpush1.bf16.msra.mxu0 %v77
    %100 = vmatprep.subr.bf16.mxu0 0
    %101 = vmatpush1.bf16.msra.mxu0 %v76
    %102 = vmatprep.subr.bf16.mxu0 0
    %103 = vmatpush1.bf16.msra.mxu0 %v75
    %104 = vmatprep.subr.bf16.mxu0 0
    %105 = vmatpush1.bf16.msra.mxu0 %v74
    %106 = vmatprep.subr.bf16.mxu0 0
    %107 = vmatpush2.bf16.msra.mxu0 0
    %108 = vmatprep.subr.bf16.mxu0 0
    %109 = vmatpush2.bf16.msra.mxu0 0
    %110 = vmatprep.subr.bf16.mxu0 0
    %111 = vmatpush2.bf16.msra.mxu0 0
    %112 = vmatprep.subr.bf16.mxu0 0
    %113 = vmatpush2.bf16.msra.mxu0 0
    %114 = vmatprep.subr.bf16.mxu0 0
    %115 = vmatpush2.bf16.msra.mxu0 0
    %116 = vmatprep.subr.bf16.mxu0 0
    %117 = vmatpush2.bf16.msra.mxu0 0
    %118 = vmatprep.subr.bf16.mxu0 0
    %119 = vmatpush2.bf16.msra.mxu0 0
    %120 = vmatprep.subr.bf16.mxu0 0
    %121 = vmatpush2.bf16.msra.mxu0 0
    %122 = vmatprep.mubr.bf16.mxu0 0
    %123 = vmatmul.mubr.bf16.gmra.mxu0 %v18
    %v124 = vpop.f32.mrf.mxu0
    %v125 = vadd.f32 %v40, %v124
    %v126 = vpop.f32.mrf.mxu0
    %v127 = vpop.f32.mrf.mxu0
    %v128 = vadd.f32 %v40, %v127
    %v129 = vpop.f32.mrf.mxu0
    %130 = vdwg.mxu0
    %vm131 = vcmask 130048
    %132 = vst.msk [vmem:[#allocation2] sm:$0xff] %vm131, %v125
    %133 = vst.msk [vmem:[#allocation2 + $0x8] sm:$0xff] %vm131, %v128
    // Predicated region
    $region14: #{vector_bert_forward.11} parent=1 // pred_check
      _
    $region15: #{vector_bert_forward.11} parent=1 // pred_check_branch
      %135 = sbr.rel (0) target = $region17
    $region16: #{vector_bert_forward.11} parent=1 // pred_region
      %s137 = ssub.s32 256, 256
      %138 = vsyncadd [#allocation3], %s137
      %s139 = sshll.u32 [#allocation2], 4
      %s140 = int_to_ptr.vmem [resolvable:$true] %s139
      %145 = dma.vmem_to_hbm [thread:$0]  %s140, 256, %s3, [#allocation3], 128, 128, 8
    $region17: #{vector_bert_forward.11} parent=1 // pred_fallthru
      _
    // Predicated region
    $region18: #{vector_bert_forward.11} parent=1 // pred_check
      _
    $region19: #{vector_bert_forward.11} parent=1 // pred_check_branch
      %147 = sbr.rel (0) target = $region21
    $region20: #{vector_bert_forward.11} parent=1 // pred_region
      %148 = dma.done [#allocation3], 256
    $region21: #{vector_bert_forward.11} parent=1 // pred_fallthru
      _
    %149 = vsyncpa [#allocation3], 1

// kernel: vector_bert_forward.10
$region0: #{vector_bert_forward.10}
  #allocation0 [shape = 'u32[]', space=smem, size = 0x4, offset = 0x4, fixed_abs, tag = 'smem constant byte address 0x4 - core index']
  #allocation1 [shape = 'u32[144,128]{1,0:T(1,128)}', space=vmem, size = 0x12000, scoped, tag = 'internal scratch']
  %s0 = inlined_call_operand.vmem [shape: f32[16,128], index: 0, kind: input, shape index: {}]
  %s1 = inlined_call_operand.vmem [shape: bf16[128,512], index: 1, kind: input, shape index: {}]
  %s2 = inlined_call_operand.vmem [shape: f32[1,512], index: 2, kind: input, shape index: {}]
  %s3 = inlined_call_operand.vmem [shape: bf16[512,128], index: 3, kind: input, shape index: {}]
  %s4 = inlined_call_operand.vmem [shape: f32[1,128], index: 4, kind: input, shape index: {}]
  %s5 = inlined_call_operand.vmem [shape: f32[1,128], index: 5, kind: input, shape index: {}]
  %s6 = inlined_call_operand.vmem [shape: f32[1,128], index: 6, kind: input, shape index: {}]
  %s7 = inlined_call_operand.vmem [shape: f32[16,128], index: 7, kind: output, shape index: {}]
  %s8 = sld [smem:[#allocation0]]
  $region38: #{vector_bert_forward.10} parent=0
    _
  %s10 = ssub.s32 1, %s8
  %s11 = scalar_select 0, %s10, %s8
  // Predicated region
  $region2: #{vector_bert_forward.10} parent=0 // pred_check
    _
  $region3: #{vector_bert_forward.10} parent=0 // pred_check_branch
    %13 = sbr.rel (0) target = $region5
  $region4: #{vector_bert_forward.10} parent=0 // pred_region
    _
  $region5: #{vector_bert_forward.10} parent=0 // pred_fallthru
    _
  // Predicated region
  $region6: #{vector_bert_forward.10} parent=0 // pred_check
    _
  $region7: #{vector_bert_forward.10} parent=0 // pred_check_branch
    %15 = sbr.rel (0) target = $region9
  $region8: #{vector_bert_forward.10} parent=0 // pred_region
    _
  $region9: #{vector_bert_forward.10} parent=0 // pred_fallthru
    _
  // Predicated region
  $region10: #{vector_bert_forward.10} parent=0 // pred_check
    _
  $region11: #{vector_bert_forward.10} parent=0 // pred_check_branch
    %17 = sbr.rel (0) target = $region13
  $region12: #{vector_bert_forward.10} parent=0 // pred_region
    _
  $region13: #{vector_bert_forward.10} parent=0 // pred_fallthru
    _
  // Predicated region
  $region14: #{vector_bert_forward.10} parent=0 // pred_check
    _
  $region15: #{vector_bert_forward.10} parent=0 // pred_check_branch
    %19 = sbr.rel (0) target = $region17
  $region16: #{vector_bert_forward.10} parent=0 // pred_region
    _
  $region17: #{vector_bert_forward.10} parent=0 // pred_fallthru
    _
  // Predicated region
  $region18: #{vector_bert_forward.10} parent=0 // pred_check
    _
  $region19: #{vector_bert_forward.10} parent=0 // pred_check_branch
    %21 = sbr.rel (0) target = $region21
  $region20: #{vector_bert_forward.10} parent=0 // pred_region
    _
  $region21: #{vector_bert_forward.10} parent=0 // pred_fallthru
    _
  // Predicated region
  $region22: #{vector_bert_forward.10} parent=0 // pred_check
    _
  $region23: #{vector_bert_forward.10} parent=0 // pred_check_branch
    %23 = sbr.rel (0) target = $region25
  $region24: #{vector_bert_forward.10} parent=0 // pred_region
    _
  $region25: #{vector_bert_forward.10} parent=0 // pred_fallthru
    _
  // Predicated region
  $region26: #{vector_bert_forward.10} parent=0 // pred_check
    _
  $region27: #{vector_bert_forward.10} parent=0 // pred_check_branch
    %25 = sbr.rel (0) target = $region29
  $region28: #{vector_bert_forward.10} parent=0 // pred_region
    _
  $region29: #{vector_bert_forward.10} parent=0 // pred_fallthru
    _
  %v27 = vld [vmem:[%s0] sm:$0xff]
  %v28 = vld [vmem:[%s0 + $0x8] sm:$0xff]
  %v29 = vpack.c.bf16 %v28, %v27
  %v30 = vld [vmem:[%s1] sm:$0xff]
  %v31 = vld [vmem:[%s1 + $0x8] sm:$0xff]
  %v32 = vld [vmem:[%s1 + $0x10] sm:$0xff]
  %v33 = vld [vmem:[%s1 + $0x18] sm:$0xff]
  %v34 = vld [vmem:[%s1 + $0x20] sm:$0xff]
  %v35 = vld [vmem:[%s1 + $0x28] sm:$0xff]
  %v36 = vld [vmem:[%s1 + $0x30] sm:$0xff]
  %v37 = vld [vmem:[%s1 + $0x38] sm:$0xff]
  %v38 = vld [vmem:[%s1 + $0x40] sm:$0xff]
  %v39 = vld [vmem:[%s1 + $0x48] sm:$0xff]
  %v40 = vld [vmem:[%s1 + $0x50] sm:$0xff]
  %v41 = vld [vmem:[%s1 + $0x58] sm:$0xff]
  %v42 = vld [vmem:[%s1 + $0x60] sm:$0xff]
  %v43 = vld [vmem:[%s1 + $0x68] sm:$0xff]
  %v44 = vld [vmem:[%s1 + $0x70] sm:$0xff]
  %v45 = vld [vmem:[%s1 + $0x78] sm:$0xff]
  %v46 = vld [vmem:[%s1 + $0x80] sm:$0xff]
  %v47 = vld [vmem:[%s1 + $0x88] sm:$0xff]
  %v48 = vld [vmem:[%s1 + $0x90] sm:$0xff]
  %v49 = vld [vmem:[%s1 + $0x98] sm:$0xff]
  %v50 = vld [vmem:[%s1 + $0xa0] sm:$0xff]
  %v51 = vld [vmem:[%s1 + $0xa8] sm:$0xff]
  %v52 = vld [vmem:[%s1 + $0xb0] sm:$0xff]
  %v53 = vld [vmem:[%s1 + $0xb8] sm:$0xff]
  %v54 = vld [vmem:[%s1 + $0xc0] sm:$0xff]
  %v55 = vld [vmem:[%s1 + $0xc8] sm:$0xff]
  %v56 = vld [vmem:[%s1 + $0xd0] sm:$0xff]
  %v57 = vld [vmem:[%s1 + $0xd8] sm:$0xff]
  %v58 = vld [vmem:[%s1 + $0xe0] sm:$0xff]
  %v59 = vld [vmem:[%s1 + $0xe8] sm:$0xff]
  %v60 = vld [vmem:[%s1 + $0xf0] sm:$0xff]
  %v61 = vld [vmem:[%s1 + $0xf8] sm:$0xff]
  %v62 = vld [vmem:[%s2] sm:$0xf]
  %v64 = vlaneseq
  %v65 = vshrl.u32 %v64, 7
  %v66 = vsub.s32 0, %v65
  %v67 = vrot.slane %v62, %v66
  %v68 = vlaneseq
  %v69 = vshrl.u32 %v68, 7
  %v70 = vsub.s32 1, %v69
  %v71 = vrot.slane %v62, %v70
  %v72 = vlaneseq
  %v73 = vshrl.u32 %v72, 7
  %v74 = vsub.s32 2, %v73
  %v75 = vrot.slane %v62, %v74
  %v76 = vlaneseq
  %v77 = vshrl.u32 %v76, 7
  %v78 = vsub.s32 3, %v77
  %v79 = vrot.slane %v62, %v78
  %v116 = vunpack.c.l.b16 %v30
  %v117 = vunpack.c.h.b16 %v30
  %v118 = vunpack.c.l.b16 %v31
  %v119 = vunpack.c.h.b16 %v31
  %v120 = vunpack.c.l.b16 %v32
  %v121 = vunpack.c.h.b16 %v32
  %v122 = vunpack.c.l.b16 %v33
  %v123 = vunpack.c.h.b16 %v33
  %v124 = vunpack.c.l.b16 %v34
  %v125 = vunpack.c.h.b16 %v34
  %v126 = vunpack.c.l.b16 %v35
  %v127 = vunpack.c.h.b16 %v35
  %v128 = vunpack.c.l.b16 %v36
  %v129 = vunpack.c.h.b16 %v36
  %v130 = vunpack.c.l.b16 %v37
  %v131 = vunpack.c.h.b16 %v37
  %v132 = vunpack.c.l.b16 %v38
  %v133 = vunpack.c.h.b16 %v38
  %v134 = vunpack.c.l.b16 %v39
  %v135 = vunpack.c.h.b16 %v39
  %v136 = vunpack.c.l.b16 %v40
  %v137 = vunpack.c.h.b16 %v40
  %v138 = vunpack.c.l.b16 %v41
  %v139 = vunpack.c.h.b16 %v41
  %v140 = vunpack.c.l.b16 %v42
  %v141 = vunpack.c.h.b16 %v42
  %v142 = vunpack.c.l.b16 %v43
  %v143 = vunpack.c.h.b16 %v43
  %v144 = vunpack.c.l.b16 %v44
  %v145 = vunpack.c.h.b16 %v44
  %v146 = vunpack.c.l.b16 %v45
  %v147 = vunpack.c.h.b16 %v45
  %v148 = vunpack.c.l.b16 %v46
  %v149 = vunpack.c.h.b16 %v46
  %v150 = vunpack.c.l.b16 %v47
  %v151 = vunpack.c.h.b16 %v47
  %v152 = vunpack.c.l.b16 %v48
  %v153 = vunpack.c.h.b16 %v48
  %v154 = vunpack.c.l.b16 %v49
  %v155 = vunpack.c.h.b16 %v49
  %v156 = vunpack.c.l.b16 %v50
  %v157 = vunpack.c.h.b16 %v50
  %v158 = vunpack.c.l.b16 %v51
  %v159 = vunpack.c.h.b16 %v51
  %v160 = vunpack.c.l.b16 %v52
  %v161 = vunpack.c.h.b16 %v52
  %v162 = vunpack.c.l.b16 %v53
  %v163 = vunpack.c.h.b16 %v53
  %v164 = vunpack.c.l.b16 %v54
  %v165 = vunpack.c.h.b16 %v54
  %v166 = vunpack.c.l.b16 %v55
  %v167 = vunpack.c.h.b16 %v55
  %v168 = vunpack.c.l.b16 %v56
  %v169 = vunpack.c.h.b16 %v56
  %v170 = vunpack.c.l.b16 %v57
  %v171 = vunpack.c.h.b16 %v57
  %v172 = vunpack.c.l.b16 %v58
  %v173 = vunpack.c.h.b16 %v58
  %v174 = vunpack.c.l.b16 %v59
  %v175 = vunpack.c.h.b16 %v59
  %v176 = vunpack.c.l.b16 %v60
  %v177 = vunpack.c.h.b16 %v60
  %v178 = vunpack.c.l.b16 %v61
  %v179 = vunpack.c.h.b16 %v61
  %v180 = vpack.c.b16 %v120, %v116
  %v181 = vpack.c.b16 %v121, %v117
  %v182 = vpack.c.b16 %v122, %v118
  %v183 = vpack.c.b16 %v123, %v119
  %v184 = vpack.c.b16 %v128, %v124
  %v185 = vpack.c.b16 %v129, %v125
  %v186 = vpack.c.b16 %v130, %v126
  %v187 = vpack.c.b16 %v131, %v127
  %v188 = vpack.c.b16 %v136, %v132
  %v189 = vpack.c.b16 %v137, %v133
  %v190 = vpack.c.b16 %v138, %v134
  %v191 = vpack.c.b16 %v139, %v135
  %v192 = vpack.c.b16 %v144, %v140
  %v193 = vpack.c.b16 %v145, %v141
  %v194 = vpack.c.b16 %v146, %v142
  %v195 = vpack.c.b16 %v147, %v143
  %v196 = vpack.c.b16 %v152, %v148
  %v197 = vpack.c.b16 %v153, %v149
  %v198 = vpack.c.b16 %v154, %v150
  %v199 = vpack.c.b16 %v155, %v151
  %v200 = vpack.c.b16 %v160, %v156
  %v201 = vpack.c.b16 %v161, %v157
  %v202 = vpack.c.b16 %v162, %v158
  %v203 = vpack.c.b16 %v163, %v159
  %v204 = vpack.c.b16 %v168, %v164
  %v205 = vpack.c.b16 %v169, %v165
  %v206 = vpack.c.b16 %v170, %v166
  %v207 = vpack.c.b16 %v171, %v167
  %v208 = vpack.c.b16 %v176, %v172
  %v209 = vpack.c.b16 %v177, %v173
  %v210 = vpack.c.b16 %v178, %v174
  %v211 = vpack.c.b16 %v179, %v175
  %244 = vmatprep.subr.bf16.mxu0 %v209
  %245 = vmatpush1.bf16.msra.mxu0 %v208
  %246 = vmatprep.subr.bf16.mxu0 %v205
  %247 = vmatpush1.bf16.msra.mxu0 %v204
  %248 = vmatprep.subr.bf16.mxu0 %v201
  %249 = vmatpush1.bf16.msra.mxu0 %v200
  %250 = vmatprep.subr.bf16.mxu0 %v197
  %251 = vmatpush1.bf16.msra.mxu0 %v196
  %252 = vmatprep.subr.bf16.mxu0 %v193
  %253 = vmatpush1.bf16.msra.mxu0 %v192
  %254 = vmatprep.subr.bf16.mxu0 %v189
  %255 = vmatpush1.bf16.msra.mxu0 %v188
  %256 = vmatprep.subr.bf16.mxu0 %v185
  %257 = vmatpush1.bf16.msra.mxu0 %v184
  %258 = vmatprep.subr.bf16.mxu0 %v181
  %259 = vmatpush1.bf16.msra.mxu0 %v180
  %260 = vmatprep.subr.bf16.mxu0 0
  %261 = vmatpush2.bf16.msra.mxu0 0
  %262 = vmatprep.subr.bf16.mxu0 0
  %263 = vmatpush2.bf16.msra.mxu0 0
  %264 = vmatprep.subr.bf16.mxu0 0
  %265 = vmatpush2.bf16.msra.mxu0 0
  %266 = vmatprep.subr.bf16.mxu0 0
  %267 = vmatpush2.bf16.msra.mxu0 0
  %268 = vmatprep.subr.bf16.mxu0 0
  %269 = vmatpush2.bf16.msra.mxu0 0
  %270 = vmatprep.subr.bf16.mxu0 0
  %271 = vmatpush2.bf16.msra.mxu0 0
  %272 = vmatprep.subr.bf16.mxu0 0
  %273 = vmatpush2.bf16.msra.mxu0 0
  %274 = vmatprep.subr.bf16.mxu0 0
  %275 = vmatpush2.bf16.msra.mxu0 0
  %276 = vmatprep.mubr.bf16.mxu0 0
  %277 = vmatmul.mubr.bf16.gmra.mxu0 %v29
  %v278 = vpop.f32.mrf.mxu0
  %v279 = vadd.f32 %v67, %v278
  %v280 = vpop.f32.mrf.mxu0
  %v281 = vadd.f32 %v71, %v280
  %v282 = vpop.f32.mrf.mxu0
  %v283 = vadd.f32 %v67, %v282
  %v284 = vpop.f32.mrf.mxu0
  %v285 = vadd.f32 %v71, %v284
  %286 = vdwg.mxu0
  %287 = vmatprep.subr.bf16.mxu0 %v211
  %288 = vmatpush1.bf16.msra.mxu0 %v210
  %289 = vmatprep.subr.bf16.mxu0 %v207
  %290 = vmatpush1.bf16.msra.mxu0 %v206
  %291 = vmatprep.subr.bf16.mxu0 %v203
  %292 = vmatpush1.bf16.msra.mxu0 %v202
  %293 = vmatprep.subr.bf16.mxu0 %v199
  %294 = vmatpush1.bf16.msra.mxu0 %v198
  %295 = vmatprep.subr.bf16.mxu0 %v195
  %296 = vmatpush1.bf16.msra.mxu0 %v194
  %297 = vmatprep.subr.bf16.mxu0 %v191
  %298 = vmatpush1.bf16.msra.mxu0 %v190
  %299 = vmatprep.subr.bf16.mxu0 %v187
  %300 = vmatpush1.bf16.msra.mxu0 %v186
  %301 = vmatprep.subr.bf16.mxu0 %v183
  %302 = vmatpush1.bf16.msra.mxu0 %v182
  %303 = vmatprep.subr.bf16.mxu0 0
  %304 = vmatpush2.bf16.msra.mxu0 0
  %305 = vmatprep.subr.bf16.mxu0 0
  %306 = vmatpush2.bf16.msra.mxu0 0
  %307 = vmatprep.subr.bf16.mxu0 0
  %308 = vmatpush2.bf16.msra.mxu0 0
  %309 = vmatprep.subr.bf16.mxu0 0
  %310 = vmatpush2.bf16.msra.mxu0 0
  %311 = vmatprep.subr.bf16.mxu0 0
  %312 = vmatpush2.bf16.msra.mxu0 0
  %313 = vmatprep.subr.bf16.mxu0 0
  %314 = vmatpush2.bf16.msra.mxu0 0
  %315 = vmatprep.subr.bf16.mxu0 0
  %316 = vmatpush2.bf16.msra.mxu0 0
  %317 = vmatprep.subr.bf16.mxu0 0
  %318 = vmatpush2.bf16.msra.mxu0 0
  %319 = vmatprep.mubr.bf16.mxu0 0
  %320 = vmatmul.mubr.bf16.gmra.mxu0 %v29
  %v321 = vpop.f32.mrf.mxu0
  %v322 = vadd.f32 %v75, %v321
  %v323 = vpop.f32.mrf.mxu0
  %v324 = vadd.f32 %v79, %v323
  %v325 = vpop.f32.mrf.mxu0
  %v326 = vadd.f32 %v75, %v325
  %v327 = vpop.f32.mrf.mxu0
  %v328 = vadd.f32 %v79, %v327
  %329 = vdwg.mxu0
  %v330 = vmul.f32 %v279, 0.5
  %v331 = vmul.f32 %v281, 0.5
  %v332 = vmul.f32 %v322, 0.5
  %v333 = vmul.f32 %v324, 0.5
  %v334 = vmul.f32 %v283, 0.5
  %v335 = vmul.f32 %v285, 0.5
  %v336 = vmul.f32 %v326, 0.5
  %v337 = vmul.f32 %v328, 0.5
  %v338 = vmul.f32 %v279, 0.70710677
  %v339 = vmul.f32 %v281, 0.70710677
  %v340 = vmul.f32 %v322, 0.70710677
  %v341 = vmul.f32 %v324, 0.70710677
  %v342 = vmul.f32 %v283, 0.70710677
  %v343 = vmul.f32 %v285, 0.70710677
  %v344 = vmul.f32 %v326, 0.70710677
  %v345 = vmul.f32 %v328, 0.70710677
  %v346 = verf.f32.pop %v338
  %v347 = verf.f32.pop %v339
  %v348 = verf.f32.pop %v340
  %v349 = verf.f32.pop %v341
  %v350 = verf.f32.pop %v342
  %v351 = verf.f32.pop %v343
  %v352 = verf.f32.pop %v344
  %v353 = verf.f32.pop %v345
  %v354 = vadd.f32 %v346, 1.0
  %v355 = vadd.f32 %v347, 1.0
  %v356 = vadd.f32 %v348, 1.0
  %v357 = vadd.f32 %v349, 1.0
  %v358 = vadd.f32 %v350, 1.0
  %v359 = vadd.f32 %v351, 1.0
  %v360 = vadd.f32 %v352, 1.0
  %v361 = vadd.f32 %v353, 1.0
  %v362 = vmul.f32 %v330, %v354
  %v363 = vmul.f32 %v331, %v355
  %v364 = vmul.f32 %v332, %v356
  %v365 = vmul.f32 %v333, %v357
  %v366 = vmul.f32 %v334, %v358
  %v367 = vmul.f32 %v335, %v359
  %v368 = vmul.f32 %v336, %v360
  %v369 = vmul.f32 %v337, %v361
  %v370 = vpack.c.bf16 %v366, %v362
  %v371 = vpack.c.bf16 %v367, %v363
  %v372 = vpack.c.bf16 %v368, %v364
  %v373 = vpack.c.bf16 %v369, %v365
  %v374 = vld [vmem:[%s3] sm:$0xf]
  %v375 = vld [vmem:[%s3 + $0x4] sm:$0xf]
  %v376 = vld [vmem:[%s3 + $0x8] sm:$0xf]
  %v377 = vld [vmem:[%s3 + $0xc] sm:$0xf]
  %v378 = vld [vmem:[%s3 + $0x10] sm:$0xf]
  %v379 = vld [vmem:[%s3 + $0x14] sm:$0xf]
  %v380 = vld [vmem:[%s3 + $0x18] sm:$0xf]
  %v381 = vld [vmem:[%s3 + $0x1c] sm:$0xf]
  %v382 = vld [vmem:[%s3 + $0x20] sm:$0xf]
  %v383 = vld [vmem:[%s3 + $0x24] sm:$0xf]
  %v384 = vld [vmem:[%s3 + $0x28] sm:$0xf]
  %v385 = vld [vmem:[%s3 + $0x2c] sm:$0xf]
  %v386 = vld [vmem:[%s3 + $0x30] sm:$0xf]
  %v387 = vld [vmem:[%s3 + $0x34] sm:$0xf]
  %v388 = vld [vmem:[%s3 + $0x38] sm:$0xf]
  %v389 = vld [vmem:[%s3 + $0x3c] sm:$0xf]
  %v390 = vld [vmem:[%s3 + $0x40] sm:$0xf]
  %v391 = vld [vmem:[%s3 + $0x44] sm:$0xf]
  %v392 = vld [vmem:[%s3 + $0x48] sm:$0xf]
  %v393 = vld [vmem:[%s3 + $0x4c] sm:$0xf]
  %v394 = vld [vmem:[%s3 + $0x50] sm:$0xf]
  %v395 = vld [vmem:[%s3 + $0x54] sm:$0xf]
  %v396 = vld [vmem:[%s3 + $0x58] sm:$0xf]
  %v397 = vld [vmem:[%s3 + $0x5c] sm:$0xf]
  %v398 = vld [vmem:[%s3 + $0x60] sm:$0xf]
  %v399 = vld [vmem:[%s3 + $0x64] sm:$0xf]
  %v400 = vld [vmem:[%s3 + $0x68] sm:$0xf]
  %v401 = vld [vmem:[%s3 + $0x6c] sm:$0xf]
  %v402 = vld [vmem:[%s3 + $0x70] sm:$0xf]
  %v403 = vld [vmem:[%s3 + $0x74] sm:$0xf]
  %v404 = vld [vmem:[%s3 + $0x78] sm:$0xf]
  %v405 = vld [vmem:[%s3 + $0x7c] sm:$0xf]
  %v406 = vld [vmem:[%s3 + $0x80] sm:$0xf]
  %v407 = vld [vmem:[%s3 + $0x84] sm:$0xf]
  %v408 = vld [vmem:[%s3 + $0x88] sm:$0xf]
  %v409 = vld [vmem:[%s3 + $0x8c] sm:$0xf]
  %v410 = vld [vmem:[%s3 + $0x90] sm:$0xf]
  %v411 = vld [vmem:[%s3 + $0x94] sm:$0xf]
  %v412 = vld [vmem:[%s3 + $0x98] sm:$0xf]
  %v413 = vld [vmem:[%s3 + $0x9c] sm:$0xf]
  %v414 = vld [vmem:[%s3 + $0xa0] sm:$0xf]
  %v415 = vld [vmem:[%s3 + $0xa4] sm:$0xf]
  %v416 = vld [vmem:[%s3 + $0xa8] sm:$0xf]
  %v417 = vld [vmem:[%s3 + $0xac] sm:$0xf]
  %v418 = vld [vmem:[%s3 + $0xb0] sm:$0xf]
  %v419 = vld [vmem:[%s3 + $0xb4] sm:$0xf]
  %v420 = vld [vmem:[%s3 + $0xb8] sm:$0xf]
  %v421 = vld [vmem:[%s3 + $0xbc] sm:$0xf]
  %v422 = vld [vmem:[%s3 + $0xc0] sm:$0xf]
  %v423 = vld [vmem:[%s3 + $0xc4] sm:$0xf]
  %v424 = vld [vmem:[%s3 + $0xc8] sm:$0xf]
  %v425 = vld [vmem:[%s3 + $0xcc] sm:$0xf]
  %v426 = vld [vmem:[%s3 + $0xd0] sm:$0xf]
  %v427 = vld [vmem:[%s3 + $0xd4] sm:$0xf]
  %v428 = vld [vmem:[%s3 + $0xd8] sm:$0xf]
  %v429 = vld [vmem:[%s3 + $0xdc] sm:$0xf]
  %v430 = vld [vmem:[%s3 + $0xe0] sm:$0xf]
  %v431 = vld [vmem:[%s3 + $0xe4] sm:$0xf]
  %v432 = vld [vmem:[%s3 + $0xe8] sm:$0xf]
  %v433 = vld [vmem:[%s3 + $0xec] sm:$0xf]
  %v434 = vld [vmem:[%s3 + $0xf0] sm:$0xf]
  %v435 = vld [vmem:[%s3 + $0xf4] sm:$0xf]
  %v436 = vld [vmem:[%s3 + $0xf8] sm:$0xf]
  %v437 = vld [vmem:[%s3 + $0xfc] sm:$0xf]
  %v438 = vld [vmem:[%s4] sm:$0x1]
  %v440 = vlaneseq
  %v441 = vshrl.u32 %v440, 7
  %v442 = vsub.s32 0, %v441
  %v443 = vrot.slane %v438, %v442
  %v509 = vunpack.c.l.b16 %v374
  %v510 = vunpack.c.l.b16 %v375
  %v511 = vunpack.c.l.b16 %v376
  %v512 = vunpack.c.l.b16 %v377
  %v513 = vunpack.c.l.b16 %v378
  %v514 = vunpack.c.l.b16 %v379
  %v515 = vunpack.c.l.b16 %v380
  %v516 = vunpack.c.l.b16 %v381
  %v517 = vunpack.c.l.b16 %v382
  %v518 = vunpack.c.l.b16 %v383
  %v519 = vunpack.c.l.b16 %v384
  %v520 = vunpack.c.l.b16 %v385
  %v521 = vunpack.c.l.b16 %v386
  %v522 = vunpack.c.l.b16 %v387
  %v523 = vunpack.c.l.b16 %v388
  %v524 = vunpack.c.l.b16 %v389
  %v525 = vunpack.c.l.b16 %v390
  %v526 = vunpack.c.l.b16 %v391
  %v527 = vunpack.c.l.b16 %v392
  %v528 = vunpack.c.l.b16 %v393
  %v529 = vunpack.c.l.b16 %v394
  %v530 = vunpack.c.l.b16 %v395
  %v531 = vunpack.c.l.b16 %v396
  %v532 = vunpack.c.l.b16 %v397
  %v533 = vunpack.c.l.b16 %v398
  %v534 = vunpack.c.l.b16 %v399
  %v535 = vunpack.c.l.b16 %v400
  %v536 = vunpack.c.l.b16 %v401
  %v537 = vunpack.c.l.b16 %v402
  %v538 = vunpack.c.l.b16 %v403
  %v539 = vunpack.c.l.b16 %v404
  %v540 = vunpack.c.l.b16 %v405
  %v541 = vunpack.c.l.b16 %v406
  %v542 = vunpack.c.l.b16 %v407
  %v543 = vunpack.c.l.b16 %v408
  %v544 = vunpack.c.l.b16 %v409
  %v545 = vunpack.c.l.b16 %v410
  %v546 = vunpack.c.l.b16 %v411
  %v547 = vunpack.c.l.b16 %v412
  %v548 = vunpack.c.l.b16 %v413
  %v549 = vunpack.c.l.b16 %v414
  %v550 = vunpack.c.l.b16 %v415
  %v551 = vunpack.c.l.b16 %v416
  %v552 = vunpack.c.l.b16 %v417
  %v553 = vunpack.c.l.b16 %v418
  %v554 = vunpack.c.l.b16 %v419
  %v555 = vunpack.c.l.b16 %v420
  %v556 = vunpack.c.l.b16 %v421
  %v557 = vunpack.c.l.b16 %v422
  %v558 = vunpack.c.l.b16 %v423
  %v559 = vunpack.c.l.b16 %v424
  %v560 = vunpack.c.l.b16 %v425
  %v561 = vunpack.c.l.b16 %v426
  %v562 = vunpack.c.l.b16 %v427
  %v563 = vunpack.c.l.b16 %v428
  %v564 = vunpack.c.l.b16 %v429
  %v565 = vunpack.c.l.b16 %v430
  %v566 = vunpack.c.l.b16 %v431
  %v567 = vunpack.c.l.b16 %v432
  %v568 = vunpack.c.l.b16 %v433
  %v569 = vunpack.c.l.b16 %v434
  %v570 = vunpack.c.l.b16 %v435
  %v571 = vunpack.c.l.b16 %v436
  %v572 = vunpack.c.l.b16 %v437
  %v573 = vpack.c.b16 %v510, %v509
  %v574 = vpack.c.b16 %v512, %v511
  %v575 = vpack.c.b16 %v514, %v513
  %v576 = vpack.c.b16 %v516, %v515
  %v577 = vpack.c.b16 %v518, %v517
  %v578 = vpack.c.b16 %v520, %v519
  %v579 = vpack.c.b16 %v522, %v521
  %v580 = vpack.c.b16 %v524, %v523
  %v581 = vpack.c.b16 %v526, %v525
  %v582 = vpack.c.b16 %v528, %v527
  %v583 = vpack.c.b16 %v530, %v529
  %v584 = vpack.c.b16 %v532, %v531
  %v585 = vpack.c.b16 %v534, %v533
  %v586 = vpack.c.b16 %v536, %v535
  %v587 = vpack.c.b16 %v538, %v537
  %v588 = vpack.c.b16 %v540, %v539
  %v589 = vpack.c.b16 %v542, %v541
  %v590 = vpack.c.b16 %v544, %v543
  %v591 = vpack.c.b16 %v546, %v545
  %v592 = vpack.c.b16 %v548, %v547
  %v593 = vpack.c.b16 %v550, %v549
  %v594 = vpack.c.b16 %v552, %v551
  %v595 = vpack.c.b16 %v554, %v553
  %v596 = vpack.c.b16 %v556, %v555
  %v597 = vpack.c.b16 %v558, %v557
  %v598 = vpack.c.b16 %v560, %v559
  %v599 = vpack.c.b16 %v562, %v561
  %v600 = vpack.c.b16 %v564, %v563
  %v601 = vpack.c.b16 %v566, %v565
  %v602 = vpack.c.b16 %v568, %v567
  %v603 = vpack.c.b16 %v570, %v569
  %v604 = vpack.c.b16 %v572, %v571
  %637 = vmatprep.subr.bf16.mxu0 0
  %638 = vmatpush1.bf16.msra.mxu0 %v580
  %639 = vmatprep.subr.bf16.mxu0 0
  %640 = vmatpush1.bf16.msra.mxu0 %v579
  %641 = vmatprep.subr.bf16.mxu0 0
  %642 = vmatpush1.bf16.msra.mxu0 %v578
  %643 = vmatprep.subr.bf16.mxu0 0
  %644 = vmatpush1.bf16.msra.mxu0 %v577
  %645 = vmatprep.subr.bf16.mxu0 0
  %646 = vmatpush1.bf16.msra.mxu0 %v576
  %647 = vmatprep.subr.bf16.mxu0 0
  %648 = vmatpush1.bf16.msra.mxu0 %v575
  %649 = vmatprep.subr.bf16.mxu0 0
  %650 = vmatpush1.bf16.msra.mxu0 %v574
  %651 = vmatprep.subr.bf16.mxu0 0
  %652 = vmatpush1.bf16.msra.mxu0 %v573
  %653 = vmatprep.subr.bf16.mxu0 0
  %654 = vmatpush2.bf16.msra.mxu0 %v588
  %655 = vmatprep.subr.bf16.mxu0 0
  %656 = vmatpush2.bf16.msra.mxu0 %v587
  %657 = vmatprep.subr.bf16.mxu0 0
  %658 = vmatpush2.bf16.msra.mxu0 %v586
  %659 = vmatprep.subr.bf16.mxu0 0
  %660 = vmatpush2.bf16.msra.mxu0 %v585
  %661 = vmatprep.subr.bf16.mxu0 0
  %662 = vmatpush2.bf16.msra.mxu0 %v584
  %663 = vmatprep.subr.bf16.mxu0 0
  %664 = vmatpush2.bf16.msra.mxu0 %v583
  %665 = vmatprep.subr.bf16.mxu0 0
  %666 = vmatpush2.bf16.msra.mxu0 %v582
  %667 = vmatprep.subr.bf16.mxu0 0
  %668 = vmatpush2.bf16.msra.mxu0 %v581
  %669 = vmatprep.mubr.bf16.mxu0 %v371
  %670 = vmatmul.mubr.bf16.gmra.mxu0 %v370
  %v671 = vpop.f32.mrf.mxu0
  %v672 = vadd.f32 %v443, %v671
  %v673 = vpop.f32.mrf.mxu0
  %v674 = vpop.f32.mrf.mxu0
  %v675 = vadd.f32 %v443, %v674
  %v676 = vpop.f32.mrf.mxu0
  %677 = vdwg.mxu0
  %678 = vmatprep.subr.bf16.mxu0 0
  %679 = vmatpush1.bf16.msra.mxu0 %v596
  %680 = vmatprep.subr.bf16.mxu0 0
  %681 = vmatpush1.bf16.msra.mxu0 %v595
  %682 = vmatprep.subr.bf16.mxu0 0
  %683 = vmatpush1.bf16.msra.mxu0 %v594
  %684 = vmatprep.subr.bf16.mxu0 0
  %685 = vmatpush1.bf16.msra.mxu0 %v593
  %686 = vmatprep.subr.bf16.mxu0 0
  %687 = vmatpush1.bf16.msra.mxu0 %v592
  %688 = vmatprep.subr.bf16.mxu0 0
  %689 = vmatpush1.bf16.msra.mxu0 %v591
  %690 = vmatprep.subr.bf16.mxu0 0
  %691 = vmatpush1.bf16.msra.mxu0 %v590
  %692 = vmatprep.subr.bf16.mxu0 0
  %693 = vmatpush1.bf16.msra.mxu0 %v589
  %694 = vmatprep.subr.bf16.mxu0 0
  %695 = vmatpush2.bf16.msra.mxu0 %v604
  %696 = vmatprep.subr.bf16.mxu0 0
  %697 = vmatpush2.bf16.msra.mxu0 %v603
  %698 = vmatprep.subr.bf16.mxu0 0
  %699 = vmatpush2.bf16.msra.mxu0 %v602
  %700 = vmatprep.subr.bf16.mxu0 0
  %701 = vmatpush2.bf16.msra.mxu0 %v601
  %702 = vmatprep.subr.bf16.mxu0 0
  %703 = vmatpush2.bf16.msra.mxu0 %v600
  %704 = vmatprep.subr.bf16.mxu0 0
  %705 = vmatpush2.bf16.msra.mxu0 %v599
  %706 = vmatprep.subr.bf16.mxu0 0
  %707 = vmatpush2.bf16.msra.mxu0 %v598
  %708 = vmatprep.subr.bf16.mxu0 0
  %709 = vmatpush2.bf16.msra.mxu0 %v597
  %710 = vmatprep.mubr.bf16.mxu0 %v373
  %711 = vmatmul.mubr.bf16.gmra.mxu0 %v372
  %v712 = vpop.f32.mrf.mxu0
  %v713 = vadd.f32 %v672, %v712
  %v714 = vpop.f32.mrf.mxu0
  %v715 = vpop.f32.mrf.mxu0
  %v716 = vadd.f32 %v675, %v715
  %v717 = vpop.f32.mrf.mxu0
  %718 = vdwg.mxu0
  %v719 = vadd.f32 %v713, %v27
  %v720 = vadd.f32 %v716, %v28
  %v721 = vld [vmem:[%s5] sm:$0x1]
  %v722 = vld [vmem:[%s6] sm:$0x1]
  %723 = vadd.xlane.f32.xlu0 %v719
  %v724 = vpop.xlane.xlu0 %723
  %725 = vadd.xlane.f32.xlu0 %v720
  %v726 = vpop.xlane.xlu0 %725
  %v727 = vrcp.pop 128.0
  %v728 = vmul.f32 %v724, %v727
  %v729 = vmul.f32 %v726, %v727
  %v730 = vsub.f32 %v719, %v728
  %v731 = vsub.f32 %v720, %v729
  %v732 = vmul.f32 %v730, %v730
  %v733 = vmul.f32 %v731, %v731
  %734 = vadd.xlane.f32.xlu0 %v732
  %v735 = vpop.xlane.xlu0 %734
  %736 = vadd.xlane.f32.xlu0 %v733
  %v737 = vpop.xlane.xlu0 %736
  %v738 = vmul.f32 %v735, %v727
  %v739 = vmul.f32 %v737, %v727
  %v740 = vadd.f32 %v738, 1e-12
  %v741 = vadd.f32 %v739, 1e-12
  %v742 = vrsqrt.pop %v740
  %v743 = vrsqrt.pop %v741
  %v744 = vmul.f32 %v730, %v742
  %v745 = vmul.f32 %v731, %v743
  %v747 = vlaneseq
  %v748 = vshrl.u32 %v747, 7
  %v749 = vsub.s32 0, %v748
  %v750 = vrot.slane %v721, %v749
  %v752 = vmul.f32 %v744, %v750
  %v753 = vmul.f32 %v745, %v750
  %v755 = vlaneseq
  %v756 = vshrl.u32 %v755, 7
  %v757 = vsub.s32 0, %v756
  %v758 = vrot.slane %v722, %v757
  %v760 = vadd.f32 %v752, %v758
  %v761 = vadd.f32 %v753, %v758
  %762 = vst [vmem:[%s7] sm:$0xff] %v760
  %763 = vst [vmem:[%s7 + $0x8] sm:$0xff] %v761
  // Predicated region
  $region30: #{vector_bert_forward.10} parent=0 // pred_check
    _
  $region31: #{vector_bert_forward.10} parent=0 // pred_check_branch
    %765 = sbr.rel (0) target = $region33
  $region32: #{vector_bert_forward.10} parent=0 // pred_region
    _
  $region33: #{vector_bert_forward.10} parent=0 // pred_fallthru
    _
  // Predicated region
  $region34: #{vector_bert_forward.10} parent=0 // pred_check
    _
  $region35: #{vector_bert_forward.10} parent=0 // pred_check_branch
    %767 = sbr.rel (0) target = $region37
  $region36: #{vector_bert_forward.10} parent=0 // pred_region
    _
  $region37: #{vector_bert_forward.10} parent=0 // pred_fallthru
    _

</llo_original>
